<compile_context>
chip_gen: v5e
topology: v5e:2x2
jax: 0.10.0
libtpu: 0.0.40
codegen_flags: <defaults>
</compile_context>

<pallas_src>
import math
from functools import partial

import jax
import jax.numpy as jnp
from jax.experimental import pallas as pl
from jax.experimental.pallas import tpu as pltpu

# ----------------------- small config (consistent with the module) ----------
B = 2
C_IN = 3
T_DIM = 4                      # temp_dim
IMG = 16                       # img_size
PS_T, PS_H, PS_W = 2, 8, 8     # patch_size
EMBED = 32
DEPTH = 2
HEADS = 4
DEC_EMBED = 16
DEC_DEPTH = 2
DEC_HEADS = 4
MLP_RATIO = 4.0
DIM_PROJ = C_IN * PS_T * PS_H * PS_W   # 3*2*8*8 = 384
MASK_RATIO = 0.75
LN_EPS = 1e-5                  # nn.LayerNorm default

Dd = T_DIM // PS_T             # temporal patches
Ww = IMG // PS_H               # "H" patches (torch code's naming)
Hh = IMG // PS_W               # "W" patches
L = Dd * Ww * Hh               # num_patches = 8

MXU_DTYPE = jnp.bfloat16       # MXU operand dtype; accumulation stays f32
_SQRT1_2 = 0.7071067811865476

# TODO(synk): at real MAE sizes (EMBED>=768, L in the thousands) tile the fused
# block kernel over token tiles and K-tile the big linears with a VMEM f32
# accumulator so blocks fit v7x's 64 MiB VMEM; at this toy config everything
# fits in a single block with huge margin.


# ----------------------------- in-kernel math helpers -------------------------
def _ln_f32(x, g, b, eps=LN_EPS):
    """LayerNorm over the last axis, all f32.  g, b: (1, D)."""
    mu = jnp.mean(x, axis=-1, keepdims=True)
    xc = x - mu
    var = jnp.mean(xc * xc, axis=-1, keepdims=True)
    return xc * jax.lax.rsqrt(var + eps) * g + b


def _erf_f32(x):
    # Abramowitz & Stegun 7.1.26 rational approximation (max abs err ~1.5e-7);
    # exp/mul/add only, so it lowers cleanly and runs on VPU+EUP.
    # TODO(synk): switch to the native erf lowering once it is relied upon.
    a1, a2, a3, a4, a5 = (0.254829592, -0.284496736, 1.421413741,
                          -1.453152027, 1.061405429)
    p = 0.3275911
    s = jnp.where(x >= 0.0, 1.0, -1.0)
    ax = jnp.abs(x)
    t = 1.0 / (1.0 + p * ax)
    poly = ((((a5 * t + a4) * t + a3) * t + a2) * t + a1) * t
    return s * (1.0 - poly * jnp.exp(-ax * ax))


def _gelu_exact(x):
    """nn.GELU default (erf-based), in f32."""
    return 0.5 * x * (1.0 + _erf_f32(x * _SQRT1_2))


# ----------------------------- Pallas kernels --------------------------------
def _patch_embed_kernel(x_ref, w_ref, b_ref, pos_ref, o_ref):
    """Conv3d(kernel=stride=patch) as matmul, + encoder pos-encoding add."""
    tok = jnp.dot(x_ref[0].astype(MXU_DTYPE), w_ref[...],
                  preferred_element_type=jnp.float32) + b_ref[...]
    o_ref[0] = (tok + pos_ref[...]).astype(o_ref.dtype)


def _block_kernel(x_ref, ln1g_ref, ln1b_ref, wqkv_ref, bqkv_ref,
                  wproj_ref, bproj_ref, ln2g_ref, ln2b_ref,
                  wfc1_ref, bfc1_ref, wfc2_ref, bfc2_ref, o_ref,
                  *, num_heads, scale):
    """Fused ViT block for one batch element: everything stays in VMEM."""
    x = x_ref[0]                                           # (S, D) f32
    D = x.shape[-1]
    hd = D // num_heads

    # --- LN1 + QKV projection ---
    h = _ln_f32(x, ln1g_ref[...], ln1b_ref[...])
    qkv = jnp.dot(h.astype(MXU_DTYPE), wqkv_ref[...],
                  preferred_element_type=jnp.float32) + bqkv_ref[...]  # (S, 3D)
    q = qkv[:, 0 * D:1 * D]
    k = qkv[:, 1 * D:2 * D]
    v = qkv[:, 2 * D:3 * D]

    # --- attention, all heads in this one kernel (unrolled; tiny matmuls) ---
    heads_out = []
    for hh in range(num_heads):
        sl = slice(hh * hd, (hh + 1) * hd)
        qh, kh, vh = q[:, sl], k[:, sl], v[:, sl]          # (S, hd) f32
        s = jnp.dot(qh, kh.T, preferred_element_type=jnp.float32) * scale
        s = s - jnp.max(s, axis=-1, keepdims=True)
        p = jnp.exp(s)
        p = p / jnp.sum(p, axis=-1, keepdims=True)         # softmax in f32
        heads_out.append(jnp.dot(p, vh, preferred_element_type=jnp.float32))
    attn = jnp.concatenate(heads_out, axis=-1)             # (S, D)

    # --- output projection + residual ---
    proj = jnp.dot(attn.astype(MXU_DTYPE), wproj_ref[...],
                   preferred_element_type=jnp.float32) + bproj_ref[...]
    x = x + proj

    # --- LN2 + MLP (GELU fused) + residual ---
    h2 = _ln_f32(x, ln2g_ref[...], ln2b_ref[...])
    hid = jnp.dot(h2.astype(MXU_DTYPE), wfc1_ref[...],
                  preferred_element_type=jnp.float32) + bfc1_ref[...]
    hid = _gelu_exact(hid)
    out = jnp.dot(hid.astype(MXU_DTYPE), wfc2_ref[...],
                  preferred_element_type=jnp.float32) + bfc2_ref[...]
    o_ref[0] = (x + out).astype(o_ref.dtype)


def _enc_final_kernel(x_ref, g_ref, b_ref, w_ref, bias_ref, o_ref):
    """Encoder final LayerNorm fused with decoder_embed linear."""
    h = _ln_f32(x_ref[0], g_ref[...], b_ref[...])
    o_ref[0] = (jnp.dot(h.astype(MXU_DTYPE), w_ref[...],
                        preferred_element_type=jnp.float32)
                + bias_ref[...]).astype(o_ref.dtype)


def _pred_loss_kernel(x_ref, g_ref, b_ref, w_ref, bias_ref, tgt_ref, mask_ref,
                      pred_ref, loss_ref):
    """decoder_norm + decoder_pred + masked-MSE loss, all in one kernel."""
    h = _ln_f32(x_ref[...], g_ref[...], b_ref[...])                 # (B*L, DEC)
    pred = jnp.dot(h.astype(MXU_DTYPE), w_ref[...],
                   preferred_element_type=jnp.float32) + bias_ref[...]
    pred_ref[...] = pred.astype(pred_ref.dtype)                     # lane-dense (384)
    d = pred - tgt_ref[...]
    per = jnp.mean(d * d, axis=-1, keepdims=True)                   # (B*L, 1)
    w = mask_ref[...]                                               # (B*L, 1)
    num = jnp.sum(per * w, axis=0, keepdims=True)                   # (1, 1)
    den = jnp.sum(w, axis=0, keepdims=True)                         # (1, 1)
    den = jnp.where(den == 0.0, 1.0, den)                           # guard mask_ratio=0
    loss_ref[...] = num / den


# ---------------------------- kernel wrappers ---------------------------------
def _row(a):
    return a.reshape(1, -1)


def patch_embed_and_pos(imgs, params):
    """Conv3d patch embed as patchify + Pallas matmul, pos-enc add fused."""
    Bn = imgs.shape[0]
    x = imgs.reshape(Bn, C_IN, Dd, PS_T, Ww, PS_H, Hh, PS_W)
    # patch order (Dd, Ww, Hh) = conv-output flatten order; within-patch
    # order (c, t, ph, pw) = Conv3d weight layout.
    x = jnp.transpose(x, (0, 2, 4, 6, 1, 3, 5, 7)).reshape(Bn, L, DIM_PROJ)
    return pl.pallas_call(
        _patch_embed_kernel,
        out_shape=jax.ShapeDtypeStruct((Bn, L, EMBED), jnp.float32),
        grid=(Bn,),
        in_specs=[pl.BlockSpec((1, L, DIM_PROJ), lambda b: (b, 0, 0)),
                  pl.BlockSpec((DIM_PROJ, EMBED), lambda b: (0, 0)),
                  pl.BlockSpec((1, EMBED), lambda b: (0, 0)),
                  pl.BlockSpec((L, EMBED), lambda b: (0, 0))],
        out_specs=pl.BlockSpec((1, L, EMBED), lambda b: (b, 0, 0)),
        compiler_params=pltpu.CompilerParams(dimension_semantics=("parallel",)),
    )(x, params["w_pe"].astype(MXU_DTYPE), _row(params["b_pe"]),
      params["enc_pos"])


def vit_block(x, p, num_heads):
    """One fused transformer block (all heads, MLP, residuals) per batch elem."""
    Bn, S, D = x.shape
    hd = D // num_heads
    hidden = p["w_fc1"].shape[1]
    kernel = partial(_block_kernel, num_heads=num_heads, scale=hd ** -0.5)
    return pl.pallas_call(
        kernel,
        out_shape=jax.ShapeDtypeStruct((Bn, S, D), jnp.float32),
        grid=(Bn,),
        in_specs=[
            pl.BlockSpec((1, S, D), lambda b: (b, 0, 0)),        # x
            pl.BlockSpec((1, D), lambda b: (0, 0)),              # ln1_g
            pl.BlockSpec((1, D), lambda b: (0, 0)),              # ln1_b
            pl.BlockSpec((D, 3 * D), lambda b: (0, 0)),          # w_qkv (bf16)
            pl.BlockSpec((1, 3 * D), lambda b: (0, 0)),          # b_qkv
            pl.BlockSpec((D, D), lambda b: (0, 0)),              # w_proj (bf16)
            pl.BlockSpec((1, D), lambda b: (0, 0)),              # b_proj
            pl.BlockSpec((1, D), lambda b: (0, 0)),              # ln2_g
            pl.BlockSpec((1, D), lambda b: (0, 0)),              # ln2_b
            pl.BlockSpec((D, hidden), lambda b: (0, 0)),         # w_fc1 (bf16)
            pl.BlockSpec((1, hidden), lambda b: (0, 0)),         # b_fc1
            pl.BlockSpec((hidden, D), lambda b: (0, 0)),         # w_fc2 (bf16)
            pl.BlockSpec((1, D), lambda b: (0, 0)),              # b_fc2
        ],
        out_specs=pl.BlockSpec((1, S, D), lambda b: (b, 0, 0)),
        compiler_params=pltpu.CompilerParams(dimension_semantics=("parallel",)),
    )(x,
      _row(p["ln1_g"]), _row(p["ln1_b"]),
      p["w_qkv"].astype(MXU_DTYPE), _row(p["b_qkv"]),
      p["w_proj"].astype(MXU_DTYPE), _row(p["b_proj"]),
      _row(p["ln2_g"]), _row(p["ln2_b"]),
      p["w_fc1"].astype(MXU_DTYPE), _row(p["b_fc1"]),
      p["w_fc2"].astype(MXU_DTYPE), _row(p["b_fc2"]))


def enc_final_project(x, params):
    """Fused encoder-final LayerNorm + decoder_embed linear."""
    Bn, S, D = x.shape
    N = params["w_dec_embed"].shape[1]
    return pl.pallas_call(
        _enc_final_kernel,
        out_shape=jax.ShapeDtypeStruct((Bn, S, N), jnp.float32),
        grid=(Bn,),
        in_specs=[pl.BlockSpec((1, S, D), lambda b: (b, 0, 0)),
                  pl.BlockSpec((1, D), lambda b: (0, 0)),
                  pl.BlockSpec((1, D), lambda b: (0, 0)),
                  pl.BlockSpec((D, N), lambda b: (0, 0)),
                  pl.BlockSpec((1, N), lambda b: (0, 0))],
        out_specs=pl.BlockSpec((1, S, N), lambda b: (b, 0, 0)),
        compiler_params=pltpu.CompilerParams(dimension_semantics=("parallel",)),
    )(x, _row(params["norm_g"]), _row(params["norm_b"]),
      params["w_dec_embed"].astype(MXU_DTYPE), _row(params["b_dec_embed"]))


def pred_and_loss(x, target, mask, params):
    """Fused decoder_norm + decoder_pred + masked-MSE loss."""
    Bn, Ls, Ddim = x.shape
    P = params["w_pred"].shape[1]
    pred2d, loss = pl.pallas_call(
        _pred_loss_kernel,
        out_shape=(jax.ShapeDtypeStruct((Bn * Ls, P), jnp.float32),
                   jax.ShapeDtypeStruct((1, 1), jnp.float32)),
        in_specs=[pl.BlockSpec(memory_space=pltpu.MemorySpace.VMEM)] * 7,
        out_specs=(pl.BlockSpec(memory_space=pltpu.MemorySpace.VMEM),
                   pl.BlockSpec(memory_space=pltpu.MemorySpace.VMEM)),
    )(x.reshape(Bn * Ls, Ddim),
      _row(params["dec_norm_g"]), _row(params["dec_norm_b"]),
      params["w_pred"].astype(MXU_DTYPE), _row(params["b_pred"]),
      target.reshape(Bn * Ls, P), mask.reshape(Bn * Ls, 1))
    return pred2d.reshape(Bn, Ls, P), loss[0, 0]


# ---------------------------- positional encoding (init-time) -----------------
def _penc3d(x_dim, y_dim, z_dim, ch_dim, channels_param):
    """PositionalEncoding3D table (sin/cos interleaved), value-independent."""
    chn = int(math.ceil(channels_param / 6) * 2)
    if chn % 2:
        chn += 1
    inv_freq = 1.0 / (10000.0 ** (jnp.arange(0, chn, 2, dtype=jnp.float32) / chn))

    def emb1d(n):
        pos = jnp.arange(n, dtype=jnp.float32)
        si = pos[:, None] * inv_freq[None, :]
        return jnp.stack([jnp.sin(si), jnp.cos(si)], axis=-1).reshape(n, chn)

    full = jnp.zeros((x_dim, y_dim, z_dim, 3 * chn), jnp.float32)
    full = full.at[..., :chn].set(emb1d(x_dim)[:, None, None, :])
    full = full.at[..., chn:2 * chn].set(emb1d(y_dim)[None, :, None, :])
    full = full.at[..., 2 * chn:].set(emb1d(z_dim)[None, None, :, :])
    return full[..., :ch_dim]


def pos_encoding_tables():
    """Mirrors MAE.pos_encoding: PositionalEncodingPermute3D applied to the
    (0,3,4,2,1)-permuted patch grid; result flattened to (L, dim).  Computed
    once at init (value-independent)."""
    E_enc = _penc3d(Hh, Dd, EMBED, Ww, EMBED)            # (Hh, Dd, EMBED, Ww)
    enc_pe = jnp.transpose(E_enc, (1, 3, 0, 2)).reshape(L, EMBED)
    E_dec = _penc3d(Hh, Dd, DEC_EMBED, Ww, DEC_EMBED)    # (Hh, Dd, DEC, Ww)
    dec_pe = jnp.transpose(E_dec, (1, 3, 0, 2)).reshape(1, L, DEC_EMBED)
    return enc_pe, dec_pe


# ---------------------------- model glue (index shuffling only) ---------------
def random_masking(x, mask_ratio, key):
    N, Ls, D = x.shape
    len_keep = int(Ls * (1 - mask_ratio))
    noise = jax.random.uniform(key, (N, Ls))
    ids_shuffle = jnp.argsort(noise, axis=1)
    ids_restore = jnp.argsort(ids_shuffle, axis=1)
    ids_keep = ids_shuffle[:, :len_keep]
    idx = jnp.broadcast_to(ids_keep[:, :, None], (N, len_keep, D))
    x_masked = jnp.take_along_axis(x, idx, axis=1)
    mask = jnp.ones((N, Ls), jnp.float32)
    mask = mask.at[:, :len_keep].set(0.0)
    mask = jnp.take_along_axis(mask, ids_restore, axis=1)
    return x_masked, mask, ids_restore


def patchify(imgs):
    Bn = imgs.shape[0]
    x = imgs.reshape(Bn, C_IN, Dd, PS_T, Ww, PS_H, Hh, PS_W)
    # einsum 'bcnthpwq->bnhwpqtc'
    x = jnp.transpose(x, (0, 2, 4, 6, 5, 7, 3, 1))
    return x.reshape(Bn, L, PS_H * PS_W * PS_T * C_IN)


def forward_encoder(imgs, params, mask_ratio, key):
    x = patch_embed_and_pos(imgs, params)                 # (B, L, EMBED) + pos
    x, mask, ids_restore = random_masking(x, mask_ratio, key)
    for p in params["enc_blocks"]:
        x = vit_block(x, p, HEADS)
    # NOTE: encoder final norm is fused into enc_final_project (decoder input).
    return x, mask, ids_restore


def forward_decoder(x, ids_restore, params):
    Bn, S, _ = x.shape
    x = enc_final_project(x, params)                      # norm + decoder_embed
    n_mask = ids_restore.shape[1] - S
    mask_tokens = jnp.broadcast_to(params["mask_token"], (Bn, n_mask, DEC_EMBED))
    x_ = jnp.concatenate([x, mask_tokens], axis=1)        # (B, L, DEC)
    idx = jnp.broadcast_to(ids_restore[:, :, None],
                           (Bn, ids_restore.shape[1], DEC_EMBED))
    x_ = jnp.take_along_axis(x_, idx, axis=1)
    x = x_ + params["dec_pos"]
    for p in params["dec_blocks"]:
        x = vit_block(x, p, DEC_HEADS)
    # decoder_norm + decoder_pred are fused into the loss kernel.
    return x


def mae_forward(imgs, params, key, mask_ratio=MASK_RATIO):
    latent, mask, ids_restore = forward_encoder(imgs, params, mask_ratio, key)
    dec_x = forward_decoder(latent, ids_restore, params)
    target = patchify(imgs)                               # norm_pix_loss=False
    pred, loss = pred_and_loss(dec_x, target, mask, params)
    return loss, pred, mask


# ------------------------------ parameters -----------------------------------
def init_params(key):
    keys = iter(jax.random.split(key, 256))

    def w(shape, scale=0.02):
        return jax.random.normal(next(keys), shape, jnp.float32) * scale

    def block_params(dim, mlp_ratio):
        hidden = int(dim * mlp_ratio)
        return dict(
            ln1_g=jnp.ones((dim,), jnp.float32), ln1_b=jnp.zeros((dim,), jnp.float32),
            w_qkv=w((dim, 3 * dim)), b_qkv=jnp.zeros((3 * dim,), jnp.float32),
            w_proj=w((dim, dim)), b_proj=jnp.zeros((dim,), jnp.float32),
            ln2_g=jnp.ones((dim,), jnp.float32), ln2_b=jnp.zeros((dim,), jnp.float32),
            w_fc1=w((dim, hidden)), b_fc1=jnp.zeros((hidden,), jnp.float32),
            w_fc2=w((hidden, dim)), b_fc2=jnp.zeros((dim,), jnp.float32),
        )

    enc_pos, dec_pos = pos_encoding_tables()              # precomputed once
    return dict(
        w_pe=w((C_IN * PS_T * PS_H * PS_W, EMBED)),
        b_pe=jnp.zeros((EMBED,), jnp.float32),
        enc_pos=enc_pos,                                   # (L, EMBED)
        dec_pos=dec_pos,                                   # (1, L, DEC_EMBED)
        enc_blocks=[block_params(EMBED, MLP_RATIO) for _ in range(DEPTH)],
        norm_g=jnp.ones((EMBED,), jnp.float32),
        norm_b=jnp.zeros((EMBED,), jnp.float32),
        w_dec_embed=w((EMBED, DEC_EMBED)),
        b_dec_embed=jnp.zeros((DEC_EMBED,), jnp.float32),
        mask_token=jnp.zeros((1, 1, DEC_EMBED), jnp.float32),
        dec_blocks=[block_params(DEC_EMBED, MLP_RATIO) for _ in range(DEC_DEPTH)],
        dec_norm_g=jnp.ones((DEC_EMBED,), jnp.float32),
        dec_norm_b=jnp.zeros((DEC_EMBED,), jnp.float32),
        w_pred=w((DEC_EMBED, DIM_PROJ)),
        b_pred=jnp.zeros((DIM_PROJ,), jnp.float32),
    )


# ---------------------------------- main --------------------------------------
if __name__ == "__main__":
    root = jax.random.PRNGKey(0)
    k_param, k_img, k_mask = jax.random.split(root, 3)
    params = init_params(k_param)
    imgs = jax.random.normal(k_img, (B, C_IN, T_DIM, IMG, IMG), jnp.float32)

    # jit the whole forward: constant-folds glue, removes per-call dispatch.
    mae_forward_jit = jax.jit(mae_forward)
    loss, pred, mask = mae_forward_jit(imgs, params, k_mask)
    jax.block_until_ready((loss, pred, mask))

    assert pred.shape == (B, L, DIM_PROJ)
    assert mask.shape == (B, L)
    assert loss.shape == ()
    assert bool(jnp.isfinite(loss))
    print("KERNEL_OK")
</pallas_src>

<mosaic_0001>
module attributes {stable_mosaic.version = 11 : i64} {
  func.func @_patch_embed_kernel(%arg0: i32, %arg1: memref<1x8x384xf32, #tpu.memory_space<vmem>>, %arg2: memref<384x32xbf16, #tpu.memory_space<vmem>>, %arg3: memref<1x32xf32, #tpu.memory_space<vmem>>, %arg4: memref<8x32xf32, #tpu.memory_space<vmem>>, %arg5: memref<1x8x32xf32, #tpu.memory_space<vmem>>) attributes {dimension_semantics = [#tpu.dimension_semantics<parallel>], iteration_bounds = array<i64: 2>, scalar_prefetch = 0 : i64, scratch_operands = 0 : i64, tpu.core_type = #tpu.core_type<tc>, window_params = [{transform_indices = @transform_0, window_bounds = array<i64: 1, 8, 384>}, {pipeline_mode = #tpu.pipeline_mode<synchronous>, transform_indices = @transform_1, window_bounds = array<i64: 384, 32>}, {pipeline_mode = #tpu.pipeline_mode<synchronous>, transform_indices = @transform_2, window_bounds = array<i64: 1, 32>}, {pipeline_mode = #tpu.pipeline_mode<synchronous>, transform_indices = @transform_3, window_bounds = array<i64: 8, 32>}, {transform_indices = @transform_4, window_bounds = array<i64: 1, 8, 32>}]} {
    %c0 = arith.constant 0 : index
    %c0_0 = arith.constant 0 : index
    %c0_1 = arith.constant 0 : index
    %0 = vector.load %arg1[%c0, %c0_0, %c0_1] : memref<1x8x384xf32, #tpu.memory_space<vmem>>, vector<1x8x384xf32>
    %1 = vector.shape_cast %0 : vector<1x8x384xf32> to vector<8x384xf32>
    %2 = arith.truncf %1 : vector<8x384xf32> to vector<8x384xbf16>
    %c0_2 = arith.constant 0 : index
    %c0_3 = arith.constant 0 : index
    %3 = vector.load %arg2[%c0_2, %c0_3] : memref<384x32xbf16, #tpu.memory_space<vmem>>, vector<384x32xbf16>
    %cst = arith.constant dense<0.000000e+00> : vector<8x32xf32>
    %4 = tpu.matmul %2, %3, %cst {dimension_numbers = #tpu.dot_dimension_numbers<[1], [0], [0], [1], [0, 0, 1, 1], [], []>} : vector<8x384xbf16>, vector<384x32xbf16>, vector<8x32xf32> -> vector<8x32xf32>
    %c0_4 = arith.constant 0 : index
    %c0_5 = arith.constant 0 : index
    %5 = vector.load %arg3[%c0_4, %c0_5] : memref<1x32xf32, #tpu.memory_space<vmem>>, vector<1x32xf32>
    %6 = vector.broadcast %5 : vector<1x32xf32> to vector<8x32xf32>
    %7 = arith.addf %4, %6 : vector<8x32xf32>
    %c0_6 = arith.constant 0 : index
    %c0_7 = arith.constant 0 : index
    %8 = vector.load %arg4[%c0_6, %c0_7] : memref<8x32xf32, #tpu.memory_space<vmem>>, vector<8x32xf32>
    %9 = arith.addf %7, %8 : vector<8x32xf32>
    %c0_8 = arith.constant 0 : index
    %c0_9 = arith.constant 0 : index
    %c0_10 = arith.constant 0 : index
    %10 = vector.load %arg5[%c0_8, %c0_9, %c0_10] : memref<1x8x32xf32, #tpu.memory_space<vmem>>, vector<1x8x32xf32>
    %11 = vector.shape_cast %10 : vector<1x8x32xf32> to vector<8x32xf32>
    %12 = vector.shape_cast %9 : vector<8x32xf32> to vector<1x8x32xf32>
    tpu.vector_store %arg5[%c0_8, %c0_9, %c0_10], %12 {strides = array<i32>} : memref<1x8x32xf32, #tpu.memory_space<vmem>>, vector<1x8x32xf32>,
    return
  }
  func.func @transform_0(%arg0: i32) -> (i32, i32, i32) {
    %c0_i32 = arith.constant 0 : i32
    %c0_i32_0 = arith.constant 0 : i32
    %c0_i32_1 = arith.constant 0 : i32
    return %arg0, %c0_i32, %c0_i32_0 : i32, i32, i32
  }
  func.func @transform_1(%arg0: i32) -> (i32, i32) {
    %c0_i32 = arith.constant 0 : i32
    %c0_i32_0 = arith.constant 0 : i32
    %c0_i32_1 = arith.constant 0 : i32
    return %c0_i32, %c0_i32_0 : i32, i32
  }
  func.func @transform_2(%arg0: i32) -> (i32, i32) {
    %c0_i32 = arith.constant 0 : i32
    %c0_i32_0 = arith.constant 0 : i32
    %c0_i32_1 = arith.constant 0 : i32
    return %c0_i32, %c0_i32_0 : i32, i32
  }
  func.func @transform_3(%arg0: i32) -> (i32, i32) {
    %c0_i32 = arith.constant 0 : i32
    %c0_i32_0 = arith.constant 0 : i32
    %c0_i32_1 = arith.constant 0 : i32
    return %c0_i32, %c0_i32_0 : i32, i32
  }
  func.func @transform_4(%arg0: i32) -> (i32, i32, i32) {
    %c0_i32 = arith.constant 0 : i32
    %c0_i32_0 = arith.constant 0 : i32
    %c0_i32_1 = arith.constant 0 : i32
    return %arg0, %c0_i32, %c0_i32_0 : i32, i32, i32
  }
}

module attributes {stable_mosaic.version = 11 : i64} {
  func.func @_block_kernel(%arg0: i32, %arg1: memref<1x2x32xf32, #tpu.memory_space<vmem>>, %arg2: memref<1x32xf32, #tpu.memory_space<vmem>>, %arg3: memref<1x32xf32, #tpu.memory_space<vmem>>, %arg4: memref<32x96xbf16, #tpu.memory_space<vmem>>, %arg5: memref<1x96xf32, #tpu.memory_space<vmem>>, %arg6: memref<32x32xbf16, #tpu.memory_space<vmem>>, %arg7: memref<1x32xf32, #tpu.memory_space<vmem>>, %arg8: memref<1x32xf32, #tpu.memory_space<vmem>>, %arg9: memref<1x32xf32, #tpu.memory_space<vmem>>, %arg10: memref<32x128xbf16, #tpu.memory_space<vmem>>, %arg11: memref<1x128xf32, #tpu.memory_space<vmem>>, %arg12: memref<128x32xbf16, #tpu.memory_space<vmem>>, %arg13: memref<1x32xf32, #tpu.memory_space<vmem>>, %arg14: memref<1x2x32xf32, #tpu.memory_space<vmem>>) attributes {dimension_semantics = [#tpu.dimension_semantics<parallel>], iteration_bounds = array<i64: 2>, scalar_prefetch = 0 : i64, scratch_operands = 0 : i64, tpu.core_type = #tpu.core_type<tc>, window_params = [{transform_indices = @transform_0, window_bounds = array<i64: 1, 2, 32>}, {pipeline_mode = #tpu.pipeline_mode<synchronous>, transform_indices = @transform_1, window_bounds = array<i64: 1, 32>}, {pipeline_mode = #tpu.pipeline_mode<synchronous>, transform_indices = @transform_2, window_bounds = array<i64: 1, 32>}, {pipeline_mode = #tpu.pipeline_mode<synchronous>, transform_indices = @transform_3, window_bounds = array<i64: 32, 96>}, {pipeline_mode = #tpu.pipeline_mode<synchronous>, transform_indices = @transform_4, window_bounds = array<i64: 1, 96>}, {pipeline_mode = #tpu.pipeline_mode<synchronous>, transform_indices = @transform_5, window_bounds = array<i64: 32, 32>}, {pipeline_mode = #tpu.pipeline_mode<synchronous>, transform_indices = @transform_6, window_bounds = array<i64: 1, 32>}, {pipeline_mode = #tpu.pipeline_mode<synchronous>, transform_indices = @transform_7, window_bounds = array<i64: 1, 32>}, {pipeline_mode = #tpu.pipeline_mode<synchronous>, transform_indices = @transform_8, window_bounds = array<i64: 1, 32>}, {pipeline_mode = #tpu.pipeline_mode<synchronous>, transform_indices = @transform_9, window_bounds = array<i64: 32, 128>}, {pipeline_mode = #tpu.pipeline_mode<synchronous>, transform_indices = @transform_10, window_bounds = array<i64: 1, 128>}, {pipeline_mode = #tpu.pipeline_mode<synchronous>, transform_indices = @transform_11, window_bounds = array<i64: 128, 32>}, {pipeline_mode = #tpu.pipeline_mode<synchronous>, transform_indices = @transform_12, window_bounds = array<i64: 1, 32>}, {transform_indices = @transform_13, window_bounds = array<i64: 1, 2, 32>}]} {
    %c0 = arith.constant 0 : index
    %c0_0 = arith.constant 0 : index
    %c0_1 = arith.constant 0 : index
    %0 = vector.load %arg1[%c0, %c0_0, %c0_1] : memref<1x2x32xf32, #tpu.memory_space<vmem>>, vector<1x2x32xf32>
    %1 = vector.shape_cast %0 : vector<1x2x32xf32> to vector<2x32xf32>
    %c0_2 = arith.constant 0 : index
    %c0_3 = arith.constant 0 : index
    %2 = vector.load %arg2[%c0_2, %c0_3] : memref<1x32xf32, #tpu.memory_space<vmem>>, vector<1x32xf32>
    %c0_4 = arith.constant 0 : index
    %c0_5 = arith.constant 0 : index
    %3 = vector.load %arg3[%c0_4, %c0_5] : memref<1x32xf32, #tpu.memory_space<vmem>>, vector<1x32xf32>
    %cst = arith.constant dense<0.000000e+00> : vector<2xf32>
    %4 = vector.multi_reduction <add>, %1, %cst [1] : vector<2x32xf32> to vector<2xf32>
    %5 = vector.shape_cast %4 : vector<2xf32> to vector<2x1xf32>
    %cst_6 = arith.constant 3.200000e+01 : f32
    %6 = vector.broadcast %cst_6 : f32 to vector<2x1xf32>
    %7 = arith.divf %5, %6 : vector<2x1xf32>
    %8 = vector.broadcast %7 : vector<2x1xf32> to vector<2x32xf32>
    %9 = arith.subf %1, %8 : vector<2x32xf32>
    %10 = arith.mulf %9, %9 : vector<2x32xf32>
    %cst_7 = arith.constant dense<0.000000e+00> : vector<2xf32>
    %11 = vector.multi_reduction <add>, %10, %cst_7 [1] : vector<2x32xf32> to vector<2xf32>
    %12 = vector.shape_cast %11 : vector<2xf32> to vector<2x1xf32>
    %cst_8 = arith.constant 3.200000e+01 : f32
    %13 = vector.broadcast %cst_8 : f32 to vector<2x1xf32>
    %14 = arith.divf %12, %13 : vector<2x1xf32>
    %cst_9 = arith.constant 9.99999974E-6 : f32
    %15 = vector.broadcast %cst_9 : f32 to vector<2x1xf32>
    %16 = arith.addf %14, %15 : vector<2x1xf32>
    %17 = math.rsqrt %16 : vector<2x1xf32>
    %18 = vector.broadcast %17 : vector<2x1xf32> to vector<2x32xf32>
    %19 = arith.mulf %9, %18 : vector<2x32xf32>
    %20 = vector.broadcast %2 : vector<1x32xf32> to vector<2x32xf32>
    %21 = arith.mulf %19, %20 : vector<2x32xf32>
    %22 = vector.broadcast %3 : vector<1x32xf32> to vector<2x32xf32>
    %23 = arith.addf %21, %22 : vector<2x32xf32>
    %24 = arith.truncf %23 : vector<2x32xf32> to vector<2x32xbf16>
    %c0_10 = arith.constant 0 : index
    %c0_11 = arith.constant 0 : index
    %25 = vector.load %arg4[%c0_10, %c0_11] : memref<32x96xbf16, #tpu.memory_space<vmem>>, vector<32x96xbf16>
    %cst_12 = arith.constant dense<0.000000e+00> : vector<2x96xf32>
    %26 = tpu.matmul %24, %25, %cst_12 {dimension_numbers = #tpu.dot_dimension_numbers<[1], [0], [0], [1], [0, 0, 1, 1], [], []>} : vector<2x32xbf16>, vector<32x96xbf16>, vector<2x96xf32> -> vector<2x96xf32>
    %c0_13 = arith.constant 0 : index
    %c0_14 = arith.constant 0 : index
    %27 = vector.load %arg5[%c0_13, %c0_14] : memref<1x96xf32, #tpu.memory_space<vmem>>, vector<1x96xf32>
    %28 = vector.broadcast %27 : vector<1x96xf32> to vector<2x96xf32>
    %29 = arith.addf %26, %28 : vector<2x96xf32>
    %30 = vector.extract_strided_slice %29 {offsets = [0, 0], sizes = [2, 32], strides = [1, 1]} : vector<2x96xf32> to vector<2x32xf32>
    %31 = vector.extract_strided_slice %29 {offsets = [0, 32], sizes = [2, 32], strides = [1, 1]} : vector<2x96xf32> to vector<2x32xf32>
    %32 = vector.extract_strided_slice %29 {offsets = [0, 64], sizes = [2, 32], strides = [1, 1]} : vector<2x96xf32> to vector<2x32xf32>
    %33 = vector.extract_strided_slice %30 {offsets = [0, 0], sizes = [2, 8], strides = [1, 1]} : vector<2x32xf32> to vector<2x8xf32>
    %34 = vector.extract_strided_slice %31 {offsets = [0, 0], sizes = [2, 8], strides = [1, 1]} : vector<2x32xf32> to vector<2x8xf32>
    %35 = vector.extract_strided_slice %32 {offsets = [0, 0], sizes = [2, 8], strides = [1, 1]} : vector<2x32xf32> to vector<2x8xf32>
    %36 = tpu.transpose %34, [1, 0] : vector<2x8xf32> -> vector<8x2xf32>
    %cst_15 = arith.constant dense<0.000000e+00> : vector<2x2xf32>
    %37 = tpu.matmul %33, %36, %cst_15 {dimension_numbers = #tpu.dot_dimension_numbers<[1], [0], [0], [1], [0, 0, 1, 1], [], []>} : vector<2x8xf32>, vector<8x2xf32>, vector<2x2xf32> -> vector<2x2xf32>
    %cst_16 = arith.constant 0.353553385 : f32
    %38 = vector.broadcast %cst_16 : f32 to vector<2x2xf32>
    %39 = arith.mulf %37, %38 : vector<2x2xf32>
    %cst_17 = arith.constant dense<0xFF800000> : vector<2xf32>
    %40 = vector.multi_reduction <maximumf>, %39, %cst_17 [1] : vector<2x2xf32> to vector<2xf32>
    %41 = vector.shape_cast %40 : vector<2xf32> to vector<2x1xf32>
    %42 = vector.broadcast %41 : vector<2x1xf32> to vector<2x2xf32>
    %43 = arith.subf %39, %42 : vector<2x2xf32>
    %44 = math.exp %43 : vector<2x2xf32>
    %cst_18 = arith.constant dense<0.000000e+00> : vector<2xf32>
    %45 = vector.multi_reduction <add>, %44, %cst_18 [1] : vector<2x2xf32> to vector<2xf32>
    %46 = vector.shape_cast %45 : vector<2xf32> to vector<2x1xf32>
    %47 = vector.broadcast %46 : vector<2x1xf32> to vector<2x2xf32>
    %48 = arith.divf %44, %47 : vector<2x2xf32>
    %cst_19 = arith.constant dense<0.000000e+00> : vector<2x8xf32>
    %49 = tpu.matmul %48, %35, %cst_19 {dimension_numbers = #tpu.dot_dimension_numbers<[1], [0], [0], [1], [0, 0, 1, 1], [], []>} : vector<2x2xf32>, vector<2x8xf32>, vector<2x8xf32> -> vector<2x8xf32>
    %50 = vector.extract_strided_slice %30 {offsets = [0, 8], sizes = [2, 8], strides = [1, 1]} : vector<2x32xf32> to vector<2x8xf32>
    %51 = vector.extract_strided_slice %31 {offsets = [0, 8], sizes = [2, 8], strides = [1, 1]} : vector<2x32xf32> to vector<2x8xf32>
    %52 = vector.extract_strided_slice %32 {offsets = [0, 8], sizes = [2, 8], strides = [1, 1]} : vector<2x32xf32> to vector<2x8xf32>
    %53 = tpu.transpose %51, [1, 0] : vector<2x8xf32> -> vector<8x2xf32>
    %cst_20 = arith.constant dense<0.000000e+00> : vector<2x2xf32>
    %54 = tpu.matmul %50, %53, %cst_20 {dimension_numbers = #tpu.dot_dimension_numbers<[1], [0], [0], [1], [0, 0, 1, 1], [], []>} : vector<2x8xf32>, vector<8x2xf32>, vector<2x2xf32> -> vector<2x2xf32>
    %cst_21 = arith.constant 0.353553385 : f32
    %55 = vector.broadcast %cst_21 : f32 to vector<2x2xf32>
    %56 = arith.mulf %54, %55 : vector<2x2xf32>
    %cst_22 = arith.constant dense<0xFF800000> : vector<2xf32>
    %57 = vector.multi_reduction <maximumf>, %56, %cst_22 [1] : vector<2x2xf32> to vector<2xf32>
    %58 = vector.shape_cast %57 : vector<2xf32> to vector<2x1xf32>
    %59 = vector.broadcast %58 : vector<2x1xf32> to vector<2x2xf32>
    %60 = arith.subf %56, %59 : vector<2x2xf32>
    %61 = math.exp %60 : vector<2x2xf32>
    %cst_23 = arith.constant dense<0.000000e+00> : vector<2xf32>
    %62 = vector.multi_reduction <add>, %61, %cst_23 [1] : vector<2x2xf32> to vector<2xf32>
    %63 = vector.shape_cast %62 : vector<2xf32> to vector<2x1xf32>
    %64 = vector.broadcast %63 : vector<2x1xf32> to vector<2x2xf32>
    %65 = arith.divf %61, %64 : vector<2x2xf32>
    %cst_24 = arith.constant dense<0.000000e+00> : vector<2x8xf32>
    %66 = tpu.matmul %65, %52, %cst_24 {dimension_numbers = #tpu.dot_dimension_numbers<[1], [0], [0], [1], [0, 0, 1, 1], [], []>} : vector<2x2xf32>, vector<2x8xf32>, vector<2x8xf32> -> vector<2x8xf32>
    %67 = vector.extract_strided_slice %30 {offsets = [0, 16], sizes = [2, 8], strides = [1, 1]} : vector<2x32xf32> to vector<2x8xf32>
    %68 = vector.extract_strided_slice %31 {offsets = [0, 16], sizes = [2, 8], strides = [1, 1]} : vector<2x32xf32> to vector<2x8xf32>
    %69 = vector.extract_strided_slice %32 {offsets = [0, 16], sizes = [2, 8], strides = [1, 1]} : vector<2x32xf32> to vector<2x8xf32>
    %70 = tpu.transpose %68, [1, 0] : vector<2x8xf32> -> vector<8x2xf32>
    %cst_25 = arith.constant dense<0.000000e+00> : vector<2x2xf32>
    %71 = tpu.matmul %67, %70, %cst_25 {dimension_numbers = #tpu.dot_dimension_numbers<[1], [0], [0], [1], [0, 0, 1, 1], [], []>} : vector<2x8xf32>, vector<8x2xf32>, vector<2x2xf32> -> vector<2x2xf32>
    %cst_26 = arith.constant 0.353553385 : f32
    %72 = vector.broadcast %cst_26 : f32 to vector<2x2xf32>
    %73 = arith.mulf %71, %72 : vector<2x2xf32>
    %cst_27 = arith.constant dense<0xFF800000> : vector<2xf32>
    %74 = vector.multi_reduction <maximumf>, %73, %cst_27 [1] : vector<2x2xf32> to vector<2xf32>
    %75 = vector.shape_cast %74 : vector<2xf32> to vector<2x1xf32>
    %76 = vector.broadcast %75 : vector<2x1xf32> to vector<2x2xf32>
    %77 = arith.subf %73, %76 : vector<2x2xf32>
    %78 = math.exp %77 : vector<2x2xf32>
    %cst_28 = arith.constant dense<0.000000e+00> : vector<2xf32>
    %79 = vector.multi_reduction <add>, %78, %cst_28 [1] : vector<2x2xf32> to vector<2xf32>
    %80 = vector.shape_cast %79 : vector<2xf32> to vector<2x1xf32>
    %81 = vector.broadcast %80 : vector<2x1xf32> to vector<2x2xf32>
    %82 = arith.divf %78, %81 : vector<2x2xf32>
    %cst_29 = arith.constant dense<0.000000e+00> : vector<2x8xf32>
    %83 = tpu.matmul %82, %69, %cst_29 {dimension_numbers = #tpu.dot_dimension_numbers<[1], [0], [0], [1], [0, 0, 1, 1], [], []>} : vector<2x2xf32>, vector<2x8xf32>, vector<2x8xf32> -> vector<2x8xf32>
    %84 = vector.extract_strided_slice %30 {offsets = [0, 24], sizes = [2, 8], strides = [1, 1]} : vector<2x32xf32> to vector<2x8xf32>
    %85 = vector.extract_strided_slice %31 {offsets = [0, 24], sizes = [2, 8], strides = [1, 1]} : vector<2x32xf32> to vector<2x8xf32>
    %86 = vector.extract_strided_slice %32 {offsets = [0, 24], sizes = [2, 8], strides = [1, 1]} : vector<2x32xf32> to vector<2x8xf32>
    %87 = tpu.transpose %85, [1, 0] : vector<2x8xf32> -> vector<8x2xf32>
    %cst_30 = arith.constant dense<0.000000e+00> : vector<2x2xf32>
    %88 = tpu.matmul %84, %87, %cst_30 {dimension_numbers = #tpu.dot_dimension_numbers<[1], [0], [0], [1], [0, 0, 1, 1], [], []>} : vector<2x8xf32>, vector<8x2xf32>, vector<2x2xf32> -> vector<2x2xf32>
    %cst_31 = arith.constant 0.353553385 : f32
    %89 = vector.broadcast %cst_31 : f32 to vector<2x2xf32>
    %90 = arith.mulf %88, %89 : vector<2x2xf32>
    %cst_32 = arith.constant dense<0xFF800000> : vector<2xf32>
    %91 = vector.multi_reduction <maximumf>, %90, %cst_32 [1] : vector<2x2xf32> to vector<2xf32>
    %92 = vector.shape_cast %91 : vector<2xf32> to vector<2x1xf32>
    %93 = vector.broadcast %92 : vector<2x1xf32> to vector<2x2xf32>
    %94 = arith.subf %90, %93 : vector<2x2xf32>
    %95 = math.exp %94 : vector<2x2xf32>
    %cst_33 = arith.constant dense<0.000000e+00> : vector<2xf32>
    %96 = vector.multi_reduction <add>, %95, %cst_33 [1] : vector<2x2xf32> to vector<2xf32>
    %97 = vector.shape_cast %96 : vector<2xf32> to vector<2x1xf32>
    %98 = vector.broadcast %97 : vector<2x1xf32> to vector<2x2xf32>
    %99 = arith.divf %95, %98 : vector<2x2xf32>
    %cst_34 = arith.constant dense<0.000000e+00> : vector<2x8xf32>
    %100 = tpu.matmul %99, %86, %cst_34 {dimension_numbers = #tpu.dot_dimension_numbers<[1], [0], [0], [1], [0, 0, 1, 1], [], []>} : vector<2x2xf32>, vector<2x8xf32>, vector<2x8xf32> -> vector<2x8xf32>
    %101 = tpu.concatenate %49, %66, %83, %100 in 1 : vector<2x8xf32>, vector<2x8xf32>, vector<2x8xf32>, vector<2x8xf32> -> vector<2x32xf32>
    %102 = arith.truncf %101 : vector<2x32xf32> to vector<2x32xbf16>
    %c0_35 = arith.constant 0 : index
    %c0_36 = arith.constant 0 : index
    %103 = vector.load %arg6[%c0_35, %c0_36] : memref<32x32xbf16, #tpu.memory_space<vmem>>, vector<32x32xbf16>
    %cst_37 = arith.constant dense<0.000000e+00> : vector<2x32xf32>
    %104 = tpu.matmul %102, %103, %cst_37 {dimension_numbers = #tpu.dot_dimension_numbers<[1], [0], [0], [1], [0, 0, 1, 1], [], []>} : vector<2x32xbf16>, vector<32x32xbf16>, vector<2x32xf32> -> vector<2x32xf32>
    %c0_38 = arith.constant 0 : index
    %c0_39 = arith.constant 0 : index
    %105 = vector.load %arg7[%c0_38, %c0_39] : memref<1x32xf32, #tpu.memory_space<vmem>>, vector<1x32xf32>
    %106 = vector.broadcast %105 : vector<1x32xf32> to vector<2x32xf32>
    %107 = arith.addf %104, %106 : vector<2x32xf32>
    %108 = arith.addf %1, %107 : vector<2x32xf32>
    %c0_40 = arith.constant 0 : index
    %c0_41 = arith.constant 0 : index
    %109 = vector.load %arg8[%c0_40, %c0_41] : memref<1x32xf32, #tpu.memory_space<vmem>>, vector<1x32xf32>
    %c0_42 = arith.constant 0 : index
    %c0_43 = arith.constant 0 : index
    %110 = vector.load %arg9[%c0_42, %c0_43] : memref<1x32xf32, #tpu.memory_space<vmem>>, vector<1x32xf32>
    %cst_44 = arith.constant dense<0.000000e+00> : vector<2xf32>
    %111 = vector.multi_reduction <add>, %108, %cst_44 [1] : vector<2x32xf32> to vector<2xf32>
    %112 = vector.shape_cast %111 : vector<2xf32> to vector<2x1xf32>
    %cst_45 = arith.constant 3.200000e+01 : f32
    %113 = vector.broadcast %cst_45 : f32 to vector<2x1xf32>
    %114 = arith.divf %112, %113 : vector<2x1xf32>
    %115 = vector.broadcast %114 : vector<2x1xf32> to vector<2x32xf32>
    %116 = arith.subf %108, %115 : vector<2x32xf32>
    %117 = arith.mulf %116, %116 : vector<2x32xf32>
    %cst_46 = arith.constant dense<0.000000e+00> : vector<2xf32>
    %118 = vector.multi_reduction <add>, %117, %cst_46 [1] : vector<2x32xf32> to vector<2xf32>
    %119 = vector.shape_cast %118 : vector<2xf32> to vector<2x1xf32>
    %cst_47 = arith.constant 3.200000e+01 : f32
    %120 = vector.broadcast %cst_47 : f32 to vector<2x1xf32>
    %121 = arith.divf %119, %120 : vector<2x1xf32>
    %cst_48 = arith.constant 9.99999974E-6 : f32
    %122 = vector.broadcast %cst_48 : f32 to vector<2x1xf32>
    %123 = arith.addf %121, %122 : vector<2x1xf32>
    %124 = math.rsqrt %123 : vector<2x1xf32>
    %125 = vector.broadcast %124 : vector<2x1xf32> to vector<2x32xf32>
    %126 = arith.mulf %116, %125 : vector<2x32xf32>
    %127 = vector.broadcast %109 : vector<1x32xf32> to vector<2x32xf32>
    %128 = arith.mulf %126, %127 : vector<2x32xf32>
    %129 = vector.broadcast %110 : vector<1x32xf32> to vector<2x32xf32>
    %130 = arith.addf %128, %129 : vector<2x32xf32>
    %131 = arith.truncf %130 : vector<2x32xf32> to vector<2x32xbf16>
    %c0_49 = arith.constant 0 : index
    %c0_50 = arith.constant 0 : index
    %132 = vector.load %arg10[%c0_49, %c0_50] : memref<32x128xbf16, #tpu.memory_space<vmem>>, vector<32x128xbf16>
    %cst_51 = arith.constant dense<0.000000e+00> : vector<2x128xf32>
    %133 = tpu.matmul %131, %132, %cst_51 {dimension_numbers = #tpu.dot_dimension_numbers<[1], [0], [0], [1], [0, 0, 1, 1], [], []>} : vector<2x32xbf16>, vector<32x128xbf16>, vector<2x128xf32> -> vector<2x128xf32>
    %c0_52 = arith.constant 0 : index
    %c0_53 = arith.constant 0 : index
    %134 = vector.load %arg11[%c0_52, %c0_53] : memref<1x128xf32, #tpu.memory_space<vmem>>, vector<1x128xf32>
    %135 = vector.broadcast %134 : vector<1x128xf32> to vector<2x128xf32>
    %136 = arith.addf %133, %135 : vector<2x128xf32>
    %cst_54 = arith.constant 5.000000e-01 : f32
    %137 = vector.broadcast %cst_54 : f32 to vector<2x128xf32>
    %138 = arith.mulf %137, %136 : vector<2x128xf32>
    %cst_55 = arith.constant 0.707106769 : f32
    %139 = vector.broadcast %cst_55 : f32 to vector<2x128xf32>
    %140 = arith.mulf %136, %139 : vector<2x128xf32>
    %cst_56 = arith.constant 0.000000e+00 : f32
    %141 = vector.broadcast %cst_56 : f32 to vector<2x128xf32>
    %142 = arith.cmpf oge, %140, %141 : vector<2x128xf32>
    %cst_57 = arith.constant 1.000000e+00 : f32
    %cst_58 = arith.constant -1.000000e+00 : f32
    %143 = vector.broadcast %cst_57 : f32 to vector<2x128xf32>
    %144 = vector.broadcast %cst_58 : f32 to vector<2x128xf32>
    %145 = arith.select %142, %143, %144 : vector<2x128xi1>, vector<2x128xf32>
    %146 = math.absf %140 : vector<2x128xf32>
    %cst_59 = arith.constant 0.327591091 : f32
    %147 = vector.broadcast %cst_59 : f32 to vector<2x128xf32>
    %148 = arith.mulf %147, %146 : vector<2x128xf32>
    %cst_60 = arith.constant 1.000000e+00 : f32
    %149 = vector.broadcast %cst_60 : f32 to vector<2x128xf32>
    %150 = arith.addf %149, %148 : vector<2x128xf32>
    %cst_61 = arith.constant 1.000000e+00 : f32
    %151 = vector.broadcast %cst_61 : f32 to vector<2x128xf32>
    %152 = arith.divf %151, %150 : vector<2x128xf32>
    %cst_62 = arith.constant 1.06140542 : f32
    %153 = vector.broadcast %cst_62 : f32 to vector<2x128xf32>
    %154 = arith.mulf %153, %152 : vector<2x128xf32>
    %cst_63 = arith.constant -1.45315206 : f32
    %155 = vector.broadcast %cst_63 : f32 to vector<2x128xf32>
    %156 = arith.addf %154, %155 : vector<2x128xf32>
    %157 = arith.mulf %156, %152 : vector<2x128xf32>
    %cst_64 = arith.constant 1.42141378 : f32
    %158 = vector.broadcast %cst_64 : f32 to vector<2x128xf32>
    %159 = arith.addf %157, %158 : vector<2x128xf32>
    %160 = arith.mulf %159, %152 : vector<2x128xf32>
    %cst_65 = arith.constant -0.284496725 : f32
    %161 = vector.broadcast %cst_65 : f32 to vector<2x128xf32>
    %162 = arith.addf %160, %161 : vector<2x128xf32>
    %163 = arith.mulf %162, %152 : vector<2x128xf32>
    %cst_66 = arith.constant 0.254829586 : f32
    %164 = vector.broadcast %cst_66 : f32 to vector<2x128xf32>
    %165 = arith.addf %163, %164 : vector<2x128xf32>
    %166 = arith.mulf %165, %152 : vector<2x128xf32>
    %cst_67 = arith.constant 0.000000e+00 : f32
    %167 = vector.broadcast %cst_67 : f32 to vector<2x128xf32>
    %168 = arith.subf %167, %146 : vector<2x128xf32>
    %169 = arith.mulf %168, %146 : vector<2x128xf32>
    %170 = math.exp %169 : vector<2x128xf32>
    %171 = arith.mulf %166, %170 : vector<2x128xf32>
    %cst_68 = arith.constant 1.000000e+00 : f32
    %172 = vector.broadcast %cst_68 : f32 to vector<2x128xf32>
    %173 = arith.subf %172, %171 : vector<2x128xf32>
    %174 = arith.mulf %145, %173 : vector<2x128xf32>
    %cst_69 = arith.constant 1.000000e+00 : f32
    %175 = vector.broadcast %cst_69 : f32 to vector<2x128xf32>
    %176 = arith.addf %175, %174 : vector<2x128xf32>
    %177 = arith.mulf %138, %176 : vector<2x128xf32>
    %178 = arith.truncf %177 : vector<2x128xf32> to vector<2x128xbf16>
    %c0_70 = arith.constant 0 : index
    %c0_71 = arith.constant 0 : index
    %179 = vector.load %arg12[%c0_70, %c0_71] : memref<128x32xbf16, #tpu.memory_space<vmem>>, vector<128x32xbf16>
    %cst_72 = arith.constant dense<0.000000e+00> : vector<2x32xf32>
    %180 = tpu.matmul %178, %179, %cst_72 {dimension_numbers = #tpu.dot_dimension_numbers<[1], [0], [0], [1], [0, 0, 1, 1], [], []>} : vector<2x128xbf16>, vector<128x32xbf16>, vector<2x32xf32> -> vector<2x32xf32>
    %c0_73 = arith.constant 0 : index
    %c0_74 = arith.constant 0 : index
    %181 = vector.load %arg13[%c0_73, %c0_74] : memref<1x32xf32, #tpu.memory_space<vmem>>, vector<1x32xf32>
    %182 = vector.broadcast %181 : vector<1x32xf32> to vector<2x32xf32>
    %183 = arith.addf %180, %182 : vector<2x32xf32>
    %184 = arith.addf %108, %183 : vector<2x32xf32>
    %c0_75 = arith.constant 0 : index
    %c0_76 = arith.constant 0 : index
    %c0_77 = arith.constant 0 : index
    %185 = vector.load %arg14[%c0_75, %c0_76, %c0_77] : memref<1x2x32xf32, #tpu.memory_space<vmem>>, vector<1x2x32xf32>
    %186 = vector.shape_cast %185 : vector<1x2x32xf32> to vector<2x32xf32>
    %187 = vector.shape_cast %184 : vector<2x32xf32> to vector<1x2x32xf32>
    tpu.vector_store %arg14[%c0_75, %c0_76, %c0_77], %187 {strides = array<i32>} : memref<1x2x32xf32, #tpu.memory_space<vmem>>, vector<1x2x32xf32>,
    return
  }
  func.func @transform_0(%arg0: i32) -> (i32, i32, i32) {
    %c0_i32 = arith.constant 0 : i32
    %c0_i32_0 = arith.constant 0 : i32
    %c0_i32_1 = arith.constant 0 : i32
    return %arg0, %c0_i32, %c0_i32_0 : i32, i32, i32
  }
  func.func @transform_1(%arg0: i32) -> (i32, i32) {
    %c0_i32 = arith.constant 0 : i32
    %c0_i32_0 = arith.constant 0 : i32
    %c0_i32_1 = arith.constant 0 : i32
    return %c0_i32, %c0_i32_0 : i32, i32
  }
  func.func @transform_2(%arg0: i32) -> (i32, i32) {
    %c0_i32 = arith.constant 0 : i32
    %c0_i32_0 = arith.constant 0 : i32
    %c0_i32_1 = arith.constant 0 : i32
    return %c0_i32, %c0_i32_0 : i32, i32
  }
  func.func @transform_3(%arg0: i32) -> (i32, i32) {
    %c0_i32 = arith.constant 0 : i32
    %c0_i32_0 = arith.constant 0 : i32
    %c0_i32_1 = arith.constant 0 : i32
    return %c0_i32, %c0_i32_0 : i32, i32
  }
  func.func @transform_4(%arg0: i32) -> (i32, i32) {
    %c0_i32 = arith.constant 0 : i32
    %c0_i32_0 = arith.constant 0 : i32
    %c0_i32_1 = arith.constant 0 : i32
    return %c0_i32, %c0_i32_0 : i32, i32
  }
  func.func @transform_5(%arg0: i32) -> (i32, i32) {
    %c0_i32 = arith.constant 0 : i32
    %c0_i32_0 = arith.constant 0 : i32
    %c0_i32_1 = arith.constant 0 : i32
    return %c0_i32, %c0_i32_0 : i32, i32
  }
  func.func @transform_6(%arg0: i32) -> (i32, i32) {
    %c0_i32 = arith.constant 0 : i32
    %c0_i32_0 = arith.constant 0 : i32
    %c0_i32_1 = arith.constant 0 : i32
    return %c0_i32, %c0_i32_0 : i32, i32
  }
  func.func @transform_7(%arg0: i32) -> (i32, i32) {
    %c0_i32 = arith.constant 0 : i32
    %c0_i32_0 = arith.constant 0 : i32
    %c0_i32_1 = arith.constant 0 : i32
    return %c0_i32, %c0_i32_0 : i32, i32
  }
  func.func @transform_8(%arg0: i32) -> (i32, i32) {
    %c0_i32 = arith.constant 0 : i32
    %c0_i32_0 = arith.constant 0 : i32
    %c0_i32_1 = arith.constant 0 : i32
    return %c0_i32, %c0_i32_0 : i32, i32
  }
  func.func @transform_9(%arg0: i32) -> (i32, i32) {
    %c0_i32 = arith.constant 0 : i32
    %c0_i32_0 = arith.constant 0 : i32
    %c0_i32_1 = arith.constant 0 : i32
    return %c0_i32, %c0_i32_0 : i32, i32
  }
  func.func @transform_10(%arg0: i32) -> (i32, i32) {
    %c0_i32 = arith.constant 0 : i32
    %c0_i32_0 = arith.constant 0 : i32
    %c0_i32_1 = arith.constant 0 : i32
    return %c0_i32, %c0_i32_0 : i32, i32
  }
  func.func @transform_11(%arg0: i32) -> (i32, i32) {
    %c0_i32 = arith.constant 0 : i32
    %c0_i32_0 = arith.constant 0 : i32
    %c0_i32_1 = arith.constant 0 : i32
    return %c0_i32, %c0_i32_0 : i32, i32
  }
  func.func @transform_12(%arg0: i32) -> (i32, i32) {
    %c0_i32 = arith.constant 0 : i32
    %c0_i32_0 = arith.constant 0 : i32
    %c0_i32_1 = arith.constant 0 : i32
    return %c0_i32, %c0_i32_0 : i32, i32
  }
  func.func @transform_13(%arg0: i32) -> (i32, i32, i32) {
    %c0_i32 = arith.constant 0 : i32
    %c0_i32_0 = arith.constant 0 : i32
    %c0_i32_1 = arith.constant 0 : i32
    return %arg0, %c0_i32, %c0_i32_0 : i32, i32, i32
  }
}

module attributes {stable_mosaic.version = 11 : i64} {
  func.func @_enc_final_kernel(%arg0: i32, %arg1: memref<1x2x32xf32, #tpu.memory_space<vmem>>, %arg2: memref<1x32xf32, #tpu.memory_space<vmem>>, %arg3: memref<1x32xf32, #tpu.memory_space<vmem>>, %arg4: memref<32x16xbf16, #tpu.memory_space<vmem>>, %arg5: memref<1x16xf32, #tpu.memory_space<vmem>>, %arg6: memref<1x2x16xf32, #tpu.memory_space<vmem>>) attributes {dimension_semantics = [#tpu.dimension_semantics<parallel>], iteration_bounds = array<i64: 2>, scalar_prefetch = 0 : i64, scratch_operands = 0 : i64, tpu.core_type = #tpu.core_type<tc>, window_params = [{transform_indices = @transform_0, window_bounds = array<i64: 1, 2, 32>}, {pipeline_mode = #tpu.pipeline_mode<synchronous>, transform_indices = @transform_1, window_bounds = array<i64: 1, 32>}, {pipeline_mode = #tpu.pipeline_mode<synchronous>, transform_indices = @transform_2, window_bounds = array<i64: 1, 32>}, {pipeline_mode = #tpu.pipeline_mode<synchronous>, transform_indices = @transform_3, window_bounds = array<i64: 32, 16>}, {pipeline_mode = #tpu.pipeline_mode<synchronous>, transform_indices = @transform_4, window_bounds = array<i64: 1, 16>}, {transform_indices = @transform_5, window_bounds = array<i64: 1, 2, 16>}]} {
    %c0 = arith.constant 0 : index
    %c0_0 = arith.constant 0 : index
    %c0_1 = arith.constant 0 : index
    %0 = vector.load %arg1[%c0, %c0_0, %c0_1] : memref<1x2x32xf32, #tpu.memory_space<vmem>>, vector<1x2x32xf32>
    %1 = vector.shape_cast %0 : vector<1x2x32xf32> to vector<2x32xf32>
    %c0_2 = arith.constant 0 : index
    %c0_3 = arith.constant 0 : index
    %2 = vector.load %arg2[%c0_2, %c0_3] : memref<1x32xf32, #tpu.memory_space<vmem>>, vector<1x32xf32>
    %c0_4 = arith.constant 0 : index
    %c0_5 = arith.constant 0 : index
    %3 = vector.load %arg3[%c0_4, %c0_5] : memref<1x32xf32, #tpu.memory_space<vmem>>, vector<1x32xf32>
    %cst = arith.constant dense<0.000000e+00> : vector<2xf32>
    %4 = vector.multi_reduction <add>, %1, %cst [1] : vector<2x32xf32> to vector<2xf32>
    %5 = vector.shape_cast %4 : vector<2xf32> to vector<2x1xf32>
    %cst_6 = arith.constant 3.200000e+01 : f32
    %6 = vector.broadcast %cst_6 : f32 to vector<2x1xf32>
    %7 = arith.divf %5, %6 : vector<2x1xf32>
    %8 = vector.broadcast %7 : vector<2x1xf32> to vector<2x32xf32>
    %9 = arith.subf %1, %8 : vector<2x32xf32>
    %10 = arith.mulf %9, %9 : vector<2x32xf32>
    %cst_7 = arith.constant dense<0.000000e+00> : vector<2xf32>
    %11 = vector.multi_reduction <add>, %10, %cst_7 [1] : vector<2x32xf32> to vector<2xf32>
    %12 = vector.shape_cast %11 : vector<2xf32> to vector<2x1xf32>
    %cst_8 = arith.constant 3.200000e+01 : f32
    %13 = vector.broadcast %cst_8 : f32 to vector<2x1xf32>
    %14 = arith.divf %12, %13 : vector<2x1xf32>
    %cst_9 = arith.constant 9.99999974E-6 : f32
    %15 = vector.broadcast %cst_9 : f32 to vector<2x1xf32>
    %16 = arith.addf %14, %15 : vector<2x1xf32>
    %17 = math.rsqrt %16 : vector<2x1xf32>
    %18 = vector.broadcast %17 : vector<2x1xf32> to vector<2x32xf32>
    %19 = arith.mulf %9, %18 : vector<2x32xf32>
    %20 = vector.broadcast %2 : vector<1x32xf32> to vector<2x32xf32>
    %21 = arith.mulf %19, %20 : vector<2x32xf32>
    %22 = vector.broadcast %3 : vector<1x32xf32> to vector<2x32xf32>
    %23 = arith.addf %21, %22 : vector<2x32xf32>
    %24 = arith.truncf %23 : vector<2x32xf32> to vector<2x32xbf16>
    %c0_10 = arith.constant 0 : index
    %c0_11 = arith.constant 0 : index
    %25 = vector.load %arg4[%c0_10, %c0_11] : memref<32x16xbf16, #tpu.memory_space<vmem>>, vector<32x16xbf16>
    %cst_12 = arith.constant dense<0.000000e+00> : vector<2x16xf32>
    %26 = tpu.matmul %24, %25, %cst_12 {dimension_numbers = #tpu.dot_dimension_numbers<[1], [0], [0], [1], [0, 0, 1, 1], [], []>} : vector<2x32xbf16>, vector<32x16xbf16>, vector<2x16xf32> -> vector<2x16xf32>
    %c0_13 = arith.constant 0 : index
    %c0_14 = arith.constant 0 : index
    %27 = vector.load %arg5[%c0_13, %c0_14] : memref<1x16xf32, #tpu.memory_space<vmem>>, vector<1x16xf32>
    %28 = vector.broadcast %27 : vector<1x16xf32> to vector<2x16xf32>
    %29 = arith.addf %26, %28 : vector<2x16xf32>
    %c0_15 = arith.constant 0 : index
    %c0_16 = arith.constant 0 : index
    %c0_17 = arith.constant 0 : index
    %30 = vector.load %arg6[%c0_15, %c0_16, %c0_17] : memref<1x2x16xf32, #tpu.memory_space<vmem>>, vector<1x2x16xf32>
    %31 = vector.shape_cast %30 : vector<1x2x16xf32> to vector<2x16xf32>
    %32 = vector.shape_cast %29 : vector<2x16xf32> to vector<1x2x16xf32>
    tpu.vector_store %arg6[%c0_15, %c0_16, %c0_17], %32 {strides = array<i32>} : memref<1x2x16xf32, #tpu.memory_space<vmem>>, vector<1x2x16xf32>,
    return
  }
  func.func @transform_0(%arg0: i32) -> (i32, i32, i32) {
    %c0_i32 = arith.constant 0 : i32
    %c0_i32_0 = arith.constant 0 : i32
    %c0_i32_1 = arith.constant 0 : i32
    return %arg0, %c0_i32, %c0_i32_0 : i32, i32, i32
  }
  func.func @transform_1(%arg0: i32) -> (i32, i32) {
    %c0_i32 = arith.constant 0 : i32
    %c0_i32_0 = arith.constant 0 : i32
    %c0_i32_1 = arith.constant 0 : i32
    return %c0_i32, %c0_i32_0 : i32, i32
  }
  func.func @transform_2(%arg0: i32) -> (i32, i32) {
    %c0_i32 = arith.constant 0 : i32
    %c0_i32_0 = arith.constant 0 : i32
    %c0_i32_1 = arith.constant 0 : i32
    return %c0_i32, %c0_i32_0 : i32, i32
  }
  func.func @transform_3(%arg0: i32) -> (i32, i32) {
    %c0_i32 = arith.constant 0 : i32
    %c0_i32_0 = arith.constant 0 : i32
    %c0_i32_1 = arith.constant 0 : i32
    return %c0_i32, %c0_i32_0 : i32, i32
  }
  func.func @transform_4(%arg0: i32) -> (i32, i32) {
    %c0_i32 = arith.constant 0 : i32
    %c0_i32_0 = arith.constant 0 : i32
    %c0_i32_1 = arith.constant 0 : i32
    return %c0_i32, %c0_i32_0 : i32, i32
  }
  func.func @transform_5(%arg0: i32) -> (i32, i32, i32) {
    %c0_i32 = arith.constant 0 : i32
    %c0_i32_0 = arith.constant 0 : i32
    %c0_i32_1 = arith.constant 0 : i32
    return %arg0, %c0_i32, %c0_i32_0 : i32, i32, i32
  }
}

module attributes {stable_mosaic.version = 11 : i64} {
  func.func @_block_kernel(%arg0: i32, %arg1: memref<1x8x16xf32, #tpu.memory_space<vmem>>, %arg2: memref<1x16xf32, #tpu.memory_space<vmem>>, %arg3: memref<1x16xf32, #tpu.memory_space<vmem>>, %arg4: memref<16x48xbf16, #tpu.memory_space<vmem>>, %arg5: memref<1x48xf32, #tpu.memory_space<vmem>>, %arg6: memref<16x16xbf16, #tpu.memory_space<vmem>>, %arg7: memref<1x16xf32, #tpu.memory_space<vmem>>, %arg8: memref<1x16xf32, #tpu.memory_space<vmem>>, %arg9: memref<1x16xf32, #tpu.memory_space<vmem>>, %arg10: memref<16x64xbf16, #tpu.memory_space<vmem>>, %arg11: memref<1x64xf32, #tpu.memory_space<vmem>>, %arg12: memref<64x16xbf16, #tpu.memory_space<vmem>>, %arg13: memref<1x16xf32, #tpu.memory_space<vmem>>, %arg14: memref<1x8x16xf32, #tpu.memory_space<vmem>>) attributes {dimension_semantics = [#tpu.dimension_semantics<parallel>], iteration_bounds = array<i64: 2>, scalar_prefetch = 0 : i64, scratch_operands = 0 : i64, tpu.core_type = #tpu.core_type<tc>, window_params = [{transform_indices = @transform_0, window_bounds = array<i64: 1, 8, 16>}, {pipeline_mode = #tpu.pipeline_mode<synchronous>, transform_indices = @transform_1, window_bounds = array<i64: 1, 16>}, {pipeline_mode = #tpu.pipeline_mode<synchronous>, transform_indices = @transform_2, window_bounds = array<i64: 1, 16>}, {pipeline_mode = #tpu.pipeline_mode<synchronous>, transform_indices = @transform_3, window_bounds = array<i64: 16, 48>}, {pipeline_mode = #tpu.pipeline_mode<synchronous>, transform_indices = @transform_4, window_bounds = array<i64: 1, 48>}, {pipeline_mode = #tpu.pipeline_mode<synchronous>, transform_indices = @transform_5, window_bounds = array<i64: 16, 16>}, {pipeline_mode = #tpu.pipeline_mode<synchronous>, transform_indices = @transform_6, window_bounds = array<i64: 1, 16>}, {pipeline_mode = #tpu.pipeline_mode<synchronous>, transform_indices = @transform_7, window_bounds = array<i64: 1, 16>}, {pipeline_mode = #tpu.pipeline_mode<synchronous>, transform_indices = @transform_8, window_bounds = array<i64: 1, 16>}, {pipeline_mode = #tpu.pipeline_mode<synchronous>, transform_indices = @transform_9, window_bounds = array<i64: 16, 64>}, {pipeline_mode = #tpu.pipeline_mode<synchronous>, transform_indices = @transform_10, window_bounds = array<i64: 1, 64>}, {pipeline_mode = #tpu.pipeline_mode<synchronous>, transform_indices = @transform_11, window_bounds = array<i64: 64, 16>}, {pipeline_mode = #tpu.pipeline_mode<synchronous>, transform_indices = @transform_12, window_bounds = array<i64: 1, 16>}, {transform_indices = @transform_13, window_bounds = array<i64: 1, 8, 16>}]} {
    %c0 = arith.constant 0 : index
    %c0_0 = arith.constant 0 : index
    %c0_1 = arith.constant 0 : index
    %0 = vector.load %arg1[%c0, %c0_0, %c0_1] : memref<1x8x16xf32, #tpu.memory_space<vmem>>, vector<1x8x16xf32>
    %1 = vector.shape_cast %0 : vector<1x8x16xf32> to vector<8x16xf32>
    %c0_2 = arith.constant 0 : index
    %c0_3 = arith.constant 0 : index
    %2 = vector.load %arg2[%c0_2, %c0_3] : memref<1x16xf32, #tpu.memory_space<vmem>>, vector<1x16xf32>
    %c0_4 = arith.constant 0 : index
    %c0_5 = arith.constant 0 : index
    %3 = vector.load %arg3[%c0_4, %c0_5] : memref<1x16xf32, #tpu.memory_space<vmem>>, vector<1x16xf32>
    %cst = arith.constant dense<0.000000e+00> : vector<8xf32>
    %4 = vector.multi_reduction <add>, %1, %cst [1] : vector<8x16xf32> to vector<8xf32>
    %5 = vector.shape_cast %4 : vector<8xf32> to vector<8x1xf32>
    %cst_6 = arith.constant 1.600000e+01 : f32
    %6 = vector.broadcast %cst_6 : f32 to vector<8x1xf32>
    %7 = arith.divf %5, %6 : vector<8x1xf32>
    %8 = vector.broadcast %7 : vector<8x1xf32> to vector<8x16xf32>
    %9 = arith.subf %1, %8 : vector<8x16xf32>
    %10 = arith.mulf %9, %9 : vector<8x16xf32>
    %cst_7 = arith.constant dense<0.000000e+00> : vector<8xf32>
    %11 = vector.multi_reduction <add>, %10, %cst_7 [1] : vector<8x16xf32> to vector<8xf32>
    %12 = vector.shape_cast %11 : vector<8xf32> to vector<8x1xf32>
    %cst_8 = arith.constant 1.600000e+01 : f32
    %13 = vector.broadcast %cst_8 : f32 to vector<8x1xf32>
    %14 = arith.divf %12, %13 : vector<8x1xf32>
    %cst_9 = arith.constant 9.99999974E-6 : f32
    %15 = vector.broadcast %cst_9 : f32 to vector<8x1xf32>
    %16 = arith.addf %14, %15 : vector<8x1xf32>
    %17 = math.rsqrt %16 : vector<8x1xf32>
    %18 = vector.broadcast %17 : vector<8x1xf32> to vector<8x16xf32>
    %19 = arith.mulf %9, %18 : vector<8x16xf32>
    %20 = vector.broadcast %2 : vector<1x16xf32> to vector<8x16xf32>
    %21 = arith.mulf %19, %20 : vector<8x16xf32>
    %22 = vector.broadcast %3 : vector<1x16xf32> to vector<8x16xf32>
    %23 = arith.addf %21, %22 : vector<8x16xf32>
    %24 = arith.truncf %23 : vector<8x16xf32> to vector<8x16xbf16>
    %c0_10 = arith.constant 0 : index
    %c0_11 = arith.constant 0 : index
    %25 = vector.load %arg4[%c0_10, %c0_11] : memref<16x48xbf16, #tpu.memory_space<vmem>>, vector<16x48xbf16>
    %cst_12 = arith.constant dense<0.000000e+00> : vector<8x48xf32>
    %26 = tpu.matmul %24, %25, %cst_12 {dimension_numbers = #tpu.dot_dimension_numbers<[1], [0], [0], [1], [0, 0, 1, 1], [], []>} : vector<8x16xbf16>, vector<16x48xbf16>, vector<8x48xf32> -> vector<8x48xf32>
    %c0_13 = arith.constant 0 : index
    %c0_14 = arith.constant 0 : index
    %27 = vector.load %arg5[%c0_13, %c0_14] : memref<1x48xf32, #tpu.memory_space<vmem>>, vector<1x48xf32>
    %28 = vector.broadcast %27 : vector<1x48xf32> to vector<8x48xf32>
    %29 = arith.addf %26, %28 : vector<8x48xf32>
    %30 = vector.extract_strided_slice %29 {offsets = [0, 0], sizes = [8, 16], strides = [1, 1]} : vector<8x48xf32> to vector<8x16xf32>
    %31 = vector.extract_strided_slice %29 {offsets = [0, 16], sizes = [8, 16], strides = [1, 1]} : vector<8x48xf32> to vector<8x16xf32>
    %32 = vector.extract_strided_slice %29 {offsets = [0, 32], sizes = [8, 16], strides = [1, 1]} : vector<8x48xf32> to vector<8x16xf32>
    %33 = vector.extract_strided_slice %30 {offsets = [0, 0], sizes = [8, 4], strides = [1, 1]} : vector<8x16xf32> to vector<8x4xf32>
    %34 = vector.extract_strided_slice %31 {offsets = [0, 0], sizes = [8, 4], strides = [1, 1]} : vector<8x16xf32> to vector<8x4xf32>
    %35 = vector.extract_strided_slice %32 {offsets = [0, 0], sizes = [8, 4], strides = [1, 1]} : vector<8x16xf32> to vector<8x4xf32>
    %36 = tpu.transpose %34, [1, 0] : vector<8x4xf32> -> vector<4x8xf32>
    %cst_15 = arith.constant dense<0.000000e+00> : vector<8x8xf32>
    %37 = tpu.matmul %33, %36, %cst_15 {dimension_numbers = #tpu.dot_dimension_numbers<[1], [0], [0], [1], [0, 0, 1, 1], [], []>} : vector<8x4xf32>, vector<4x8xf32>, vector<8x8xf32> -> vector<8x8xf32>
    %cst_16 = arith.constant 5.000000e-01 : f32
    %38 = vector.broadcast %cst_16 : f32 to vector<8x8xf32>
    %39 = arith.mulf %37, %38 : vector<8x8xf32>
    %cst_17 = arith.constant dense<0xFF800000> : vector<8xf32>
    %40 = vector.multi_reduction <maximumf>, %39, %cst_17 [1] : vector<8x8xf32> to vector<8xf32>
    %41 = vector.shape_cast %40 : vector<8xf32> to vector<8x1xf32>
    %42 = vector.broadcast %41 : vector<8x1xf32> to vector<8x8xf32>
    %43 = arith.subf %39, %42 : vector<8x8xf32>
    %44 = math.exp %43 : vector<8x8xf32>
    %cst_18 = arith.constant dense<0.000000e+00> : vector<8xf32>
    %45 = vector.multi_reduction <add>, %44, %cst_18 [1] : vector<8x8xf32> to vector<8xf32>
    %46 = vector.shape_cast %45 : vector<8xf32> to vector<8x1xf32>
    %47 = vector.broadcast %46 : vector<8x1xf32> to vector<8x8xf32>
    %48 = arith.divf %44, %47 : vector<8x8xf32>
    %cst_19 = arith.constant dense<0.000000e+00> : vector<8x4xf32>
    %49 = tpu.matmul %48, %35, %cst_19 {dimension_numbers = #tpu.dot_dimension_numbers<[1], [0], [0], [1], [0, 0, 1, 1], [], []>} : vector<8x8xf32>, vector<8x4xf32>, vector<8x4xf32> -> vector<8x4xf32>
    %50 = vector.extract_strided_slice %30 {offsets = [0, 4], sizes = [8, 4], strides = [1, 1]} : vector<8x16xf32> to vector<8x4xf32>
    %51 = vector.extract_strided_slice %31 {offsets = [0, 4], sizes = [8, 4], strides = [1, 1]} : vector<8x16xf32> to vector<8x4xf32>
    %52 = vector.extract_strided_slice %32 {offsets = [0, 4], sizes = [8, 4], strides = [1, 1]} : vector<8x16xf32> to vector<8x4xf32>
    %53 = tpu.transpose %51, [1, 0] : vector<8x4xf32> -> vector<4x8xf32>
    %cst_20 = arith.constant dense<0.000000e+00> : vector<8x8xf32>
    %54 = tpu.matmul %50, %53, %cst_20 {dimension_numbers = #tpu.dot_dimension_numbers<[1], [0], [0], [1], [0, 0, 1, 1], [], []>} : vector<8x4xf32>, vector<4x8xf32>, vector<8x8xf32> -> vector<8x8xf32>
    %cst_21 = arith.constant 5.000000e-01 : f32
    %55 = vector.broadcast %cst_21 : f32 to vector<8x8xf32>
    %56 = arith.mulf %54, %55 : vector<8x8xf32>
    %cst_22 = arith.constant dense<0xFF800000> : vector<8xf32>
    %57 = vector.multi_reduction <maximumf>, %56, %cst_22 [1] : vector<8x8xf32> to vector<8xf32>
    %58 = vector.shape_cast %57 : vector<8xf32> to vector<8x1xf32>
    %59 = vector.broadcast %58 : vector<8x1xf32> to vector<8x8xf32>
    %60 = arith.subf %56, %59 : vector<8x8xf32>
    %61 = math.exp %60 : vector<8x8xf32>
    %cst_23 = arith.constant dense<0.000000e+00> : vector<8xf32>
    %62 = vector.multi_reduction <add>, %61, %cst_23 [1] : vector<8x8xf32> to vector<8xf32>
    %63 = vector.shape_cast %62 : vector<8xf32> to vector<8x1xf32>
    %64 = vector.broadcast %63 : vector<8x1xf32> to vector<8x8xf32>
    %65 = arith.divf %61, %64 : vector<8x8xf32>
    %cst_24 = arith.constant dense<0.000000e+00> : vector<8x4xf32>
    %66 = tpu.matmul %65, %52, %cst_24 {dimension_numbers = #tpu.dot_dimension_numbers<[1], [0], [0], [1], [0, 0, 1, 1], [], []>} : vector<8x8xf32>, vector<8x4xf32>, vector<8x4xf32> -> vector<8x4xf32>
    %67 = vector.extract_strided_slice %30 {offsets = [0, 8], sizes = [8, 4], strides = [1, 1]} : vector<8x16xf32> to vector<8x4xf32>
    %68 = vector.extract_strided_slice %31 {offsets = [0, 8], sizes = [8, 4], strides = [1, 1]} : vector<8x16xf32> to vector<8x4xf32>
    %69 = vector.extract_strided_slice %32 {offsets = [0, 8], sizes = [8, 4], strides = [1, 1]} : vector<8x16xf32> to vector<8x4xf32>
    %70 = tpu.transpose %68, [1, 0] : vector<8x4xf32> -> vector<4x8xf32>
    %cst_25 = arith.constant dense<0.000000e+00> : vector<8x8xf32>
    %71 = tpu.matmul %67, %70, %cst_25 {dimension_numbers = #tpu.dot_dimension_numbers<[1], [0], [0], [1], [0, 0, 1, 1], [], []>} : vector<8x4xf32>, vector<4x8xf32>, vector<8x8xf32> -> vector<8x8xf32>
    %cst_26 = arith.constant 5.000000e-01 : f32
    %72 = vector.broadcast %cst_26 : f32 to vector<8x8xf32>
    %73 = arith.mulf %71, %72 : vector<8x8xf32>
    %cst_27 = arith.constant dense<0xFF800000> : vector<8xf32>
    %74 = vector.multi_reduction <maximumf>, %73, %cst_27 [1] : vector<8x8xf32> to vector<8xf32>
    %75 = vector.shape_cast %74 : vector<8xf32> to vector<8x1xf32>
    %76 = vector.broadcast %75 : vector<8x1xf32> to vector<8x8xf32>
    %77 = arith.subf %73, %76 : vector<8x8xf32>
    %78 = math.exp %77 : vector<8x8xf32>
    %cst_28 = arith.constant dense<0.000000e+00> : vector<8xf32>
    %79 = vector.multi_reduction <add>, %78, %cst_28 [1] : vector<8x8xf32> to vector<8xf32>
    %80 = vector.shape_cast %79 : vector<8xf32> to vector<8x1xf32>
    %81 = vector.broadcast %80 : vector<8x1xf32> to vector<8x8xf32>
    %82 = arith.divf %78, %81 : vector<8x8xf32>
    %cst_29 = arith.constant dense<0.000000e+00> : vector<8x4xf32>
    %83 = tpu.matmul %82, %69, %cst_29 {dimension_numbers = #tpu.dot_dimension_numbers<[1], [0], [0], [1], [0, 0, 1, 1], [], []>} : vector<8x8xf32>, vector<8x4xf32>, vector<8x4xf32> -> vector<8x4xf32>
    %84 = vector.extract_strided_slice %30 {offsets = [0, 12], sizes = [8, 4], strides = [1, 1]} : vector<8x16xf32> to vector<8x4xf32>
    %85 = vector.extract_strided_slice %31 {offsets = [0, 12], sizes = [8, 4], strides = [1, 1]} : vector<8x16xf32> to vector<8x4xf32>
    %86 = vector.extract_strided_slice %32 {offsets = [0, 12], sizes = [8, 4], strides = [1, 1]} : vector<8x16xf32> to vector<8x4xf32>
    %87 = tpu.transpose %85, [1, 0] : vector<8x4xf32> -> vector<4x8xf32>
    %cst_30 = arith.constant dense<0.000000e+00> : vector<8x8xf32>
    %88 = tpu.matmul %84, %87, %cst_30 {dimension_numbers = #tpu.dot_dimension_numbers<[1], [0], [0], [1], [0, 0, 1, 1], [], []>} : vector<8x4xf32>, vector<4x8xf32>, vector<8x8xf32> -> vector<8x8xf32>
    %cst_31 = arith.constant 5.000000e-01 : f32
    %89 = vector.broadcast %cst_31 : f32 to vector<8x8xf32>
    %90 = arith.mulf %88, %89 : vector<8x8xf32>
    %cst_32 = arith.constant dense<0xFF800000> : vector<8xf32>
    %91 = vector.multi_reduction <maximumf>, %90, %cst_32 [1] : vector<8x8xf32> to vector<8xf32>
    %92 = vector.shape_cast %91 : vector<8xf32> to vector<8x1xf32>
    %93 = vector.broadcast %92 : vector<8x1xf32> to vector<8x8xf32>
    %94 = arith.subf %90, %93 : vector<8x8xf32>
    %95 = math.exp %94 : vector<8x8xf32>
    %cst_33 = arith.constant dense<0.000000e+00> : vector<8xf32>
    %96 = vector.multi_reduction <add>, %95, %cst_33 [1] : vector<8x8xf32> to vector<8xf32>
    %97 = vector.shape_cast %96 : vector<8xf32> to vector<8x1xf32>
    %98 = vector.broadcast %97 : vector<8x1xf32> to vector<8x8xf32>
    %99 = arith.divf %95, %98 : vector<8x8xf32>
    %cst_34 = arith.constant dense<0.000000e+00> : vector<8x4xf32>
    %100 = tpu.matmul %99, %86, %cst_34 {dimension_numbers = #tpu.dot_dimension_numbers<[1], [0], [0], [1], [0, 0, 1, 1], [], []>} : vector<8x8xf32>, vector<8x4xf32>, vector<8x4xf32> -> vector<8x4xf32>
    %101 = tpu.concatenate %49, %66, %83, %100 in 1 : vector<8x4xf32>, vector<8x4xf32>, vector<8x4xf32>, vector<8x4xf32> -> vector<8x16xf32>
    %102 = arith.truncf %101 : vector<8x16xf32> to vector<8x16xbf16>
    %c0_35 = arith.constant 0 : index
    %c0_36 = arith.constant 0 : index
    %103 = vector.load %arg6[%c0_35, %c0_36] : memref<16x16xbf16, #tpu.memory_space<vmem>>, vector<16x16xbf16>
    %cst_37 = arith.constant dense<0.000000e+00> : vector<8x16xf32>
    %104 = tpu.matmul %102, %103, %cst_37 {dimension_numbers = #tpu.dot_dimension_numbers<[1], [0], [0], [1], [0, 0, 1, 1], [], []>} : vector<8x16xbf16>, vector<16x16xbf16>, vector<8x16xf32> -> vector<8x16xf32>
    %c0_38 = arith.constant 0 : index
    %c0_39 = arith.constant 0 : index
    %105 = vector.load %arg7[%c0_38, %c0_39] : memref<1x16xf32, #tpu.memory_space<vmem>>, vector<1x16xf32>
    %106 = vector.broadcast %105 : vector<1x16xf32> to vector<8x16xf32>
    %107 = arith.addf %104, %106 : vector<8x16xf32>
    %108 = arith.addf %1, %107 : vector<8x16xf32>
    %c0_40 = arith.constant 0 : index
    %c0_41 = arith.constant 0 : index
    %109 = vector.load %arg8[%c0_40, %c0_41] : memref<1x16xf32, #tpu.memory_space<vmem>>, vector<1x16xf32>
    %c0_42 = arith.constant 0 : index
    %c0_43 = arith.constant 0 : index
    %110 = vector.load %arg9[%c0_42, %c0_43] : memref<1x16xf32, #tpu.memory_space<vmem>>, vector<1x16xf32>
    %cst_44 = arith.constant dense<0.000000e+00> : vector<8xf32>
    %111 = vector.multi_reduction <add>, %108, %cst_44 [1] : vector<8x16xf32> to vector<8xf32>
    %112 = vector.shape_cast %111 : vector<8xf32> to vector<8x1xf32>
    %cst_45 = arith.constant 1.600000e+01 : f32
    %113 = vector.broadcast %cst_45 : f32 to vector<8x1xf32>
    %114 = arith.divf %112, %113 : vector<8x1xf32>
    %115 = vector.broadcast %114 : vector<8x1xf32> to vector<8x16xf32>
    %116 = arith.subf %108, %115 : vector<8x16xf32>
    %117 = arith.mulf %116, %116 : vector<8x16xf32>
    %cst_46 = arith.constant dense<0.000000e+00> : vector<8xf32>
    %118 = vector.multi_reduction <add>, %117, %cst_46 [1] : vector<8x16xf32> to vector<8xf32>
    %119 = vector.shape_cast %118 : vector<8xf32> to vector<8x1xf32>
    %cst_47 = arith.constant 1.600000e+01 : f32
    %120 = vector.broadcast %cst_47 : f32 to vector<8x1xf32>
    %121 = arith.divf %119, %120 : vector<8x1xf32>
    %cst_48 = arith.constant 9.99999974E-6 : f32
    %122 = vector.broadcast %cst_48 : f32 to vector<8x1xf32>
    %123 = arith.addf %121, %122 : vector<8x1xf32>
    %124 = math.rsqrt %123 : vector<8x1xf32>
    %125 = vector.broadcast %124 : vector<8x1xf32> to vector<8x16xf32>
    %126 = arith.mulf %116, %125 : vector<8x16xf32>
    %127 = vector.broadcast %109 : vector<1x16xf32> to vector<8x16xf32>
    %128 = arith.mulf %126, %127 : vector<8x16xf32>
    %129 = vector.broadcast %110 : vector<1x16xf32> to vector<8x16xf32>
    %130 = arith.addf %128, %129 : vector<8x16xf32>
    %131 = arith.truncf %130 : vector<8x16xf32> to vector<8x16xbf16>
    %c0_49 = arith.constant 0 : index
    %c0_50 = arith.constant 0 : index
    %132 = vector.load %arg10[%c0_49, %c0_50] : memref<16x64xbf16, #tpu.memory_space<vmem>>, vector<16x64xbf16>
    %cst_51 = arith.constant dense<0.000000e+00> : vector<8x64xf32>
    %133 = tpu.matmul %131, %132, %cst_51 {dimension_numbers = #tpu.dot_dimension_numbers<[1], [0], [0], [1], [0, 0, 1, 1], [], []>} : vector<8x16xbf16>, vector<16x64xbf16>, vector<8x64xf32> -> vector<8x64xf32>
    %c0_52 = arith.constant 0 : index
    %c0_53 = arith.constant 0 : index
    %134 = vector.load %arg11[%c0_52, %c0_53] : memref<1x64xf32, #tpu.memory_space<vmem>>, vector<1x64xf32>
    %135 = vector.broadcast %134 : vector<1x64xf32> to vector<8x64xf32>
    %136 = arith.addf %133, %135 : vector<8x64xf32>
    %cst_54 = arith.constant 5.000000e-01 : f32
    %137 = vector.broadcast %cst_54 : f32 to vector<8x64xf32>
    %138 = arith.mulf %137, %136 : vector<8x64xf32>
    %cst_55 = arith.constant 0.707106769 : f32
    %139 = vector.broadcast %cst_55 : f32 to vector<8x64xf32>
    %140 = arith.mulf %136, %139 : vector<8x64xf32>
    %cst_56 = arith.constant 0.000000e+00 : f32
    %141 = vector.broadcast %cst_56 : f32 to vector<8x64xf32>
    %142 = arith.cmpf oge, %140, %141 : vector<8x64xf32>
    %cst_57 = arith.constant 1.000000e+00 : f32
    %cst_58 = arith.constant -1.000000e+00 : f32
    %143 = vector.broadcast %cst_57 : f32 to vector<8x64xf32>
    %144 = vector.broadcast %cst_58 : f32 to vector<8x64xf32>
    %145 = arith.select %142, %143, %144 : vector<8x64xi1>, vector<8x64xf32>
    %146 = math.absf %140 : vector<8x64xf32>
    %cst_59 = arith.constant 0.327591091 : f32
    %147 = vector.broadcast %cst_59 : f32 to vector<8x64xf32>
    %148 = arith.mulf %147, %146 : vector<8x64xf32>
    %cst_60 = arith.constant 1.000000e+00 : f32
    %149 = vector.broadcast %cst_60 : f32 to vector<8x64xf32>
    %150 = arith.addf %149, %148 : vector<8x64xf32>
    %cst_61 = arith.constant 1.000000e+00 : f32
    %151 = vector.broadcast %cst_61 : f32 to vector<8x64xf32>
    %152 = arith.divf %151, %150 : vector<8x64xf32>
    %cst_62 = arith.constant 1.06140542 : f32
    %153 = vector.broadcast %cst_62 : f32 to vector<8x64xf32>
    %154 = arith.mulf %153, %152 : vector<8x64xf32>
    %cst_63 = arith.constant -1.45315206 : f32
    %155 = vector.broadcast %cst_63 : f32 to vector<8x64xf32>
    %156 = arith.addf %154, %155 : vector<8x64xf32>
    %157 = arith.mulf %156, %152 : vector<8x64xf32>
    %cst_64 = arith.constant 1.42141378 : f32
    %158 = vector.broadcast %cst_64 : f32 to vector<8x64xf32>
    %159 = arith.addf %157, %158 : vector<8x64xf32>
    %160 = arith.mulf %159, %152 : vector<8x64xf32>
    %cst_65 = arith.constant -0.284496725 : f32
    %161 = vector.broadcast %cst_65 : f32 to vector<8x64xf32>
    %162 = arith.addf %160, %161 : vector<8x64xf32>
    %163 = arith.mulf %162, %152 : vector<8x64xf32>
    %cst_66 = arith.constant 0.254829586 : f32
    %164 = vector.broadcast %cst_66 : f32 to vector<8x64xf32>
    %165 = arith.addf %163, %164 : vector<8x64xf32>
    %166 = arith.mulf %165, %152 : vector<8x64xf32>
    %cst_67 = arith.constant 0.000000e+00 : f32
    %167 = vector.broadcast %cst_67 : f32 to vector<8x64xf32>
    %168 = arith.subf %167, %146 : vector<8x64xf32>
    %169 = arith.mulf %168, %146 : vector<8x64xf32>
    %170 = math.exp %169 : vector<8x64xf32>
    %171 = arith.mulf %166, %170 : vector<8x64xf32>
    %cst_68 = arith.constant 1.000000e+00 : f32
    %172 = vector.broadcast %cst_68 : f32 to vector<8x64xf32>
    %173 = arith.subf %172, %171 : vector<8x64xf32>
    %174 = arith.mulf %145, %173 : vector<8x64xf32>
    %cst_69 = arith.constant 1.000000e+00 : f32
    %175 = vector.broadcast %cst_69 : f32 to vector<8x64xf32>
    %176 = arith.addf %175, %174 : vector<8x64xf32>
    %177 = arith.mulf %138, %176 : vector<8x64xf32>
    %178 = arith.truncf %177 : vector<8x64xf32> to vector<8x64xbf16>
    %c0_70 = arith.constant 0 : index
    %c0_71 = arith.constant 0 : index
    %179 = vector.load %arg12[%c0_70, %c0_71] : memref<64x16xbf16, #tpu.memory_space<vmem>>, vector<64x16xbf16>
    %cst_72 = arith.constant dense<0.000000e+00> : vector<8x16xf32>
    %180 = tpu.matmul %178, %179, %cst_72 {dimension_numbers = #tpu.dot_dimension_numbers<[1], [0], [0], [1], [0, 0, 1, 1], [], []>} : vector<8x64xbf16>, vector<64x16xbf16>, vector<8x16xf32> -> vector<8x16xf32>
    %c0_73 = arith.constant 0 : index
    %c0_74 = arith.constant 0 : index
    %181 = vector.load %arg13[%c0_73, %c0_74] : memref<1x16xf32, #tpu.memory_space<vmem>>, vector<1x16xf32>
    %182 = vector.broadcast %181 : vector<1x16xf32> to vector<8x16xf32>
    %183 = arith.addf %180, %182 : vector<8x16xf32>
    %184 = arith.addf %108, %183 : vector<8x16xf32>
    %c0_75 = arith.constant 0 : index
    %c0_76 = arith.constant 0 : index
    %c0_77 = arith.constant 0 : index
    %185 = vector.load %arg14[%c0_75, %c0_76, %c0_77] : memref<1x8x16xf32, #tpu.memory_space<vmem>>, vector<1x8x16xf32>
    %186 = vector.shape_cast %185 : vector<1x8x16xf32> to vector<8x16xf32>
    %187 = vector.shape_cast %184 : vector<8x16xf32> to vector<1x8x16xf32>
    tpu.vector_store %arg14[%c0_75, %c0_76, %c0_77], %187 {strides = array<i32>} : memref<1x8x16xf32, #tpu.memory_space<vmem>>, vector<1x8x16xf32>,
    return
  }
  func.func @transform_0(%arg0: i32) -> (i32, i32, i32) {
    %c0_i32 = arith.constant 0 : i32
    %c0_i32_0 = arith.constant 0 : i32
    %c0_i32_1 = arith.constant 0 : i32
    return %arg0, %c0_i32, %c0_i32_0 : i32, i32, i32
  }
  func.func @transform_1(%arg0: i32) -> (i32, i32) {
    %c0_i32 = arith.constant 0 : i32
    %c0_i32_0 = arith.constant 0 : i32
    %c0_i32_1 = arith.constant 0 : i32
    return %c0_i32, %c0_i32_0 : i32, i32
  }
  func.func @transform_2(%arg0: i32) -> (i32, i32) {
    %c0_i32 = arith.constant 0 : i32
    %c0_i32_0 = arith.constant 0 : i32
    %c0_i32_1 = arith.constant 0 : i32
    return %c0_i32, %c0_i32_0 : i32, i32
  }
  func.func @transform_3(%arg0: i32) -> (i32, i32) {
    %c0_i32 = arith.constant 0 : i32
    %c0_i32_0 = arith.constant 0 : i32
    %c0_i32_1 = arith.constant 0 : i32
    return %c0_i32, %c0_i32_0 : i32, i32
  }
  func.func @transform_4(%arg0: i32) -> (i32, i32) {
    %c0_i32 = arith.constant 0 : i32
    %c0_i32_0 = arith.constant 0 : i32
    %c0_i32_1 = arith.constant 0 : i32
    return %c0_i32, %c0_i32_0 : i32, i32
  }
  func.func @transform_5(%arg0: i32) -> (i32, i32) {
    %c0_i32 = arith.constant 0 : i32
    %c0_i32_0 = arith.constant 0 : i32
    %c0_i32_1 = arith.constant 0 : i32
    return %c0_i32, %c0_i32_0 : i32, i32
  }
  func.func @transform_6(%arg0: i32) -> (i32, i32) {
    %c0_i32 = arith.constant 0 : i32
    %c0_i32_0 = arith.constant 0 : i32
    %c0_i32_1 = arith.constant 0 : i32
    return %c0_i32, %c0_i32_0 : i32, i32
  }
  func.func @transform_7(%arg0: i32) -> (i32, i32) {
    %c0_i32 = arith.constant 0 : i32
    %c0_i32_0 = arith.constant 0 : i32
    %c0_i32_1 = arith.constant 0 : i32
    return %c0_i32, %c0_i32_0 : i32, i32
  }
  func.func @transform_8(%arg0: i32) -> (i32, i32) {
    %c0_i32 = arith.constant 0 : i32
    %c0_i32_0 = arith.constant 0 : i32
    %c0_i32_1 = arith.constant 0 : i32
    return %c0_i32, %c0_i32_0 : i32, i32
  }
  func.func @transform_9(%arg0: i32) -> (i32, i32) {
    %c0_i32 = arith.constant 0 : i32
    %c0_i32_0 = arith.constant 0 : i32
    %c0_i32_1 = arith.constant 0 : i32
    return %c0_i32, %c0_i32_0 : i32, i32
  }
  func.func @transform_10(%arg0: i32) -> (i32, i32) {
    %c0_i32 = arith.constant 0 : i32
    %c0_i32_0 = arith.constant 0 : i32
    %c0_i32_1 = arith.constant 0 : i32
    return %c0_i32, %c0_i32_0 : i32, i32
  }
  func.func @transform_11(%arg0: i32) -> (i32, i32) {
    %c0_i32 = arith.constant 0 : i32
    %c0_i32_0 = arith.constant 0 : i32
    %c0_i32_1 = arith.constant 0 : i32
    return %c0_i32, %c0_i32_0 : i32, i32
  }
  func.func @transform_12(%arg0: i32) -> (i32, i32) {
    %c0_i32 = arith.constant 0 : i32
    %c0_i32_0 = arith.constant 0 : i32
    %c0_i32_1 = arith.constant 0 : i32
    return %c0_i32, %c0_i32_0 : i32, i32
  }
  func.func @transform_13(%arg0: i32) -> (i32, i32, i32) {
    %c0_i32 = arith.constant 0 : i32
    %c0_i32_0 = arith.constant 0 : i32
    %c0_i32_1 = arith.constant 0 : i32
    return %arg0, %c0_i32, %c0_i32_0 : i32, i32, i32
  }
}

module attributes {stable_mosaic.version = 11 : i64} {
  func.func @_pred_loss_kernel(%arg0: memref<16x16xf32, #tpu.memory_space<vmem>>, %arg1: memref<1x16xf32, #tpu.memory_space<vmem>>, %arg2: memref<1x16xf32, #tpu.memory_space<vmem>>, %arg3: memref<16x384xbf16, #tpu.memory_space<vmem>>, %arg4: memref<1x384xf32, #tpu.memory_space<vmem>>, %arg5: memref<16x384xf32, #tpu.memory_space<vmem>>, %arg6: memref<16x1xf32, #tpu.memory_space<vmem>>, %arg7: memref<16x384xf32, #tpu.memory_space<vmem>>, %arg8: memref<1x1xf32, #tpu.memory_space<vmem>>) attributes {dimension_semantics = [], scalar_prefetch = 0 : i64, scratch_operands = 0 : i64, tpu.core_type = #tpu.core_type<tc>} {
    %c0 = arith.constant 0 : index
    %c0_0 = arith.constant 0 : index
    %0 = vector.load %arg0[%c0, %c0_0] : memref<16x16xf32, #tpu.memory_space<vmem>>, vector<16x16xf32>
    %c0_1 = arith.constant 0 : index
    %c0_2 = arith.constant 0 : index
    %1 = vector.load %arg1[%c0_1, %c0_2] : memref<1x16xf32, #tpu.memory_space<vmem>>, vector<1x16xf32>
    %c0_3 = arith.constant 0 : index
    %c0_4 = arith.constant 0 : index
    %2 = vector.load %arg2[%c0_3, %c0_4] : memref<1x16xf32, #tpu.memory_space<vmem>>, vector<1x16xf32>
    %cst = arith.constant dense<0.000000e+00> : vector<16xf32>
    %3 = vector.multi_reduction <add>, %0, %cst [1] : vector<16x16xf32> to vector<16xf32>
    %4 = vector.shape_cast %3 : vector<16xf32> to vector<16x1xf32>
    %cst_5 = arith.constant 1.600000e+01 : f32
    %5 = vector.broadcast %cst_5 : f32 to vector<16x1xf32>
    %6 = arith.divf %4, %5 : vector<16x1xf32>
    %7 = vector.broadcast %6 : vector<16x1xf32> to vector<16x16xf32>
    %8 = arith.subf %0, %7 : vector<16x16xf32>
    %9 = arith.mulf %8, %8 : vector<16x16xf32>
    %cst_6 = arith.constant dense<0.000000e+00> : vector<16xf32>
    %10 = vector.multi_reduction <add>, %9, %cst_6 [1] : vector<16x16xf32> to vector<16xf32>
    %11 = vector.shape_cast %10 : vector<16xf32> to vector<16x1xf32>
    %cst_7 = arith.constant 1.600000e+01 : f32
    %12 = vector.broadcast %cst_7 : f32 to vector<16x1xf32>
    %13 = arith.divf %11, %12 : vector<16x1xf32>
    %cst_8 = arith.constant 9.99999974E-6 : f32
    %14 = vector.broadcast %cst_8 : f32 to vector<16x1xf32>
    %15 = arith.addf %13, %14 : vector<16x1xf32>
    %16 = math.rsqrt %15 : vector<16x1xf32>
    %17 = vector.broadcast %16 : vector<16x1xf32> to vector<16x16xf32>
    %18 = arith.mulf %8, %17 : vector<16x16xf32>
    %19 = vector.broadcast %1 : vector<1x16xf32> to vector<16x16xf32>
    %20 = arith.mulf %18, %19 : vector<16x16xf32>
    %21 = vector.broadcast %2 : vector<1x16xf32> to vector<16x16xf32>
    %22 = arith.addf %20, %21 : vector<16x16xf32>
    %23 = arith.truncf %22 : vector<16x16xf32> to vector<16x16xbf16>
    %c0_9 = arith.constant 0 : index
    %c0_10 = arith.constant 0 : index
    %24 = vector.load %arg3[%c0_9, %c0_10] : memref<16x384xbf16, #tpu.memory_space<vmem>>, vector<16x384xbf16>
    %cst_11 = arith.constant dense<0.000000e+00> : vector<16x384xf32>
    %25 = tpu.matmul %23, %24, %cst_11 {dimension_numbers = #tpu.dot_dimension_numbers<[1], [0], [0], [1], [0, 0, 1, 1], [], []>} : vector<16x16xbf16>, vector<16x384xbf16>, vector<16x384xf32> -> vector<16x384xf32>
    %c0_12 = arith.constant 0 : index
    %c0_13 = arith.constant 0 : index
    %26 = vector.load %arg4[%c0_12, %c0_13] : memref<1x384xf32, #tpu.memory_space<vmem>>, vector<1x384xf32>
    %27 = vector.broadcast %26 : vector<1x384xf32> to vector<16x384xf32>
    %28 = arith.addf %25, %27 : vector<16x384xf32>
    %c0_14 = arith.constant 0 : index
    %c0_15 = arith.constant 0 : index
    %29 = vector.load %arg7[%c0_14, %c0_15] : memref<16x384xf32, #tpu.memory_space<vmem>>, vector<16x384xf32>
    tpu.vector_store %arg7[%c0_14, %c0_15], %28 {strides = array<i32>} : memref<16x384xf32, #tpu.memory_space<vmem>>, vector<16x384xf32>,
    %c0_16 = arith.constant 0 : index
    %c0_17 = arith.constant 0 : index
    %30 = vector.load %arg5[%c0_16, %c0_17] : memref<16x384xf32, #tpu.memory_space<vmem>>, vector<16x384xf32>
    %31 = arith.subf %28, %30 : vector<16x384xf32>
    %32 = arith.mulf %31, %31 : vector<16x384xf32>
    %cst_18 = arith.constant dense<0.000000e+00> : vector<16xf32>
    %33 = vector.multi_reduction <add>, %32, %cst_18 [1] : vector<16x384xf32> to vector<16xf32>
    %34 = vector.shape_cast %33 : vector<16xf32> to vector<16x1xf32>
    %cst_19 = arith.constant 3.840000e+02 : f32
    %35 = vector.broadcast %cst_19 : f32 to vector<16x1xf32>
    %36 = arith.divf %34, %35 : vector<16x1xf32>
    %c0_20 = arith.constant 0 : index
    %c0_21 = arith.constant 0 : index
    %37 = vector.load %arg6[%c0_20, %c0_21] : memref<16x1xf32, #tpu.memory_space<vmem>>, vector<16x1xf32>
    %38 = arith.mulf %36, %37 : vector<16x1xf32>
    %cst_22 = arith.constant dense<0.000000e+00> : vector<1xf32>
    %39 = vector.multi_reduction <add>, %38, %cst_22 [0] : vector<16x1xf32> to vector<1xf32>
    %40 = vector.shape_cast %39 : vector<1xf32> to vector<1x1xf32>
    %cst_23 = arith.constant dense<0.000000e+00> : vector<1xf32>
    %41 = vector.multi_reduction <add>, %37, %cst_23 [0] : vector<16x1xf32> to vector<1xf32>
    %42 = vector.shape_cast %41 : vector<1xf32> to vector<1x1xf32>
    %cst_24 = arith.constant 0.000000e+00 : f32
    %43 = vector.broadcast %cst_24 : f32 to vector<1x1xf32>
    %44 = arith.cmpf oeq, %42, %43 : vector<1x1xf32>
    %cst_25 = arith.constant 1.000000e+00 : f32
    %45 = vector.broadcast %cst_25 : f32 to vector<1x1xf32>
    %46 = arith.select %44, %45, %42 : vector<1x1xi1>, vector<1x1xf32>
    %47 = arith.divf %40, %46 : vector<1x1xf32>
    %c0_26 = arith.constant 0 : index
    %c0_27 = arith.constant 0 : index
    %48 = vector.load %arg8[%c0_26, %c0_27] : memref<1x1xf32, #tpu.memory_space<vmem>>, vector<1x1xf32>
    tpu.vector_store %arg8[%c0_26, %c0_27], %47 {strides = array<i32>} : memref<1x1xf32, #tpu.memory_space<vmem>>, vector<1x1xf32>,
    return
  }
}

</mosaic_0001>

<llo_original>
// kernel: mae_forward.7
$region0: #{mae_forward.7}
  #allocation0 [shape = 'u32[]', space=smem, size = 0x4, offset = 0x4, fixed_abs, tag = 'smem constant byte address 0x4 - core index']
  #allocation1 [shape = 'u32[72,128]{1,0:T(1,128)}', space=vmem, size = 0x9000, scoped, tag = 'internal scratch']
  %s0 = inlined_call_operand.vmem [shape: f32[2,8,384], index: 0, kind: input, shape index: {}]
  %s1 = inlined_call_operand.vmem [shape: bf16[384,32], index: 1, kind: input, shape index: {}]
  %s2 = inlined_call_operand.vmem [shape: f32[1,32], index: 2, kind: input, shape index: {}]
  %s3 = inlined_call_operand.vmem [shape: f32[8,32], index: 3, kind: input, shape index: {}]
  %s4 = inlined_call_operand.vmem [shape: f32[2,8,32], index: 4, kind: output, shape index: {}]
  %s5 = sld [smem:[#allocation0]]
  $region49: #{mae_forward.7} parent=0
    _
  %s7 = ssub.s32 1, %s5
  %s8 = scalar_select 0, %s7, %s5
  loop: start=0, step=1, limit=4
  $region2: #{mae_forward.7} parent=0 // loop_pre_header
    _
  $region3: #{mae_forward.7} parent=0 // loop_header
    %s10 = sphi 0, %s14
    %p11 = scmp.ge.s32.totalorder %s10, 4
    %s20 = sphi 0, %s22
    %s23 = sphi 0, %s20
    %s24 = sphi 0, %s23
    %s40 = sphi 0, %s24
    %s44 = sphi 0, %s44
    %s46 = sphi 0, %s44
    %s47 = sphi 0, %s46
    %s61 = sphi 0, %s47
    %s65 = sphi 0, %s65
    %s67 = sphi 0, %s65
    %s68 = sphi 0, %s67
    %s82 = sphi 0, %s68
    %s86 = sphi 0, %s86
    %s88 = sphi 0, %s86
    %s89 = sphi 0, %s88
    %s103 = sphi 0, %s89
    %s109 = sphi 0, %s111
    %s112 = sphi 0, %s109
    %s113 = sphi 0, %s112
    %s129 = sphi 0, %s113
  $region4: #{mae_forward.7} parent=0 // loop_header_branch
    %13 = sbr.rel (%p11) target = $region8
  $region5: #{mae_forward.7} parent=0 // loop_body
    %s15 = ssub.s32 %s10, 1
    %s16 = ssub.s32 %s10, 2
    %s17 = sadd.s32 %s10, 1
    %s18 = ssub.s32 %s10, %s17
    %p19 = scmp.eq.s32.totalorder %s18, 0
    %s21 = sadd.s32 %s20, 1
    %s22 = scalar_select %p19, %s20, %s21
    %p25 = pneg %p19
    %p26 = scmp.eq.s32.totalorder %s10, 1
    %p27 = por %p25, %p26
    %p28 = scmp.ne.s32.totalorder %s20, %s23
    %p29 = scmp.eq.s32.totalorder %s10, 0
    %p30 = por %p28, %p29
    %p31 = scmp.ne.s32.totalorder %s20, %s23
    %p32 = scmp.eq.s32.totalorder %s15, 1
    %p33 = por %p31, %p32
    %p34 = scmp.ne.s32.totalorder %s23, %s24
    %p35 = scmp.eq.s32.totalorder %s15, 0
    %p36 = por %p34, %p35
    %p37 = scmp.ne.s32.totalorder %s23, %s24
    %p38 = scmp.eq.s32.totalorder %s16, 1
    %p39 = por %p37, %p38
    %p41 = scmp.ne.s32.totalorder %s24, %s40
    %p42 = scmp.eq.s32.totalorder %s16, 0
    %p43 = por %p41, %p42
    %s45 = sadd.s32 %s44, 1
    %p48 = scmp.eq.s32.totalorder %s10, 1
    %p49 = scmp.ne.s32.totalorder %s44, %s46
    %p50 = scmp.eq.s32.totalorder %s10, 0
    %p51 = por %p49, %p50
    %p52 = scmp.ne.s32.totalorder %s44, %s46
    %p53 = scmp.eq.s32.totalorder %s15, 1
    %p54 = por %p52, %p53
    %p55 = scmp.ne.s32.totalorder %s46, %s47
    %p56 = scmp.eq.s32.totalorder %s15, 0
    %p57 = por %p55, %p56
    %p58 = scmp.ne.s32.totalorder %s46, %s47
    %p59 = scmp.eq.s32.totalorder %s16, 1
    %p60 = por %p58, %p59
    %p62 = scmp.ne.s32.totalorder %s47, %s61
    %p63 = scmp.eq.s32.totalorder %s16, 0
    %p64 = por %p62, %p63
    %s66 = sadd.s32 %s65, 1
    %p69 = scmp.eq.s32.totalorder %s10, 1
    %p70 = scmp.ne.s32.totalorder %s65, %s67
    %p71 = scmp.eq.s32.totalorder %s10, 0
    %p72 = por %p70, %p71
    %p73 = scmp.ne.s32.totalorder %s65, %s67
    %p74 = scmp.eq.s32.totalorder %s15, 1
    %p75 = por %p73, %p74
    %p76 = scmp.ne.s32.totalorder %s67, %s68
    %p77 = scmp.eq.s32.totalorder %s15, 0
    %p78 = por %p76, %p77
    %p79 = scmp.ne.s32.totalorder %s67, %s68
    %p80 = scmp.eq.s32.totalorder %s16, 1
    %p81 = por %p79, %p80
    %p83 = scmp.ne.s32.totalorder %s68, %s82
    %p84 = scmp.eq.s32.totalorder %s16, 0
    %p85 = por %p83, %p84
    %s87 = sadd.s32 %s86, 1
    %p90 = scmp.eq.s32.totalorder %s10, 1
    %p91 = scmp.ne.s32.totalorder %s86, %s88
    %p92 = scmp.eq.s32.totalorder %s10, 0
    %p93 = por %p91, %p92
    %p94 = scmp.ne.s32.totalorder %s86, %s88
    %p95 = scmp.eq.s32.totalorder %s15, 1
    %p96 = por %p94, %p95
    %p97 = scmp.ne.s32.totalorder %s88, %s89
    %p98 = scmp.eq.s32.totalorder %s15, 0
    %p99 = por %p97, %p98
    %p100 = scmp.ne.s32.totalorder %s88, %s89
    %p101 = scmp.eq.s32.totalorder %s16, 1
    %p102 = por %p100, %p101
    %p104 = scmp.ne.s32.totalorder %s89, %s103
    %p105 = scmp.eq.s32.totalorder %s16, 0
    %p106 = por %p104, %p105
    %s107 = ssub.s32 %s10, %s17
    %p108 = scmp.eq.s32.totalorder %s107, 0
    %s110 = sadd.s32 %s109, 1
    %s111 = scalar_select %p108, %s109, %s110
    %p114 = pneg %p108
    %p115 = scmp.eq.s32.totalorder %s10, 1
    %p116 = por %p114, %p115
    %p117 = scmp.ne.s32.totalorder %s109, %s112
    %p118 = scmp.eq.s32.totalorder %s10, 0
    %p119 = por %p117, %p118
    %p120 = scmp.ne.s32.totalorder %s109, %s112
    %p121 = scmp.eq.s32.totalorder %s15, 1
    %p122 = por %p120, %p121
    %p123 = scmp.ne.s32.totalorder %s112, %s113
    %p124 = scmp.eq.s32.totalorder %s15, 0
    %p125 = por %p123, %p124
    %p126 = scmp.ne.s32.totalorder %s112, %s113
    %p127 = scmp.eq.s32.totalorder %s16, 1
    %p128 = por %p126, %p127
    %p130 = scmp.ne.s32.totalorder %s113, %s129
    %p131 = scmp.eq.s32.totalorder %s16, 0
    %p132 = por %p130, %p131
    %p133 = scmp.le.s32.totalorder 1, %s10
    %p134 = scmp.lt.s32.totalorder %s10, 3
    %p135 = pnand %p133, %p134
    %p136 = pneg %p135
    // Predicated region
    $region9: #{mae_forward.7} parent=5 // pred_check
      _
    $region10: #{mae_forward.7} parent=5 // pred_check_branch
      %138 = sbr.rel (%p135) target = $region12
    $region11: #{mae_forward.7} parent=5 // pred_region
      %s139 = ssub.s32 %s10, 1
      // Predicated region
      $region13: #{mae_forward.7} parent=11 // pred_check
        %p140 = pneg %p57
      $region14: #{mae_forward.7} parent=11 // pred_check_branch
        %142 = sbr.rel (%p140) target = $region16
      $region15: #{mae_forward.7} parent=11 // pred_region
        _
      $region16: #{mae_forward.7} parent=11 // pred_fallthru
        _
      // Predicated region
      $region17: #{mae_forward.7} parent=11 // pred_check
        %p143 = pneg %p78
      $region18: #{mae_forward.7} parent=11 // pred_check_branch
        %145 = sbr.rel (%p143) target = $region20
      $region19: #{mae_forward.7} parent=11 // pred_region
        _
      $region20: #{mae_forward.7} parent=11 // pred_fallthru
        _
      // Predicated region
      $region21: #{mae_forward.7} parent=11 // pred_check
        %p146 = pneg %p99
      $region22: #{mae_forward.7} parent=11 // pred_check_branch
        %148 = sbr.rel (%p146) target = $region24
      $region23: #{mae_forward.7} parent=11 // pred_region
        _
      $region24: #{mae_forward.7} parent=11 // pred_fallthru
        _
    $region12: #{mae_forward.7} parent=5 // pred_fallthru
      _
    %p149 = scmp.lt.s32.totalorder %s10, 2
    // Predicated region
    $region25: #{mae_forward.7} parent=5 // pred_check
      %p150 = pneg %p149
    $region26: #{mae_forward.7} parent=5 // pred_check_branch
      %152 = sbr.rel (%p150) target = $region28
    $region27: #{mae_forward.7} parent=5 // pred_region
      // Predicated region
      $region29: #{mae_forward.7} parent=27 // pred_check
        %p153 = pneg %p30
      $region30: #{mae_forward.7} parent=27 // pred_check_branch
        %155 = sbr.rel (%p153) target = $region32
      $region31: #{mae_forward.7} parent=27 // pred_region
        %p156 = scmp.lt.s32.totalorder %s10, 1
        %s157 = scalar_select %p156, %s10, 1
        %s158 = smul.addr %s157, 3
        %s159 = smul.addr %s158, 8
        %s160 = scalar_lea.vmem %s0, %s159
      $region32: #{mae_forward.7} parent=27 // pred_fallthru
        _
    $region28: #{mae_forward.7} parent=5 // pred_fallthru
      _
    %p161 = scmp.le.s32.totalorder 1, %s10
    %p162 = scmp.lt.s32.totalorder %s10, 3
    %p163 = pnand %p161, %p162
    %p164 = pneg %p163
    // Predicated region
    $region33: #{mae_forward.7} parent=5 // pred_check
      _
    $region34: #{mae_forward.7} parent=5 // pred_check_branch
      %166 = sbr.rel (%p163) target = $region36
    $region35: #{mae_forward.7} parent=5 // pred_region
      %s167 = ssub.s32 %s10, 1
      %p168 = scmp.lt.s32.totalorder %s15, 1
      %s169 = scalar_select %p168, %s15, 1
      %s170 = smul.addr %s169, 3
      %s171 = smul.addr %s170, 8
      %s172 = scalar_lea.vmem %s0, %s171
      %p173 = pneg %p36
      %p174 = pneg %p33
      %p175 = pneg %p57
      %p176 = pneg %p54
      %p177 = pneg %p78
      %p178 = pneg %p75
      %p179 = pneg %p99
      %p180 = pneg %p96
      %p181 = pneg %p125
      %p182 = pneg %p122
      %p183 = scmp.lt.s32.totalorder %s15, 1
      %s184 = scalar_select %p183, %s15, 1
      %s185 = smul.addr %s184, 8
      %s186 = scalar_lea.vmem %s4, %s185
      %p187 = scmp.lt.s32.totalorder %s15, 1
      %s188 = scalar_select %p187, %s15, 1
      %s189 = smul.addr %s188, 3
      %s190 = smul.addr %s189, 8
      %s191 = scalar_lea.vmem %s0, %s190
      %p192 = scmp.lt.s32.totalorder %s15, 1
      %s193 = scalar_select %p192, %s15, 1
      %s194 = smul.addr %s193, 8
      %s195 = scalar_lea.vmem %s4, %s194
      %v196 = vld [vmem:[%s191] sm:$0xff]
      %v197 = vld [vmem:[%s191 + $0x8] sm:$0xff]
      %v198 = vld [vmem:[%s191 + $0x10] sm:$0xff]
      %v199 = vpack.c.bf16 %v196, %v196
      %v200 = vpack.c.bf16 %v197, %v197
      %v201 = vpack.c.bf16 %v198, %v198
      %v202 = vld [vmem:[%s1] sm:$0xf]
      %v203 = vld [vmem:[%s1 + $0x4] sm:$0xf]
      %v204 = vld [vmem:[%s1 + $0x8] sm:$0xf]
      %v205 = vld [vmem:[%s1 + $0xc] sm:$0xf]
      %v206 = vld [vmem:[%s1 + $0x10] sm:$0xf]
      %v207 = vld [vmem:[%s1 + $0x14] sm:$0xf]
      %v208 = vld [vmem:[%s1 + $0x18] sm:$0xf]
      %v209 = vld [vmem:[%s1 + $0x1c] sm:$0xf]
      %v210 = vld [vmem:[%s1 + $0x20] sm:$0xf]
      %v211 = vld [vmem:[%s1 + $0x24] sm:$0xf]
      %v212 = vld [vmem:[%s1 + $0x28] sm:$0xf]
      %v213 = vld [vmem:[%s1 + $0x2c] sm:$0xf]
      %v214 = vld [vmem:[%s1 + $0x30] sm:$0xf]
      %v215 = vld [vmem:[%s1 + $0x34] sm:$0xf]
      %v216 = vld [vmem:[%s1 + $0x38] sm:$0xf]
      %v217 = vld [vmem:[%s1 + $0x3c] sm:$0xf]
      %v218 = vld [vmem:[%s1 + $0x40] sm:$0xf]
      %v219 = vld [vmem:[%s1 + $0x44] sm:$0xf]
      %v220 = vld [vmem:[%s1 + $0x48] sm:$0xf]
      %v221 = vld [vmem:[%s1 + $0x4c] sm:$0xf]
      %v222 = vld [vmem:[%s1 + $0x50] sm:$0xf]
      %v223 = vld [vmem:[%s1 + $0x54] sm:$0xf]
      %v224 = vld [vmem:[%s1 + $0x58] sm:$0xf]
      %v225 = vld [vmem:[%s1 + $0x5c] sm:$0xf]
      %v226 = vld [vmem:[%s1 + $0x60] sm:$0xf]
      %v227 = vld [vmem:[%s1 + $0x64] sm:$0xf]
      %v228 = vld [vmem:[%s1 + $0x68] sm:$0xf]
      %v229 = vld [vmem:[%s1 + $0x6c] sm:$0xf]
      %v230 = vld [vmem:[%s1 + $0x70] sm:$0xf]
      %v231 = vld [vmem:[%s1 + $0x74] sm:$0xf]
      %v232 = vld [vmem:[%s1 + $0x78] sm:$0xf]
      %v233 = vld [vmem:[%s1 + $0x7c] sm:$0xf]
      %v234 = vld [vmem:[%s1 + $0x80] sm:$0xf]
      %v235 = vld [vmem:[%s1 + $0x84] sm:$0xf]
      %v236 = vld [vmem:[%s1 + $0x88] sm:$0xf]
      %v237 = vld [vmem:[%s1 + $0x8c] sm:$0xf]
      %v238 = vld [vmem:[%s1 + $0x90] sm:$0xf]
      %v239 = vld [vmem:[%s1 + $0x94] sm:$0xf]
      %v240 = vld [vmem:[%s1 + $0x98] sm:$0xf]
      %v241 = vld [vmem:[%s1 + $0x9c] sm:$0xf]
      %v242 = vld [vmem:[%s1 + $0xa0] sm:$0xf]
      %v243 = vld [vmem:[%s1 + $0xa4] sm:$0xf]
      %v244 = vld [vmem:[%s1 + $0xa8] sm:$0xf]
      %v245 = vld [vmem:[%s1 + $0xac] sm:$0xf]
      %v246 = vld [vmem:[%s1 + $0xb0] sm:$0xf]
      %v247 = vld [vmem:[%s1 + $0xb4] sm:$0xf]
      %v248 = vld [vmem:[%s1 + $0xb8] sm:$0xf]
      %v249 = vld [vmem:[%s1 + $0xbc] sm:$0xf]
      %v250 = vld [vmem:[%s2] sm:$0x1]
      %v252 = vperm.slane %v250, 0
      %v302 = vunpack.c.l.b16 %v202
      %v303 = vunpack.c.l.b16 %v203
      %v304 = vunpack.c.l.b16 %v204
      %v305 = vunpack.c.l.b16 %v205
      %v306 = vunpack.c.l.b16 %v206
      %v307 = vunpack.c.l.b16 %v207
      %v308 = vunpack.c.l.b16 %v208
      %v309 = vunpack.c.l.b16 %v209
      %v310 = vunpack.c.l.b16 %v210
      %v311 = vunpack.c.l.b16 %v211
      %v312 = vunpack.c.l.b16 %v212
      %v313 = vunpack.c.l.b16 %v213
      %v314 = vunpack.c.l.b16 %v214
      %v315 = vunpack.c.l.b16 %v215
      %v316 = vunpack.c.l.b16 %v216
      %v317 = vunpack.c.l.b16 %v217
      %v318 = vunpack.c.l.b16 %v218
      %v319 = vunpack.c.l.b16 %v219
      %v320 = vunpack.c.l.b16 %v220
      %v321 = vunpack.c.l.b16 %v221
      %v322 = vunpack.c.l.b16 %v222
      %v323 = vunpack.c.l.b16 %v223
      %v324 = vunpack.c.l.b16 %v224
      %v325 = vunpack.c.l.b16 %v225
      %v326 = vunpack.c.l.b16 %v226
      %v327 = vunpack.c.l.b16 %v227
      %v328 = vunpack.c.l.b16 %v228
      %v329 = vunpack.c.l.b16 %v229
      %v330 = vunpack.c.l.b16 %v230
      %v331 = vunpack.c.l.b16 %v231
      %v332 = vunpack.c.l.b16 %v232
      %v333 = vunpack.c.l.b16 %v233
      %v334 = vunpack.c.l.b16 %v234
      %v335 = vunpack.c.l.b16 %v235
      %v336 = vunpack.c.l.b16 %v236
      %v337 = vunpack.c.l.b16 %v237
      %v338 = vunpack.c.l.b16 %v238
      %v339 = vunpack.c.l.b16 %v239
      %v340 = vunpack.c.l.b16 %v240
      %v341 = vunpack.c.l.b16 %v241
      %v342 = vunpack.c.l.b16 %v242
      %v343 = vunpack.c.l.b16 %v243
      %v344 = vunpack.c.l.b16 %v244
      %v345 = vunpack.c.l.b16 %v245
      %v346 = vunpack.c.l.b16 %v246
      %v347 = vunpack.c.l.b16 %v247
      %v348 = vunpack.c.l.b16 %v248
      %v349 = vunpack.c.l.b16 %v249
      %v350 = vpack.c.b16 %v303, %v302
      %v351 = vpack.c.b16 %v305, %v304
      %v352 = vpack.c.b16 %v307, %v306
      %v353 = vpack.c.b16 %v309, %v308
      %v354 = vpack.c.b16 %v311, %v310
      %v355 = vpack.c.b16 %v313, %v312
      %v356 = vpack.c.b16 %v315, %v314
      %v357 = vpack.c.b16 %v317, %v316
      %v358 = vpack.c.b16 %v319, %v318
      %v359 = vpack.c.b16 %v321, %v320
      %v360 = vpack.c.b16 %v323, %v322
      %v361 = vpack.c.b16 %v325, %v324
      %v362 = vpack.c.b16 %v327, %v326
      %v363 = vpack.c.b16 %v329, %v328
      %v364 = vpack.c.b16 %v331, %v330
      %v365 = vpack.c.b16 %v333, %v332
      %v366 = vpack.c.b16 %v335, %v334
      %v367 = vpack.c.b16 %v337, %v336
      %v368 = vpack.c.b16 %v339, %v338
      %v369 = vpack.c.b16 %v341, %v340
      %v370 = vpack.c.b16 %v343, %v342
      %v371 = vpack.c.b16 %v345, %v344
      %v372 = vpack.c.b16 %v347, %v346
      %v373 = vpack.c.b16 %v349, %v348
      %398 = vmatpush.bf16.msra.mxu0 %v357
      %399 = vmatpush.bf16.msra.mxu0 %v356
      %400 = vmatpush.bf16.msra.mxu0 %v355
      %401 = vmatpush.bf16.msra.mxu0 %v354
      %402 = vmatpush.bf16.msra.mxu0 %v353
      %403 = vmatpush.bf16.msra.mxu0 %v352
      %404 = vmatpush.bf16.msra.mxu0 %v351
      %405 = vmatpush.bf16.msra.mxu0 %v350
      %406 = vmatmul.bf16.gmra.mxu0 %v199
      %v407 = vpop.f32.mrf.mxu0
      %v408 = vadd.f32 %v252, %v407
      %v409 = vpop.f32.mrf.mxu0
      %410 = vdwg.mxu0
      %411 = vmatpush.bf16.msra.mxu0 %v365
      %412 = vmatpush.bf16.msra.mxu0 %v364
      %413 = vmatpush.bf16.msra.mxu0 %v363
      %414 = vmatpush.bf16.msra.mxu0 %v362
      %415 = vmatpush.bf16.msra.mxu0 %v361
      %416 = vmatpush.bf16.msra.mxu0 %v360
      %417 = vmatpush.bf16.msra.mxu0 %v359
      %418 = vmatpush.bf16.msra.mxu0 %v358
      %419 = vmatmul.bf16.gmra.mxu0 %v200
      %v420 = vpop.f32.mrf.mxu0
      %v421 = vadd.f32 %v408, %v420
      %v422 = vpop.f32.mrf.mxu0
      %423 = vdwg.mxu0
      %424 = vmatpush.bf16.msra.mxu0 %v373
      %425 = vmatpush.bf16.msra.mxu0 %v372
      %426 = vmatpush.bf16.msra.mxu0 %v371
      %427 = vmatpush.bf16.msra.mxu0 %v370
      %428 = vmatpush.bf16.msra.mxu0 %v369
      %429 = vmatpush.bf16.msra.mxu0 %v368
      %430 = vmatpush.bf16.msra.mxu0 %v367
      %431 = vmatpush.bf16.msra.mxu0 %v366
      %432 = vmatmul.bf16.gmra.mxu0 %v201
      %v433 = vpop.f32.mrf.mxu0
      %v434 = vadd.f32 %v421, %v433
      %v435 = vpop.f32.mrf.mxu0
      %436 = vdwg.mxu0
      %v437 = vld [vmem:[%s3] sm:$0xff]
      %v438 = vadd.f32 %v434, %v437
      %vm439 = vcmask 261120
      %440 = vst.msk [vmem:[%s195] sm:$0xff] %vm439, %v438
      %p441 = scmp.lt.s32.totalorder %s15, 1
      %s442 = scalar_select %p441, %s15, 1
      %s443 = smul.addr %s442, 8
      %s444 = scalar_lea.vmem %s4, %s443
      // Predicated region
      $region37: #{mae_forward.7} parent=35 // pred_check
        %p445 = pneg %p122
      $region38: #{mae_forward.7} parent=35 // pred_check_branch
        %447 = sbr.rel (%p445) target = $region40
      $region39: #{mae_forward.7} parent=35 // pred_region
        _
      $region40: #{mae_forward.7} parent=35 // pred_fallthru
        _
    $region36: #{mae_forward.7} parent=5 // pred_fallthru
      _
    %p448 = scmp.le.s32.totalorder 2, %s10
    // Predicated region
    $region41: #{mae_forward.7} parent=5 // pred_check
      %p449 = pneg %p448
    $region42: #{mae_forward.7} parent=5 // pred_check_branch
      %451 = sbr.rel (%p449) target = $region44
    $region43: #{mae_forward.7} parent=5 // pred_region
      %s452 = ssub.s32 %s10, 2
      // Predicated region
      $region45: #{mae_forward.7} parent=43 // pred_check
        %p453 = pneg %p128
      $region46: #{mae_forward.7} parent=43 // pred_check_branch
        %455 = sbr.rel (%p453) target = $region48
      $region47: #{mae_forward.7} parent=43 // pred_region
        %p456 = scmp.lt.s32.totalorder %s16, 1
        %s457 = scalar_select %p456, %s16, 1
        %s458 = smul.addr %s457, 8
        %s459 = scalar_lea.vmem %s4, %s458
      $region48: #{mae_forward.7} parent=43 // pred_fallthru
        _
    $region44: #{mae_forward.7} parent=5 // pred_fallthru
      _
  $region6: #{mae_forward.7} parent=0 // loop_footer
    %s14 = sadd.s32 1, %s10
  $region7: #{mae_forward.7} parent=0 // loop_footer_branch
    %9 = sbr.rel target = $region3
  $region8: #{mae_forward.7} parent=0 // loop_exit
    _

// kernel: mae_forward.10
$region0: #{mae_forward.10}
  #allocation0 [shape = 'u32[]', space=smem, size = 0x4, offset = 0x4, fixed_abs, tag = 'smem constant byte address 0x4 - core index']
  #allocation1 [shape = 'u32[72,128]{1,0:T(1,128)}', space=vmem, size = 0x9000, scoped, tag = 'internal scratch']
  %s0 = inlined_call_operand.vmem [shape: f32[2,2,32], index: 0, kind: input, shape index: {}]
  %s1 = inlined_call_operand.vmem [shape: f32[1,32], index: 1, kind: input, shape index: {}]
  %s2 = inlined_call_operand.vmem [shape: f32[1,32], index: 2, kind: input, shape index: {}]
  %s3 = inlined_call_operand.vmem [shape: bf16[32,16], index: 3, kind: input, shape index: {}]
  %s4 = inlined_call_operand.vmem [shape: f32[1,16], index: 4, kind: input, shape index: {}]
  %s5 = inlined_call_operand.vmem [shape: f32[2,2,16], index: 5, kind: output, shape index: {}]
  %s6 = sld [smem:[#allocation0]]
  $region53: #{mae_forward.10} parent=0
    _
  %s8 = ssub.s32 1, %s6
  %s9 = scalar_select 0, %s8, %s6
  loop: start=0, step=1, limit=4
  $region2: #{mae_forward.10} parent=0 // loop_pre_header
    _
  $region3: #{mae_forward.10} parent=0 // loop_header
    %s11 = sphi 0, %s15
    %p12 = scmp.ge.s32.totalorder %s11, 4
    %s21 = sphi 0, %s23
    %s24 = sphi 0, %s21
    %s25 = sphi 0, %s24
    %s41 = sphi 0, %s25
    %s45 = sphi 0, %s45
    %s47 = sphi 0, %s45
    %s48 = sphi 0, %s47
    %s62 = sphi 0, %s48
    %s66 = sphi 0, %s66
    %s68 = sphi 0, %s66
    %s69 = sphi 0, %s68
    %s83 = sphi 0, %s69
    %s87 = sphi 0, %s87
    %s89 = sphi 0, %s87
    %s90 = sphi 0, %s89
    %s104 = sphi 0, %s90
    %s108 = sphi 0, %s108
    %s110 = sphi 0, %s108
    %s111 = sphi 0, %s110
    %s125 = sphi 0, %s111
    %s131 = sphi 0, %s133
    %s134 = sphi 0, %s131
    %s135 = sphi 0, %s134
    %s151 = sphi 0, %s135
  $region4: #{mae_forward.10} parent=0 // loop_header_branch
    %14 = sbr.rel (%p12) target = $region8
  $region5: #{mae_forward.10} parent=0 // loop_body
    %s16 = ssub.s32 %s11, 1
    %s17 = ssub.s32 %s11, 2
    %s18 = sadd.s32 %s11, 1
    %s19 = ssub.s32 %s11, %s18
    %p20 = scmp.eq.s32.totalorder %s19, 0
    %s22 = sadd.s32 %s21, 1
    %s23 = scalar_select %p20, %s21, %s22
    %p26 = pneg %p20
    %p27 = scmp.eq.s32.totalorder %s11, 1
    %p28 = por %p26, %p27
    %p29 = scmp.ne.s32.totalorder %s21, %s24
    %p30 = scmp.eq.s32.totalorder %s11, 0
    %p31 = por %p29, %p30
    %p32 = scmp.ne.s32.totalorder %s21, %s24
    %p33 = scmp.eq.s32.totalorder %s16, 1
    %p34 = por %p32, %p33
    %p35 = scmp.ne.s32.totalorder %s24, %s25
    %p36 = scmp.eq.s32.totalorder %s16, 0
    %p37 = por %p35, %p36
    %p38 = scmp.ne.s32.totalorder %s24, %s25
    %p39 = scmp.eq.s32.totalorder %s17, 1
    %p40 = por %p38, %p39
    %p42 = scmp.ne.s32.totalorder %s25, %s41
    %p43 = scmp.eq.s32.totalorder %s17, 0
    %p44 = por %p42, %p43
    %s46 = sadd.s32 %s45, 1
    %p49 = scmp.eq.s32.totalorder %s11, 1
    %p50 = scmp.ne.s32.totalorder %s45, %s47
    %p51 = scmp.eq.s32.totalorder %s11, 0
    %p52 = por %p50, %p51
    %p53 = scmp.ne.s32.totalorder %s45, %s47
    %p54 = scmp.eq.s32.totalorder %s16, 1
    %p55 = por %p53, %p54
    %p56 = scmp.ne.s32.totalorder %s47, %s48
    %p57 = scmp.eq.s32.totalorder %s16, 0
    %p58 = por %p56, %p57
    %p59 = scmp.ne.s32.totalorder %s47, %s48
    %p60 = scmp.eq.s32.totalorder %s17, 1
    %p61 = por %p59, %p60
    %p63 = scmp.ne.s32.totalorder %s48, %s62
    %p64 = scmp.eq.s32.totalorder %s17, 0
    %p65 = por %p63, %p64
    %s67 = sadd.s32 %s66, 1
    %p70 = scmp.eq.s32.totalorder %s11, 1
    %p71 = scmp.ne.s32.totalorder %s66, %s68
    %p72 = scmp.eq.s32.totalorder %s11, 0
    %p73 = por %p71, %p72
    %p74 = scmp.ne.s32.totalorder %s66, %s68
    %p75 = scmp.eq.s32.totalorder %s16, 1
    %p76 = por %p74, %p75
    %p77 = scmp.ne.s32.totalorder %s68, %s69
    %p78 = scmp.eq.s32.totalorder %s16, 0
    %p79 = por %p77, %p78
    %p80 = scmp.ne.s32.totalorder %s68, %s69
    %p81 = scmp.eq.s32.totalorder %s17, 1
    %p82 = por %p80, %p81
    %p84 = scmp.ne.s32.totalorder %s69, %s83
    %p85 = scmp.eq.s32.totalorder %s17, 0
    %p86 = por %p84, %p85
    %s88 = sadd.s32 %s87, 1
    %p91 = scmp.eq.s32.totalorder %s11, 1
    %p92 = scmp.ne.s32.totalorder %s87, %s89
    %p93 = scmp.eq.s32.totalorder %s11, 0
    %p94 = por %p92, %p93
    %p95 = scmp.ne.s32.totalorder %s87, %s89
    %p96 = scmp.eq.s32.totalorder %s16, 1
    %p97 = por %p95, %p96
    %p98 = scmp.ne.s32.totalorder %s89, %s90
    %p99 = scmp.eq.s32.totalorder %s16, 0
    %p100 = por %p98, %p99
    %p101 = scmp.ne.s32.totalorder %s89, %s90
    %p102 = scmp.eq.s32.totalorder %s17, 1
    %p103 = por %p101, %p102
    %p105 = scmp.ne.s32.totalorder %s90, %s104
    %p106 = scmp.eq.s32.totalorder %s17, 0
    %p107 = por %p105, %p106
    %s109 = sadd.s32 %s108, 1
    %p112 = scmp.eq.s32.totalorder %s11, 1
    %p113 = scmp.ne.s32.totalorder %s108, %s110
    %p114 = scmp.eq.s32.totalorder %s11, 0
    %p115 = por %p113, %p114
    %p116 = scmp.ne.s32.totalorder %s108, %s110
    %p117 = scmp.eq.s32.totalorder %s16, 1
    %p118 = por %p116, %p117
    %p119 = scmp.ne.s32.totalorder %s110, %s111
    %p120 = scmp.eq.s32.totalorder %s16, 0
    %p121 = por %p119, %p120
    %p122 = scmp.ne.s32.totalorder %s110, %s111
    %p123 = scmp.eq.s32.totalorder %s17, 1
    %p124 = por %p122, %p123
    %p126 = scmp.ne.s32.totalorder %s111, %s125
    %p127 = scmp.eq.s32.totalorder %s17, 0
    %p128 = por %p126, %p127
    %s129 = ssub.s32 %s11, %s18
    %p130 = scmp.eq.s32.totalorder %s129, 0
    %s132 = sadd.s32 %s131, 1
    %s133 = scalar_select %p130, %s131, %s132
    %p136 = pneg %p130
    %p137 = scmp.eq.s32.totalorder %s11, 1
    %p138 = por %p136, %p137
    %p139 = scmp.ne.s32.totalorder %s131, %s134
    %p140 = scmp.eq.s32.totalorder %s11, 0
    %p141 = por %p139, %p140
    %p142 = scmp.ne.s32.totalorder %s131, %s134
    %p143 = scmp.eq.s32.totalorder %s16, 1
    %p144 = por %p142, %p143
    %p145 = scmp.ne.s32.totalorder %s134, %s135
    %p146 = scmp.eq.s32.totalorder %s16, 0
    %p147 = por %p145, %p146
    %p148 = scmp.ne.s32.totalorder %s134, %s135
    %p149 = scmp.eq.s32.totalorder %s17, 1
    %p150 = por %p148, %p149
    %p152 = scmp.ne.s32.totalorder %s135, %s151
    %p153 = scmp.eq.s32.totalorder %s17, 0
    %p154 = por %p152, %p153
    %p155 = scmp.le.s32.totalorder 1, %s11
    %p156 = scmp.lt.s32.totalorder %s11, 3
    %p157 = pnand %p155, %p156
    %p158 = pneg %p157
    // Predicated region
    $region9: #{mae_forward.10} parent=5 // pred_check
      _
    $region10: #{mae_forward.10} parent=5 // pred_check_branch
      %160 = sbr.rel (%p157) target = $region12
    $region11: #{mae_forward.10} parent=5 // pred_region
      %s161 = ssub.s32 %s11, 1
      // Predicated region
      $region13: #{mae_forward.10} parent=11 // pred_check
        %p162 = pneg %p58
      $region14: #{mae_forward.10} parent=11 // pred_check_branch
        %164 = sbr.rel (%p162) target = $region16
      $region15: #{mae_forward.10} parent=11 // pred_region
        _
      $region16: #{mae_forward.10} parent=11 // pred_fallthru
        _
      // Predicated region
      $region17: #{mae_forward.10} parent=11 // pred_check
        %p165 = pneg %p79
      $region18: #{mae_forward.10} parent=11 // pred_check_branch
        %167 = sbr.rel (%p165) target = $region20
      $region19: #{mae_forward.10} parent=11 // pred_region
        _
      $region20: #{mae_forward.10} parent=11 // pred_fallthru
        _
      // Predicated region
      $region21: #{mae_forward.10} parent=11 // pred_check
        %p168 = pneg %p100
      $region22: #{mae_forward.10} parent=11 // pred_check_branch
        %170 = sbr.rel (%p168) target = $region24
      $region23: #{mae_forward.10} parent=11 // pred_region
        _
      $region24: #{mae_forward.10} parent=11 // pred_fallthru
        _
      // Predicated region
      $region25: #{mae_forward.10} parent=11 // pred_check
        %p171 = pneg %p121
      $region26: #{mae_forward.10} parent=11 // pred_check_branch
        %173 = sbr.rel (%p171) target = $region28
      $region27: #{mae_forward.10} parent=11 // pred_region
        _
      $region28: #{mae_forward.10} parent=11 // pred_fallthru
        _
    $region12: #{mae_forward.10} parent=5 // pred_fallthru
      _
    %p174 = scmp.lt.s32.totalorder %s11, 2
    // Predicated region
    $region29: #{mae_forward.10} parent=5 // pred_check
      %p175 = pneg %p174
    $region30: #{mae_forward.10} parent=5 // pred_check_branch
      %177 = sbr.rel (%p175) target = $region32
    $region31: #{mae_forward.10} parent=5 // pred_region
      // Predicated region
      $region33: #{mae_forward.10} parent=31 // pred_check
        %p178 = pneg %p31
      $region34: #{mae_forward.10} parent=31 // pred_check_branch
        %180 = sbr.rel (%p178) target = $region36
      $region35: #{mae_forward.10} parent=31 // pred_region
        %p181 = scmp.lt.s32.totalorder %s11, 1
        %s182 = scalar_select %p181, %s11, 1
        %s183 = smul.addr %s182, 2
        %s184 = scalar_lea.vmem %s0, %s183
      $region36: #{mae_forward.10} parent=31 // pred_fallthru
        _
    $region32: #{mae_forward.10} parent=5 // pred_fallthru
      _
    %p185 = scmp.le.s32.totalorder 1, %s11
    %p186 = scmp.lt.s32.totalorder %s11, 3
    %p187 = pnand %p185, %p186
    %p188 = pneg %p187
    // Predicated region
    $region37: #{mae_forward.10} parent=5 // pred_check
      _
    $region38: #{mae_forward.10} parent=5 // pred_check_branch
      %190 = sbr.rel (%p187) target = $region40
    $region39: #{mae_forward.10} parent=5 // pred_region
      %s191 = ssub.s32 %s11, 1
      %p192 = scmp.lt.s32.totalorder %s16, 1
      %s193 = scalar_select %p192, %s16, 1
      %s194 = smul.addr %s193, 2
      %s195 = scalar_lea.vmem %s0, %s194
      %p196 = pneg %p37
      %p197 = pneg %p34
      %p198 = pneg %p58
      %p199 = pneg %p55
      %p200 = pneg %p79
      %p201 = pneg %p76
      %p202 = pneg %p100
      %p203 = pneg %p97
      %p204 = pneg %p121
      %p205 = pneg %p118
      %p206 = pneg %p147
      %p207 = pneg %p144
      %p208 = scmp.lt.s32.totalorder %s16, 1
      %s209 = scalar_select %p208, %s16, 1
      %s210 = smul.addr %s209, 2
      %s211 = scalar_lea.vmem %s5, %s210
      %p212 = scmp.lt.s32.totalorder %s16, 1
      %s213 = scalar_select %p212, %s16, 1
      %s214 = smul.addr %s213, 2
      %s215 = scalar_lea.vmem %s0, %s214
      %p216 = scmp.lt.s32.totalorder %s16, 1
      %s217 = scalar_select %p216, %s16, 1
      %s218 = smul.addr %s217, 2
      %s219 = scalar_lea.vmem %s5, %s218
      %v221 = vld [vmem:[%s215] sm:$0x3]
      %v222 = vld [vmem:[%s1] sm:$0x1]
      %v223 = vld [vmem:[%s2] sm:$0x1]
      %vm224 = vcmask 254976
      %v225 = vsel %vm224, %v221, 0.0
      %226 = vadd.xlane.f32.xlu0 %v225
      %v227 = vpop.xlane.xlu0 %226
      %v228 = vrcp.pop 32.0
      %v229 = vmul.f32 32.0, %v228
      %v230 = vsub.f32 1.0, %v229
      %v231 = vmul.f32 %v228, %v230
      %v232 = vadd.f32 %v228, %v231
      %vm233 = vweird.f32 %v228
      %v234 = vsel %vm233, %v228, %v232
      %v235 = vmul.f32 %v227, %v234
      %v236 = vsub.f32 %v221, %v235
      %v237 = vmul.f32 %v236, %v236
      %v238 = vsel %vm224, %v237, 0.0
      %239 = vadd.xlane.f32.xlu0 %v238
      %v240 = vpop.xlane.xlu0 %239
      %v241 = vmul.f32 %v240, %v234
      %v242 = vadd.f32 %v241, 1e-05
      %v243 = vrsqrt.pop %v242
      %v244 = vmul.f32 %v243, %v242
      %v245 = vmul.f32 %v244, %v243
      %v246 = vmul.f32 0.5, %v245
      %v247 = vsub.f32 1.5, %v246
      %v248 = vmul.f32 %v243, %v247
      %vm249 = vweird.f32 %v242
      %vm250 = vweird.f32 %v243
      %vm251 = vmor %vm249, %vm250
      %v252 = vsel %vm251, %v243, %v248
      %v253 = vmul.f32 %v236, %v252
      %v255 = vperm.slane %v222, 0
      %v257 = vmul.f32 %v253, %v255
      %v259 = vperm.slane %v223, 0
      %v261 = vadd.f32 %v257, %v259
      %v262 = vpack.c.bf16 %v261, %v261
      %v263 = vld [vmem:[%s3] sm:$0xf]
      %v264 = vld [vmem:[%s3 + $0x4] sm:$0xf]
      %v265 = vld [vmem:[%s3 + $0x8] sm:$0xf]
      %v266 = vld [vmem:[%s3 + $0xc] sm:$0xf]
      %v267 = vld [vmem:[%s4] sm:$0x1]
      %v269 = vperm.slane %v267, 0
      %v275 = vunpack.c.l.b16 %v263
      %v276 = vunpack.c.l.b16 %v264
      %v277 = vunpack.c.l.b16 %v265
      %v278 = vunpack.c.l.b16 %v266
      %v279 = vpack.c.b16 %v276, %v275
      %v280 = vpack.c.b16 %v278, %v277
      %vm283 = vcmask 261120
      %v285 = vsel %vm283, %v262, 0
      %287 = vmatpush.bf16.msra.mxu0 0
      %288 = vmatpush.bf16.msra.mxu0 0
      %289 = vmatpush.bf16.msra.mxu0 0
      %290 = vmatpush.bf16.msra.mxu0 0
      %291 = vmatpush.bf16.msra.mxu0 0
      %292 = vmatpush.bf16.msra.mxu0 0
      %293 = vmatpush.bf16.msra.mxu0 %v280
      %294 = vmatpush.bf16.msra.mxu0 %v279
      %295 = vmatmul.bf16.gmra.mxu0 %v285
      %v296 = vpop.f32.mrf.mxu0
      %v297 = vadd.f32 %v269, %v296
      %v298 = vpop.f32.mrf.mxu0
      %299 = vdwg.mxu0
      %vm300 = vcmask 123904
      %301 = vst.msk [vmem:[%s219] sm:$0x3] %vm300, %v297
      %p302 = scmp.lt.s32.totalorder %s16, 1
      %s303 = scalar_select %p302, %s16, 1
      %s304 = smul.addr %s303, 2
      %s305 = scalar_lea.vmem %s5, %s304
      // Predicated region
      $region41: #{mae_forward.10} parent=39 // pred_check
        %p306 = pneg %p144
      $region42: #{mae_forward.10} parent=39 // pred_check_branch
        %308 = sbr.rel (%p306) target = $region44
      $region43: #{mae_forward.10} parent=39 // pred_region
        _
      $region44: #{mae_forward.10} parent=39 // pred_fallthru
        _
    $region40: #{mae_forward.10} parent=5 // pred_fallthru
      _
    %p309 = scmp.le.s32.totalorder 2, %s11
    // Predicated region
    $region45: #{mae_forward.10} parent=5 // pred_check
      %p310 = pneg %p309
    $region46: #{mae_forward.10} parent=5 // pred_check_branch
      %312 = sbr.rel (%p310) target = $region48
    $region47: #{mae_forward.10} parent=5 // pred_region
      %s313 = ssub.s32 %s11, 2
      // Predicated region
      $region49: #{mae_forward.10} parent=47 // pred_check
        %p314 = pneg %p150
      $region50: #{mae_forward.10} parent=47 // pred_check_branch
        %316 = sbr.rel (%p314) target = $region52
      $region51: #{mae_forward.10} parent=47 // pred_region
        %p317 = scmp.lt.s32.totalorder %s17, 1
        %s318 = scalar_select %p317, %s17, 1
        %s319 = smul.addr %s318, 2
        %s320 = scalar_lea.vmem %s5, %s319
      $region52: #{mae_forward.10} parent=47 // pred_fallthru
        _
    $region48: #{mae_forward.10} parent=5 // pred_fallthru
      _
  $region6: #{mae_forward.10} parent=0 // loop_footer
    %s15 = sadd.s32 1, %s11
  $region7: #{mae_forward.10} parent=0 // loop_footer_branch
    %10 = sbr.rel target = $region3
  $region8: #{mae_forward.10} parent=0 // loop_exit
    _

// kernel: mae_forward.8
$region0: #{mae_forward.8}
  #allocation0 [shape = 'u32[]', space=smem, size = 0x4, offset = 0x4, fixed_abs, tag = 'smem constant byte address 0x4 - core index']
  #allocation1 [shape = 'u32[72,128]{1,0:T(1,128)}', space=vmem, size = 0x9000, scoped, tag = 'internal scratch']
  %s0 = inlined_call_operand.vmem [shape: f32[2,2,32], index: 0, kind: input, shape index: {}]
  %s1 = inlined_call_operand.vmem [shape: f32[1,32], index: 1, kind: input, shape index: {}]
  %s2 = inlined_call_operand.vmem [shape: f32[1,32], index: 2, kind: input, shape index: {}]
  %s3 = inlined_call_operand.vmem [shape: bf16[32,96], index: 3, kind: input, shape index: {}]
  %s4 = inlined_call_operand.vmem [shape: f32[1,96], index: 4, kind: input, shape index: {}]
  %s5 = inlined_call_operand.vmem [shape: bf16[32,32], index: 5, kind: input, shape index: {}]
  %s6 = inlined_call_operand.vmem [shape: f32[1,32], index: 6, kind: input, shape index: {}]
  %s7 = inlined_call_operand.vmem [shape: f32[1,32], index: 7, kind: input, shape index: {}]
  %s8 = inlined_call_operand.vmem [shape: f32[1,32], index: 8, kind: input, shape index: {}]
  %s9 = inlined_call_operand.vmem [shape: bf16[32,128], index: 9, kind: input, shape index: {}]
  %s10 = inlined_call_operand.vmem [shape: f32[1,128], index: 10, kind: input, shape index: {}]
  %s11 = inlined_call_operand.vmem [shape: bf16[128,32], index: 11, kind: input, shape index: {}]
  %s12 = inlined_call_operand.vmem [shape: f32[1,32], index: 12, kind: input, shape index: {}]
  %s13 = inlined_call_operand.vmem [shape: f32[2,2,32], index: 13, kind: output, shape index: {}]
  %s14 = sld [smem:[#allocation0]]
  $region85: #{mae_forward.8} parent=0
    _
  %s16 = ssub.s32 1, %s14
  %s17 = scalar_select 0, %s16, %s14
  loop: start=0, step=1, limit=4
  $region2: #{mae_forward.8} parent=0 // loop_pre_header
    _
  $region3: #{mae_forward.8} parent=0 // loop_header
    %s19 = sphi 0, %s23
    %p20 = scmp.ge.s32.totalorder %s19, 4
    %s29 = sphi 0, %s31
    %s32 = sphi 0, %s29
    %s33 = sphi 0, %s32
    %s49 = sphi 0, %s33
    %s53 = sphi 0, %s53
    %s55 = sphi 0, %s53
    %s56 = sphi 0, %s55
    %s70 = sphi 0, %s56
    %s74 = sphi 0, %s74
    %s76 = sphi 0, %s74
    %s77 = sphi 0, %s76
    %s91 = sphi 0, %s77
    %s95 = sphi 0, %s95
    %s97 = sphi 0, %s95
    %s98 = sphi 0, %s97
    %s112 = sphi 0, %s98
    %s116 = sphi 0, %s116
    %s118 = sphi 0, %s116
    %s119 = sphi 0, %s118
    %s133 = sphi 0, %s119
    %s137 = sphi 0, %s137
    %s139 = sphi 0, %s137
    %s140 = sphi 0, %s139
    %s154 = sphi 0, %s140
    %s158 = sphi 0, %s158
    %s160 = sphi 0, %s158
    %s161 = sphi 0, %s160
    %s175 = sphi 0, %s161
    %s179 = sphi 0, %s179
    %s181 = sphi 0, %s179
    %s182 = sphi 0, %s181
    %s196 = sphi 0, %s182
    %s200 = sphi 0, %s200
    %s202 = sphi 0, %s200
    %s203 = sphi 0, %s202
    %s217 = sphi 0, %s203
    %s221 = sphi 0, %s221
    %s223 = sphi 0, %s221
    %s224 = sphi 0, %s223
    %s238 = sphi 0, %s224
    %s242 = sphi 0, %s242
    %s244 = sphi 0, %s242
    %s245 = sphi 0, %s244
    %s259 = sphi 0, %s245
    %s263 = sphi 0, %s263
    %s265 = sphi 0, %s263
    %s266 = sphi 0, %s265
    %s280 = sphi 0, %s266
    %s284 = sphi 0, %s284
    %s286 = sphi 0, %s284
    %s287 = sphi 0, %s286
    %s301 = sphi 0, %s287
    %s307 = sphi 0, %s309
    %s310 = sphi 0, %s307
    %s311 = sphi 0, %s310
    %s327 = sphi 0, %s311
  $region4: #{mae_forward.8} parent=0 // loop_header_branch
    %22 = sbr.rel (%p20) target = $region8
  $region5: #{mae_forward.8} parent=0 // loop_body
    %s24 = ssub.s32 %s19, 1
    %s25 = ssub.s32 %s19, 2
    %s26 = sadd.s32 %s19, 1
    %s27 = ssub.s32 %s19, %s26
    %p28 = scmp.eq.s32.totalorder %s27, 0
    %s30 = sadd.s32 %s29, 1
    %s31 = scalar_select %p28, %s29, %s30
    %p34 = pneg %p28
    %p35 = scmp.eq.s32.totalorder %s19, 1
    %p36 = por %p34, %p35
    %p37 = scmp.ne.s32.totalorder %s29, %s32
    %p38 = scmp.eq.s32.totalorder %s19, 0
    %p39 = por %p37, %p38
    %p40 = scmp.ne.s32.totalorder %s29, %s32
    %p41 = scmp.eq.s32.totalorder %s24, 1
    %p42 = por %p40, %p41
    %p43 = scmp.ne.s32.totalorder %s32, %s33
    %p44 = scmp.eq.s32.totalorder %s24, 0
    %p45 = por %p43, %p44
    %p46 = scmp.ne.s32.totalorder %s32, %s33
    %p47 = scmp.eq.s32.totalorder %s25, 1
    %p48 = por %p46, %p47
    %p50 = scmp.ne.s32.totalorder %s33, %s49
    %p51 = scmp.eq.s32.totalorder %s25, 0
    %p52 = por %p50, %p51
    %s54 = sadd.s32 %s53, 1
    %p57 = scmp.eq.s32.totalorder %s19, 1
    %p58 = scmp.ne.s32.totalorder %s53, %s55
    %p59 = scmp.eq.s32.totalorder %s19, 0
    %p60 = por %p58, %p59
    %p61 = scmp.ne.s32.totalorder %s53, %s55
    %p62 = scmp.eq.s32.totalorder %s24, 1
    %p63 = por %p61, %p62
    %p64 = scmp.ne.s32.totalorder %s55, %s56
    %p65 = scmp.eq.s32.totalorder %s24, 0
    %p66 = por %p64, %p65
    %p67 = scmp.ne.s32.totalorder %s55, %s56
    %p68 = scmp.eq.s32.totalorder %s25, 1
    %p69 = por %p67, %p68
    %p71 = scmp.ne.s32.totalorder %s56, %s70
    %p72 = scmp.eq.s32.totalorder %s25, 0
    %p73 = por %p71, %p72
    %s75 = sadd.s32 %s74, 1
    %p78 = scmp.eq.s32.totalorder %s19, 1
    %p79 = scmp.ne.s32.totalorder %s74, %s76
    %p80 = scmp.eq.s32.totalorder %s19, 0
    %p81 = por %p79, %p80
    %p82 = scmp.ne.s32.totalorder %s74, %s76
    %p83 = scmp.eq.s32.totalorder %s24, 1
    %p84 = por %p82, %p83
    %p85 = scmp.ne.s32.totalorder %s76, %s77
    %p86 = scmp.eq.s32.totalorder %s24, 0
    %p87 = por %p85, %p86
    %p88 = scmp.ne.s32.totalorder %s76, %s77
    %p89 = scmp.eq.s32.totalorder %s25, 1
    %p90 = por %p88, %p89
    %p92 = scmp.ne.s32.totalorder %s77, %s91
    %p93 = scmp.eq.s32.totalorder %s25, 0
    %p94 = por %p92, %p93
    %s96 = sadd.s32 %s95, 1
    %p99 = scmp.eq.s32.totalorder %s19, 1
    %p100 = scmp.ne.s32.totalorder %s95, %s97
    %p101 = scmp.eq.s32.totalorder %s19, 0
    %p102 = por %p100, %p101
    %p103 = scmp.ne.s32.totalorder %s95, %s97
    %p104 = scmp.eq.s32.totalorder %s24, 1
    %p105 = por %p103, %p104
    %p106 = scmp.ne.s32.totalorder %s97, %s98
    %p107 = scmp.eq.s32.totalorder %s24, 0
    %p108 = por %p106, %p107
    %p109 = scmp.ne.s32.totalorder %s97, %s98
    %p110 = scmp.eq.s32.totalorder %s25, 1
    %p111 = por %p109, %p110
    %p113 = scmp.ne.s32.totalorder %s98, %s112
    %p114 = scmp.eq.s32.totalorder %s25, 0
    %p115 = por %p113, %p114
    %s117 = sadd.s32 %s116, 1
    %p120 = scmp.eq.s32.totalorder %s19, 1
    %p121 = scmp.ne.s32.totalorder %s116, %s118
    %p122 = scmp.eq.s32.totalorder %s19, 0
    %p123 = por %p121, %p122
    %p124 = scmp.ne.s32.totalorder %s116, %s118
    %p125 = scmp.eq.s32.totalorder %s24, 1
    %p126 = por %p124, %p125
    %p127 = scmp.ne.s32.totalorder %s118, %s119
    %p128 = scmp.eq.s32.totalorder %s24, 0
    %p129 = por %p127, %p128
    %p130 = scmp.ne.s32.totalorder %s118, %s119
    %p131 = scmp.eq.s32.totalorder %s25, 1
    %p132 = por %p130, %p131
    %p134 = scmp.ne.s32.totalorder %s119, %s133
    %p135 = scmp.eq.s32.totalorder %s25, 0
    %p136 = por %p134, %p135
    %s138 = sadd.s32 %s137, 1
    %p141 = scmp.eq.s32.totalorder %s19, 1
    %p142 = scmp.ne.s32.totalorder %s137, %s139
    %p143 = scmp.eq.s32.totalorder %s19, 0
    %p144 = por %p142, %p143
    %p145 = scmp.ne.s32.totalorder %s137, %s139
    %p146 = scmp.eq.s32.totalorder %s24, 1
    %p147 = por %p145, %p146
    %p148 = scmp.ne.s32.totalorder %s139, %s140
    %p149 = scmp.eq.s32.totalorder %s24, 0
    %p150 = por %p148, %p149
    %p151 = scmp.ne.s32.totalorder %s139, %s140
    %p152 = scmp.eq.s32.totalorder %s25, 1
    %p153 = por %p151, %p152
    %p155 = scmp.ne.s32.totalorder %s140, %s154
    %p156 = scmp.eq.s32.totalorder %s25, 0
    %p157 = por %p155, %p156
    %s159 = sadd.s32 %s158, 1
    %p162 = scmp.eq.s32.totalorder %s19, 1
    %p163 = scmp.ne.s32.totalorder %s158, %s160
    %p164 = scmp.eq.s32.totalorder %s19, 0
    %p165 = por %p163, %p164
    %p166 = scmp.ne.s32.totalorder %s158, %s160
    %p167 = scmp.eq.s32.totalorder %s24, 1
    %p168 = por %p166, %p167
    %p169 = scmp.ne.s32.totalorder %s160, %s161
    %p170 = scmp.eq.s32.totalorder %s24, 0
    %p171 = por %p169, %p170
    %p172 = scmp.ne.s32.totalorder %s160, %s161
    %p173 = scmp.eq.s32.totalorder %s25, 1
    %p174 = por %p172, %p173
    %p176 = scmp.ne.s32.totalorder %s161, %s175
    %p177 = scmp.eq.s32.totalorder %s25, 0
    %p178 = por %p176, %p177
    %s180 = sadd.s32 %s179, 1
    %p183 = scmp.eq.s32.totalorder %s19, 1
    %p184 = scmp.ne.s32.totalorder %s179, %s181
    %p185 = scmp.eq.s32.totalorder %s19, 0
    %p186 = por %p184, %p185
    %p187 = scmp.ne.s32.totalorder %s179, %s181
    %p188 = scmp.eq.s32.totalorder %s24, 1
    %p189 = por %p187, %p188
    %p190 = scmp.ne.s32.totalorder %s181, %s182
    %p191 = scmp.eq.s32.totalorder %s24, 0
    %p192 = por %p190, %p191
    %p193 = scmp.ne.s32.totalorder %s181, %s182
    %p194 = scmp.eq.s32.totalorder %s25, 1
    %p195 = por %p193, %p194
    %p197 = scmp.ne.s32.totalorder %s182, %s196
    %p198 = scmp.eq.s32.totalorder %s25, 0
    %p199 = por %p197, %p198
    %s201 = sadd.s32 %s200, 1
    %p204 = scmp.eq.s32.totalorder %s19, 1
    %p205 = scmp.ne.s32.totalorder %s200, %s202
    %p206 = scmp.eq.s32.totalorder %s19, 0
    %p207 = por %p205, %p206
    %p208 = scmp.ne.s32.totalorder %s200, %s202
    %p209 = scmp.eq.s32.totalorder %s24, 1
    %p210 = por %p208, %p209
    %p211 = scmp.ne.s32.totalorder %s202, %s203
    %p212 = scmp.eq.s32.totalorder %s24, 0
    %p213 = por %p211, %p212
    %p214 = scmp.ne.s32.totalorder %s202, %s203
    %p215 = scmp.eq.s32.totalorder %s25, 1
    %p216 = por %p214, %p215
    %p218 = scmp.ne.s32.totalorder %s203, %s217
    %p219 = scmp.eq.s32.totalorder %s25, 0
    %p220 = por %p218, %p219
    %s222 = sadd.s32 %s221, 1
    %p225 = scmp.eq.s32.totalorder %s19, 1
    %p226 = scmp.ne.s32.totalorder %s221, %s223
    %p227 = scmp.eq.s32.totalorder %s19, 0
    %p228 = por %p226, %p227
    %p229 = scmp.ne.s32.totalorder %s221, %s223
    %p230 = scmp.eq.s32.totalorder %s24, 1
    %p231 = por %p229, %p230
    %p232 = scmp.ne.s32.totalorder %s223, %s224
    %p233 = scmp.eq.s32.totalorder %s24, 0
    %p234 = por %p232, %p233
    %p235 = scmp.ne.s32.totalorder %s223, %s224
    %p236 = scmp.eq.s32.totalorder %s25, 1
    %p237 = por %p235, %p236
    %p239 = scmp.ne.s32.totalorder %s224, %s238
    %p240 = scmp.eq.s32.totalorder %s25, 0
    %p241 = por %p239, %p240
    %s243 = sadd.s32 %s242, 1
    %p246 = scmp.eq.s32.totalorder %s19, 1
    %p247 = scmp.ne.s32.totalorder %s242, %s244
    %p248 = scmp.eq.s32.totalorder %s19, 0
    %p249 = por %p247, %p248
    %p250 = scmp.ne.s32.totalorder %s242, %s244
    %p251 = scmp.eq.s32.totalorder %s24, 1
    %p252 = por %p250, %p251
    %p253 = scmp.ne.s32.totalorder %s244, %s245
    %p254 = scmp.eq.s32.totalorder %s24, 0
    %p255 = por %p253, %p254
    %p256 = scmp.ne.s32.totalorder %s244, %s245
    %p257 = scmp.eq.s32.totalorder %s25, 1
    %p258 = por %p256, %p257
    %p260 = scmp.ne.s32.totalorder %s245, %s259
    %p261 = scmp.eq.s32.totalorder %s25, 0
    %p262 = por %p260, %p261
    %s264 = sadd.s32 %s263, 1
    %p267 = scmp.eq.s32.totalorder %s19, 1
    %p268 = scmp.ne.s32.totalorder %s263, %s265
    %p269 = scmp.eq.s32.totalorder %s19, 0
    %p270 = por %p268, %p269
    %p271 = scmp.ne.s32.totalorder %s263, %s265
    %p272 = scmp.eq.s32.totalorder %s24, 1
    %p273 = por %p271, %p272
    %p274 = scmp.ne.s32.totalorder %s265, %s266
    %p275 = scmp.eq.s32.totalorder %s24, 0
    %p276 = por %p274, %p275
    %p277 = scmp.ne.s32.totalorder %s265, %s266
    %p278 = scmp.eq.s32.totalorder %s25, 1
    %p279 = por %p277, %p278
    %p281 = scmp.ne.s32.totalorder %s266, %s280
    %p282 = scmp.eq.s32.totalorder %s25, 0
    %p283 = por %p281, %p282
    %s285 = sadd.s32 %s284, 1
    %p288 = scmp.eq.s32.totalorder %s19, 1
    %p289 = scmp.ne.s32.totalorder %s284, %s286
    %p290 = scmp.eq.s32.totalorder %s19, 0
    %p291 = por %p289, %p290
    %p292 = scmp.ne.s32.totalorder %s284, %s286
    %p293 = scmp.eq.s32.totalorder %s24, 1
    %p294 = por %p292, %p293
    %p295 = scmp.ne.s32.totalorder %s286, %s287
    %p296 = scmp.eq.s32.totalorder %s24, 0
    %p297 = por %p295, %p296
    %p298 = scmp.ne.s32.totalorder %s286, %s287
    %p299 = scmp.eq.s32.totalorder %s25, 1
    %p300 = por %p298, %p299
    %p302 = scmp.ne.s32.totalorder %s287, %s301
    %p303 = scmp.eq.s32.totalorder %s25, 0
    %p304 = por %p302, %p303
    %s305 = ssub.s32 %s19, %s26
    %p306 = scmp.eq.s32.totalorder %s305, 0
    %s308 = sadd.s32 %s307, 1
    %s309 = scalar_select %p306, %s307, %s308
    %p312 = pneg %p306
    %p313 = scmp.eq.s32.totalorder %s19, 1
    %p314 = por %p312, %p313
    %p315 = scmp.ne.s32.totalorder %s307, %s310
    %p316 = scmp.eq.s32.totalorder %s19, 0
    %p317 = por %p315, %p316
    %p318 = scmp.ne.s32.totalorder %s307, %s310
    %p319 = scmp.eq.s32.totalorder %s24, 1
    %p320 = por %p318, %p319
    %p321 = scmp.ne.s32.totalorder %s310, %s311
    %p322 = scmp.eq.s32.totalorder %s24, 0
    %p323 = por %p321, %p322
    %p324 = scmp.ne.s32.totalorder %s310, %s311
    %p325 = scmp.eq.s32.totalorder %s25, 1
    %p326 = por %p324, %p325
    %p328 = scmp.ne.s32.totalorder %s311, %s327
    %p329 = scmp.eq.s32.totalorder %s25, 0
    %p330 = por %p328, %p329
    %p331 = scmp.le.s32.totalorder 1, %s19
    %p332 = scmp.lt.s32.totalorder %s19, 3
    %p333 = pnand %p331, %p332
    %p334 = pneg %p333
    // Predicated region
    $region9: #{mae_forward.8} parent=5 // pred_check
      _
    $region10: #{mae_forward.8} parent=5 // pred_check_branch
      %336 = sbr.rel (%p333) target = $region12
    $region11: #{mae_forward.8} parent=5 // pred_region
      %s337 = ssub.s32 %s19, 1
      // Predicated region
      $region13: #{mae_forward.8} parent=11 // pred_check
        %p338 = pneg %p66
      $region14: #{mae_forward.8} parent=11 // pred_check_branch
        %340 = sbr.rel (%p338) target = $region16
      $region15: #{mae_forward.8} parent=11 // pred_region
        _
      $region16: #{mae_forward.8} parent=11 // pred_fallthru
        _
      // Predicated region
      $region17: #{mae_forward.8} parent=11 // pred_check
        %p341 = pneg %p87
      $region18: #{mae_forward.8} parent=11 // pred_check_branch
        %343 = sbr.rel (%p341) target = $region20
      $region19: #{mae_forward.8} parent=11 // pred_region
        _
      $region20: #{mae_forward.8} parent=11 // pred_fallthru
        _
      // Predicated region
      $region21: #{mae_forward.8} parent=11 // pred_check
        %p344 = pneg %p108
      $region22: #{mae_forward.8} parent=11 // pred_check_branch
        %346 = sbr.rel (%p344) target = $region24
      $region23: #{mae_forward.8} parent=11 // pred_region
        _
      $region24: #{mae_forward.8} parent=11 // pred_fallthru
        _
      // Predicated region
      $region25: #{mae_forward.8} parent=11 // pred_check
        %p347 = pneg %p129
      $region26: #{mae_forward.8} parent=11 // pred_check_branch
        %349 = sbr.rel (%p347) target = $region28
      $region27: #{mae_forward.8} parent=11 // pred_region
        _
      $region28: #{mae_forward.8} parent=11 // pred_fallthru
        _
      // Predicated region
      $region29: #{mae_forward.8} parent=11 // pred_check
        %p350 = pneg %p150
      $region30: #{mae_forward.8} parent=11 // pred_check_branch
        %352 = sbr.rel (%p350) target = $region32
      $region31: #{mae_forward.8} parent=11 // pred_region
        _
      $region32: #{mae_forward.8} parent=11 // pred_fallthru
        _
      // Predicated region
      $region33: #{mae_forward.8} parent=11 // pred_check
        %p353 = pneg %p171
      $region34: #{mae_forward.8} parent=11 // pred_check_branch
        %355 = sbr.rel (%p353) target = $region36
      $region35: #{mae_forward.8} parent=11 // pred_region
        _
      $region36: #{mae_forward.8} parent=11 // pred_fallthru
        _
      // Predicated region
      $region37: #{mae_forward.8} parent=11 // pred_check
        %p356 = pneg %p192
      $region38: #{mae_forward.8} parent=11 // pred_check_branch
        %358 = sbr.rel (%p356) target = $region40
      $region39: #{mae_forward.8} parent=11 // pred_region
        _
      $region40: #{mae_forward.8} parent=11 // pred_fallthru
        _
      // Predicated region
      $region41: #{mae_forward.8} parent=11 // pred_check
        %p359 = pneg %p213
      $region42: #{mae_forward.8} parent=11 // pred_check_branch
        %361 = sbr.rel (%p359) target = $region44
      $region43: #{mae_forward.8} parent=11 // pred_region
        _
      $region44: #{mae_forward.8} parent=11 // pred_fallthru
        _
      // Predicated region
      $region45: #{mae_forward.8} parent=11 // pred_check
        %p362 = pneg %p234
      $region46: #{mae_forward.8} parent=11 // pred_check_branch
        %364 = sbr.rel (%p362) target = $region48
      $region47: #{mae_forward.8} parent=11 // pred_region
        _
      $region48: #{mae_forward.8} parent=11 // pred_fallthru
        _
      // Predicated region
      $region49: #{mae_forward.8} parent=11 // pred_check
        %p365 = pneg %p255
      $region50: #{mae_forward.8} parent=11 // pred_check_branch
        %367 = sbr.rel (%p365) target = $region52
      $region51: #{mae_forward.8} parent=11 // pred_region
        _
      $region52: #{mae_forward.8} parent=11 // pred_fallthru
        _
      // Predicated region
      $region53: #{mae_forward.8} parent=11 // pred_check
        %p368 = pneg %p276
      $region54: #{mae_forward.8} parent=11 // pred_check_branch
        %370 = sbr.rel (%p368) target = $region56
      $region55: #{mae_forward.8} parent=11 // pred_region
        _
      $region56: #{mae_forward.8} parent=11 // pred_fallthru
        _
      // Predicated region
      $region57: #{mae_forward.8} parent=11 // pred_check
        %p371 = pneg %p297
      $region58: #{mae_forward.8} parent=11 // pred_check_branch
        %373 = sbr.rel (%p371) target = $region60
      $region59: #{mae_forward.8} parent=11 // pred_region
        _
      $region60: #{mae_forward.8} parent=11 // pred_fallthru
        _
    $region12: #{mae_forward.8} parent=5 // pred_fallthru
      _
    %p374 = scmp.lt.s32.totalorder %s19, 2
    // Predicated region
    $region61: #{mae_forward.8} parent=5 // pred_check
      %p375 = pneg %p374
    $region62: #{mae_forward.8} parent=5 // pred_check_branch
      %377 = sbr.rel (%p375) target = $region64
    $region63: #{mae_forward.8} parent=5 // pred_region
      // Predicated region
      $region65: #{mae_forward.8} parent=63 // pred_check
        %p378 = pneg %p39
      $region66: #{mae_forward.8} parent=63 // pred_check_branch
        %380 = sbr.rel (%p378) target = $region68
      $region67: #{mae_forward.8} parent=63 // pred_region
        %p381 = scmp.lt.s32.totalorder %s19, 1
        %s382 = scalar_select %p381, %s19, 1
        %s383 = smul.addr %s382, 2
        %s384 = scalar_lea.vmem %s0, %s383
      $region68: #{mae_forward.8} parent=63 // pred_fallthru
        _
    $region64: #{mae_forward.8} parent=5 // pred_fallthru
      _
    %p385 = scmp.le.s32.totalorder 1, %s19
    %p386 = scmp.lt.s32.totalorder %s19, 3
    %p387 = pnand %p385, %p386
    %p388 = pneg %p387
    // Predicated region
    $region69: #{mae_forward.8} parent=5 // pred_check
      _
    $region70: #{mae_forward.8} parent=5 // pred_check_branch
      %390 = sbr.rel (%p387) target = $region72
    $region71: #{mae_forward.8} parent=5 // pred_region
      %s391 = ssub.s32 %s19, 1
      %p392 = scmp.lt.s32.totalorder %s24, 1
      %s393 = scalar_select %p392, %s24, 1
      %s394 = smul.addr %s393, 2
      %s395 = scalar_lea.vmem %s0, %s394
      %p396 = pneg %p45
      %p397 = pneg %p42
      %p398 = pneg %p66
      %p399 = pneg %p63
      %p400 = pneg %p87
      %p401 = pneg %p84
      %p402 = pneg %p108
      %p403 = pneg %p105
      %p404 = pneg %p129
      %p405 = pneg %p126
      %p406 = pneg %p150
      %p407 = pneg %p147
      %p408 = pneg %p171
      %p409 = pneg %p168
      %p410 = pneg %p192
      %p411 = pneg %p189
      %p412 = pneg %p213
      %p413 = pneg %p210
      %p414 = pneg %p234
      %p415 = pneg %p231
      %p416 = pneg %p255
      %p417 = pneg %p252
      %p418 = pneg %p276
      %p419 = pneg %p273
      %p420 = pneg %p297
      %p421 = pneg %p294
      %p422 = pneg %p323
      %p423 = pneg %p320
      %p424 = scmp.lt.s32.totalorder %s24, 1
      %s425 = scalar_select %p424, %s24, 1
      %s426 = smul.addr %s425, 2
      %s427 = scalar_lea.vmem %s13, %s426
      %p428 = scmp.lt.s32.totalorder %s24, 1
      %s429 = scalar_select %p428, %s24, 1
      %s430 = smul.addr %s429, 2
      %s431 = scalar_lea.vmem %s0, %s430
      %p432 = scmp.lt.s32.totalorder %s24, 1
      %s433 = scalar_select %p432, %s24, 1
      %s434 = smul.addr %s433, 2
      %s435 = scalar_lea.vmem %s13, %s434
      %v437 = vld [vmem:[%s431] sm:$0x3]
      %v438 = vld [vmem:[%s1] sm:$0x1]
      %v439 = vld [vmem:[%s2] sm:$0x1]
      %vm440 = vcmask 254976
      %v441 = vsel %vm440, %v437, 0.0
      %442 = vadd.xlane.f32.xlu0 %v441
      %v443 = vpop.xlane.xlu0 %442
      %v444 = vrcp.pop 32.0
      %v445 = vmul.f32 32.0, %v444
      %v446 = vsub.f32 1.0, %v445
      %v447 = vmul.f32 %v444, %v446
      %v448 = vadd.f32 %v444, %v447
      %vm449 = vweird.f32 %v444
      %v450 = vsel %vm449, %v444, %v448
      %v451 = vmul.f32 %v443, %v450
      %v452 = vsub.f32 %v437, %v451
      %v453 = vmul.f32 %v452, %v452
      %v454 = vsel %vm440, %v453, 0.0
      %455 = vadd.xlane.f32.xlu0 %v454
      %v456 = vpop.xlane.xlu0 %455
      %v457 = vmul.f32 %v456, %v450
      %v458 = vadd.f32 %v457, 1e-05
      %v459 = vrsqrt.pop %v458
      %v460 = vmul.f32 %v459, %v458
      %v461 = vmul.f32 %v460, %v459
      %v462 = vmul.f32 0.5, %v461
      %v463 = vsub.f32 1.5, %v462
      %v464 = vmul.f32 %v459, %v463
      %vm465 = vweird.f32 %v458
      %vm466 = vweird.f32 %v459
      %vm467 = vmor %vm465, %vm466
      %v468 = vsel %vm467, %v459, %v464
      %v469 = vmul.f32 %v452, %v468
      %v471 = vperm.slane %v438, 0
      %v473 = vmul.f32 %v469, %v471
      %v475 = vperm.slane %v439, 0
      %v477 = vadd.f32 %v473, %v475
      %v478 = vpack.c.bf16 %v477, %v477
      %v479 = vld [vmem:[%s3] sm:$0xf]
      %v480 = vld [vmem:[%s3 + $0x4] sm:$0xf]
      %v481 = vld [vmem:[%s3 + $0x8] sm:$0xf]
      %v482 = vld [vmem:[%s3 + $0xc] sm:$0xf]
      %v483 = vld [vmem:[%s4] sm:$0x1]
      %v485 = vperm.slane %v483, 0
      %v491 = vunpack.c.l.b16 %v479
      %v492 = vunpack.c.l.b16 %v480
      %v493 = vunpack.c.l.b16 %v481
      %v494 = vunpack.c.l.b16 %v482
      %v495 = vpack.c.b16 %v492, %v491
      %v496 = vpack.c.b16 %v494, %v493
      %vm499 = vcmask 261120
      %v501 = vsel %vm499, %v478, 0
      %503 = vmatpush.bf16.msra.mxu0 0
      %504 = vmatpush.bf16.msra.mxu0 0
      %505 = vmatpush.bf16.msra.mxu0 0
      %506 = vmatpush.bf16.msra.mxu0 0
      %507 = vmatpush.bf16.msra.mxu0 0
      %508 = vmatpush.bf16.msra.mxu0 0
      %509 = vmatpush.bf16.msra.mxu0 %v496
      %510 = vmatpush.bf16.msra.mxu0 %v495
      %511 = vmatmul.bf16.gmra.mxu0 %v501
      %v512 = vpop.f32.mrf.mxu0
      %v513 = vadd.f32 %v485, %v512
      %v514 = vpop.f32.mrf.mxu0
      %515 = vdwg.mxu0
      %517 = vrot.lane.b32.xlu0 %v513, 96
      %v518 = vpop.permute.xlu0 %517
      %vm519 = vcmask 64512
      %v520 = vsel %vm519, %v513, 0
      %v522 = vsel %vm519, %v518, 0
      %524 = vmatpush.xpose.msra.mxu0 0.0
      %525 = vmatpush.xpose.msra.mxu0 0.0
      %526 = vmatpush.xpose.msra.mxu0 0.0
      %527 = vmatpush.xpose.msra.mxu0 0.0
      %528 = vmatpush.xpose.msra.mxu0 0.0
      %529 = vmatpush.xpose.msra.mxu0 0.0
      %530 = vmatpush.xpose.msra.mxu0 0.0
      %531 = vmatpush.xpose.msra.mxu0 0.0
      %532 = vmatpush.xpose.msra.mxu0 0.0
      %533 = vmatpush.xpose.msra.mxu0 0.0
      %534 = vmatpush.xpose.msra.mxu0 0.0
      %535 = vmatpush.xpose.msra.mxu0 0.0
      %536 = vmatpush.xpose.msra.mxu0 0.0
      %537 = vmatpush.xpose.msra.mxu0 0.0
      %538 = vmatpush.xpose.msra.mxu0 0.0
      %539 = vmatpush.xpose.msra.mxu0 %v522
      %540 = vmatmul.f32.gmra.mxu0 %v520
      %v541 = vpop.f32.mrf.mxu0
      %v542 = vadd.f32 0.0, %v541
      %543 = vdwg.mxu0
      %v544 = vmul.f32 %v542, 0.35355338
      %vm545 = vcmask 9216
      %v546 = vsel %vm545, %v544, -inf
      %547 = vmax.xlane.f32.xlu0 %v546
      %v548 = vpop.xlane.xlu0 %547
      %v549 = vsub.f32 %v544, %v548
      %v550 = vmul.f32 %v549, 1.442695
      %v551 = vpow.pop %v550
      %v552 = vsel %vm545, %v551, 0.0
      %553 = vadd.xlane.f32.xlu0 %v552
      %v554 = vpop.xlane.xlu0 %553
      %v555 = vrcp.pop %v554
      %v556 = vmul.f32 %v554, %v555
      %v557 = vsub.f32 1.0, %v556
      %v558 = vmul.f32 %v555, %v557
      %v559 = vadd.f32 %v555, %v558
      %vm560 = vweird.f32 %v554
      %vm561 = vweird.f32 %v555
      %vm562 = vmor %vm560, %vm561
      %v563 = vsel %vm562, %v555, %v559
      %v564 = vand.u32 2147483647, %v554
      %vm565 = vcmp.eq.f32.partialorder %v564, 8.507059e+37
      %v566 = vand.u32 %v554, 2147483648
      %v567 = vor.u32 1.1754944e-38, %v566
      %v568 = vsel %vm565, %v567, %v563
      %v569 = vmul.f32 %v551, %v568
      %570 = vrot.lane.b32.xlu0 %v513, 64
      %v571 = vpop.permute.xlu0 %570
      %vm572 = vcmask 15360
      %v574 = vsel %vm572, %v569, 0
      %vm576 = vcmask 1041408
      %v577 = vsel %vm576, %v571, 0
      %579 = vmatpush.msra.mxu0 0.0
      %580 = vmatpush.msra.mxu0 0.0
      %581 = vmatpush.msra.mxu0 0.0
      %582 = vmatpush.msra.mxu0 0.0
      %583 = vmatpush.msra.mxu0 0.0
      %584 = vmatpush.msra.mxu0 0.0
      %585 = vmatpush.msra.mxu0 0.0
      %586 = vmatpush.msra.mxu0 0.0
      %587 = vmatpush.msra.mxu0 0.0
      %588 = vmatpush.msra.mxu0 0.0
      %589 = vmatpush.msra.mxu0 0.0
      %590 = vmatpush.msra.mxu0 0.0
      %591 = vmatpush.msra.mxu0 0.0
      %592 = vmatpush.msra.mxu0 0.0
      %593 = vmatpush.msra.mxu0 0.0
      %594 = vmatpush.msra.mxu0 %v577
      %595 = vmatmul.f32.gmra.mxu0 %v574
      %v596 = vpop.f32.mrf.mxu0
      %v597 = vadd.f32 0.0, %v596
      %598 = vdwg.mxu0
      %599 = vrot.lane.b32.xlu0 %v513, 120
      %v600 = vpop.permute.xlu0 %599
      %601 = vrot.lane.b32.xlu0 %v513, 88
      %v602 = vpop.permute.xlu0 %601
      %v603 = vsel %vm519, %v600, 0
      %v605 = vsel %vm519, %v602, 0
      %607 = vmatpush.xpose.msra.mxu0 0.0
      %608 = vmatpush.xpose.msra.mxu0 0.0
      %609 = vmatpush.xpose.msra.mxu0 0.0
      %610 = vmatpush.xpose.msra.mxu0 0.0
      %611 = vmatpush.xpose.msra.mxu0 0.0
      %612 = vmatpush.xpose.msra.mxu0 0.0
      %613 = vmatpush.xpose.msra.mxu0 0.0
      %614 = vmatpush.xpose.msra.mxu0 0.0
      %615 = vmatpush.xpose.msra.mxu0 0.0
      %616 = vmatpush.xpose.msra.mxu0 0.0
      %617 = vmatpush.xpose.msra.mxu0 0.0
      %618 = vmatpush.xpose.msra.mxu0 0.0
      %619 = vmatpush.xpose.msra.mxu0 0.0
      %620 = vmatpush.xpose.msra.mxu0 0.0
      %621 = vmatpush.xpose.msra.mxu0 0.0
      %622 = vmatpush.xpose.msra.mxu0 %v605
      %623 = vmatmul.f32.gmra.mxu0 %v603
      %v624 = vpop.f32.mrf.mxu0
      %v625 = vadd.f32 0.0, %v624
      %626 = vdwg.mxu0
      %v627 = vmul.f32 %v625, 0.35355338
      %v628 = vsel %vm545, %v627, -inf
      %629 = vmax.xlane.f32.xlu0 %v628
      %v630 = vpop.xlane.xlu0 %629
      %v631 = vsub.f32 %v627, %v630
      %v632 = vmul.f32 %v631, 1.442695
      %v633 = vpow.pop %v632
      %v634 = vsel %vm545, %v633, 0.0
      %635 = vadd.xlane.f32.xlu0 %v634
      %v636 = vpop.xlane.xlu0 %635
      %v637 = vrcp.pop %v636
      %v638 = vmul.f32 %v636, %v637
      %v639 = vsub.f32 1.0, %v638
      %v640 = vmul.f32 %v637, %v639
      %v641 = vadd.f32 %v637, %v640
      %vm642 = vweird.f32 %v636
      %vm643 = vweird.f32 %v637
      %vm644 = vmor %vm642, %vm643
      %v645 = vsel %vm644, %v637, %v641
      %v646 = vand.u32 2147483647, %v636
      %vm647 = vcmp.eq.f32.partialorder %v646, 8.507059e+37
      %v648 = vand.u32 %v636, 2147483648
      %v649 = vor.u32 1.1754944e-38, %v648
      %v650 = vsel %vm647, %v649, %v645
      %v651 = vmul.f32 %v633, %v650
      %652 = vrot.lane.b32.xlu0 %v513, 56
      %v653 = vpop.permute.xlu0 %652
      %v655 = vsel %vm572, %v651, 0
      %v657 = vsel %vm576, %v653, 0
      %659 = vmatpush.msra.mxu0 0.0
      %660 = vmatpush.msra.mxu0 0.0
      %661 = vmatpush.msra.mxu0 0.0
      %662 = vmatpush.msra.mxu0 0.0
      %663 = vmatpush.msra.mxu0 0.0
      %664 = vmatpush.msra.mxu0 0.0
      %665 = vmatpush.msra.mxu0 0.0
      %666 = vmatpush.msra.mxu0 0.0
      %667 = vmatpush.msra.mxu0 0.0
      %668 = vmatpush.msra.mxu0 0.0
      %669 = vmatpush.msra.mxu0 0.0
      %670 = vmatpush.msra.mxu0 0.0
      %671 = vmatpush.msra.mxu0 0.0
      %672 = vmatpush.msra.mxu0 0.0
      %673 = vmatpush.msra.mxu0 0.0
      %674 = vmatpush.msra.mxu0 %v657
      %675 = vmatmul.f32.gmra.mxu0 %v655
      %v676 = vpop.f32.mrf.mxu0
      %v677 = vadd.f32 0.0, %v676
      %678 = vdwg.mxu0
      %679 = vrot.lane.b32.xlu0 %v513, 112
      %v680 = vpop.permute.xlu0 %679
      %681 = vrot.lane.b32.xlu0 %v513, 80
      %v682 = vpop.permute.xlu0 %681
      %v683 = vsel %vm519, %v680, 0
      %v685 = vsel %vm519, %v682, 0
      %687 = vmatpush.xpose.msra.mxu0 0.0
      %688 = vmatpush.xpose.msra.mxu0 0.0
      %689 = vmatpush.xpose.msra.mxu0 0.0
      %690 = vmatpush.xpose.msra.mxu0 0.0
      %691 = vmatpush.xpose.msra.mxu0 0.0
      %692 = vmatpush.xpose.msra.mxu0 0.0
      %693 = vmatpush.xpose.msra.mxu0 0.0
      %694 = vmatpush.xpose.msra.mxu0 0.0
      %695 = vmatpush.xpose.msra.mxu0 0.0
      %696 = vmatpush.xpose.msra.mxu0 0.0
      %697 = vmatpush.xpose.msra.mxu0 0.0
      %698 = vmatpush.xpose.msra.mxu0 0.0
      %699 = vmatpush.xpose.msra.mxu0 0.0
      %700 = vmatpush.xpose.msra.mxu0 0.0
      %701 = vmatpush.xpose.msra.mxu0 0.0
      %702 = vmatpush.xpose.msra.mxu0 %v685
      %703 = vmatmul.f32.gmra.mxu0 %v683
      %v704 = vpop.f32.mrf.mxu0
      %v705 = vadd.f32 0.0, %v704
      %706 = vdwg.mxu0
      %v707 = vmul.f32 %v705, 0.35355338
      %v708 = vsel %vm545, %v707, -inf
      %709 = vmax.xlane.f32.xlu0 %v708
      %v710 = vpop.xlane.xlu0 %709
      %v711 = vsub.f32 %v707, %v710
      %v712 = vmul.f32 %v711, 1.442695
      %v713 = vpow.pop %v712
      %v714 = vsel %vm545, %v713, 0.0
      %715 = vadd.xlane.f32.xlu0 %v714
      %v716 = vpop.xlane.xlu0 %715
      %v717 = vrcp.pop %v716
      %v718 = vmul.f32 %v716, %v717
      %v719 = vsub.f32 1.0, %v718
      %v720 = vmul.f32 %v717, %v719
      %v721 = vadd.f32 %v717, %v720
      %vm722 = vweird.f32 %v716
      %vm723 = vweird.f32 %v717
      %vm724 = vmor %vm722, %vm723
      %v725 = vsel %vm724, %v717, %v721
      %v726 = vand.u32 2147483647, %v716
      %vm727 = vcmp.eq.f32.partialorder %v726, 8.507059e+37
      %v728 = vand.u32 %v716, 2147483648
      %v729 = vor.u32 1.1754944e-38, %v728
      %v730 = vsel %vm727, %v729, %v725
      %v731 = vmul.f32 %v713, %v730
      %732 = vrot.lane.b32.xlu0 %v513, 48
      %v733 = vpop.permute.xlu0 %732
      %v735 = vsel %vm572, %v731, 0
      %v737 = vsel %vm576, %v733, 0
      %739 = vmatpush.msra.mxu0 0.0
      %740 = vmatpush.msra.mxu0 0.0
      %741 = vmatpush.msra.mxu0 0.0
      %742 = vmatpush.msra.mxu0 0.0
      %743 = vmatpush.msra.mxu0 0.0
      %744 = vmatpush.msra.mxu0 0.0
      %745 = vmatpush.msra.mxu0 0.0
      %746 = vmatpush.msra.mxu0 0.0
      %747 = vmatpush.msra.mxu0 0.0
      %748 = vmatpush.msra.mxu0 0.0
      %749 = vmatpush.msra.mxu0 0.0
      %750 = vmatpush.msra.mxu0 0.0
      %751 = vmatpush.msra.mxu0 0.0
      %752 = vmatpush.msra.mxu0 0.0
      %753 = vmatpush.msra.mxu0 0.0
      %754 = vmatpush.msra.mxu0 %v737
      %755 = vmatmul.f32.gmra.mxu0 %v735
      %v756 = vpop.f32.mrf.mxu0
      %v757 = vadd.f32 0.0, %v756
      %758 = vdwg.mxu0
      %759 = vrot.lane.b32.xlu0 %v513, 104
      %v760 = vpop.permute.xlu0 %759
      %761 = vrot.lane.b32.xlu0 %v513, 72
      %v762 = vpop.permute.xlu0 %761
      %v763 = vsel %vm519, %v760, 0
      %v765 = vsel %vm519, %v762, 0
      %767 = vmatpush.xpose.msra.mxu0 0.0
      %768 = vmatpush.xpose.msra.mxu0 0.0
      %769 = vmatpush.xpose.msra.mxu0 0.0
      %770 = vmatpush.xpose.msra.mxu0 0.0
      %771 = vmatpush.xpose.msra.mxu0 0.0
      %772 = vmatpush.xpose.msra.mxu0 0.0
      %773 = vmatpush.xpose.msra.mxu0 0.0
      %774 = vmatpush.xpose.msra.mxu0 0.0
      %775 = vmatpush.xpose.msra.mxu0 0.0
      %776 = vmatpush.xpose.msra.mxu0 0.0
      %777 = vmatpush.xpose.msra.mxu0 0.0
      %778 = vmatpush.xpose.msra.mxu0 0.0
      %779 = vmatpush.xpose.msra.mxu0 0.0
      %780 = vmatpush.xpose.msra.mxu0 0.0
      %781 = vmatpush.xpose.msra.mxu0 0.0
      %782 = vmatpush.xpose.msra.mxu0 %v765
      %783 = vmatmul.f32.gmra.mxu0 %v763
      %v784 = vpop.f32.mrf.mxu0
      %v785 = vadd.f32 0.0, %v784
      %786 = vdwg.mxu0
      %v787 = vmul.f32 %v785, 0.35355338
      %v788 = vsel %vm545, %v787, -inf
      %789 = vmax.xlane.f32.xlu0 %v788
      %v790 = vpop.xlane.xlu0 %789
      %v791 = vsub.f32 %v787, %v790
      %v792 = vmul.f32 %v791, 1.442695
      %v793 = vpow.pop %v792
      %v794 = vsel %vm545, %v793, 0.0
      %795 = vadd.xlane.f32.xlu0 %v794
      %v796 = vpop.xlane.xlu0 %795
      %v797 = vrcp.pop %v796
      %v798 = vmul.f32 %v796, %v797
      %v799 = vsub.f32 1.0, %v798
      %v800 = vmul.f32 %v797, %v799
      %v801 = vadd.f32 %v797, %v800
      %vm802 = vweird.f32 %v796
      %vm803 = vweird.f32 %v797
      %vm804 = vmor %vm802, %vm803
      %v805 = vsel %vm804, %v797, %v801
      %v806 = vand.u32 2147483647, %v796
      %vm807 = vcmp.eq.f32.partialorder %v806, 8.507059e+37
      %v808 = vand.u32 %v796, 2147483648
      %v809 = vor.u32 1.1754944e-38, %v808
      %v810 = vsel %vm807, %v809, %v805
      %v811 = vmul.f32 %v793, %v810
      %812 = vrot.lane.b32.xlu0 %v513, 40
      %v813 = vpop.permute.xlu0 %812
      %v815 = vsel %vm572, %v811, 0
      %v817 = vsel %vm576, %v813, 0
      %819 = vmatpush.msra.mxu0 0.0
      %820 = vmatpush.msra.mxu0 0.0
      %821 = vmatpush.msra.mxu0 0.0
      %822 = vmatpush.msra.mxu0 0.0
      %823 = vmatpush.msra.mxu0 0.0
      %824 = vmatpush.msra.mxu0 0.0
      %825 = vmatpush.msra.mxu0 0.0
      %826 = vmatpush.msra.mxu0 0.0
      %827 = vmatpush.msra.mxu0 0.0
      %828 = vmatpush.msra.mxu0 0.0
      %829 = vmatpush.msra.mxu0 0.0
      %830 = vmatpush.msra.mxu0 0.0
      %831 = vmatpush.msra.mxu0 0.0
      %832 = vmatpush.msra.mxu0 0.0
      %833 = vmatpush.msra.mxu0 0.0
      %834 = vmatpush.msra.mxu0 %v817
      %835 = vmatmul.f32.gmra.mxu0 %v815
      %v836 = vpop.f32.mrf.mxu0
      %v837 = vadd.f32 0.0, %v836
      %838 = vdwg.mxu0
      %840 = vrot.lane.b32.xlu0 %v677, 8
      %v841 = vpop.permute.xlu0 %840
      %844 = vrot.lane.b32.xlu0 %v757, 16
      %v845 = vpop.permute.xlu0 %844
      %848 = vrot.lane.b32.xlu0 %v837, 24
      %v849 = vpop.permute.xlu0 %848
      %v851 = vsel %vm519, %v597, %v841
      %vm852 = vcmask 130048
      %v853 = vsel %vm852, %v851, %v845
      %vm854 = vcmask 195584
      %v855 = vsel %vm854, %v853, %v849
      %v856 = vpack.c.bf16 %v855, %v855
      %v857 = vld [vmem:[%s5] sm:$0xf]
      %v858 = vld [vmem:[%s5 + $0x4] sm:$0xf]
      %v859 = vld [vmem:[%s5 + $0x8] sm:$0xf]
      %v860 = vld [vmem:[%s5 + $0xc] sm:$0xf]
      %v861 = vld [vmem:[%s6] sm:$0x1]
      %v863 = vperm.slane %v861, 0
      %v869 = vunpack.c.l.b16 %v857
      %v870 = vunpack.c.l.b16 %v858
      %v871 = vunpack.c.l.b16 %v859
      %v872 = vunpack.c.l.b16 %v860
      %v873 = vpack.c.b16 %v870, %v869
      %v874 = vpack.c.b16 %v872, %v871
      %v878 = vsel %vm499, %v856, 0
      %880 = vmatpush.bf16.msra.mxu0 0
      %881 = vmatpush.bf16.msra.mxu0 0
      %882 = vmatpush.bf16.msra.mxu0 0
      %883 = vmatpush.bf16.msra.mxu0 0
      %884 = vmatpush.bf16.msra.mxu0 0
      %885 = vmatpush.bf16.msra.mxu0 0
      %886 = vmatpush.bf16.msra.mxu0 %v874
      %887 = vmatpush.bf16.msra.mxu0 %v873
      %888 = vmatmul.bf16.gmra.mxu0 %v878
      %v889 = vpop.f32.mrf.mxu0
      %v890 = vadd.f32 %v863, %v889
      %v891 = vpop.f32.mrf.mxu0
      %892 = vdwg.mxu0
      %v893 = vadd.f32 %v437, %v890
      %v894 = vld [vmem:[%s7] sm:$0x1]
      %v895 = vld [vmem:[%s8] sm:$0x1]
      %v896 = vsel %vm440, %v893, 0.0
      %897 = vadd.xlane.f32.xlu0 %v896
      %v898 = vpop.xlane.xlu0 %897
      %v899 = vmul.f32 %v898, %v450
      %v900 = vsub.f32 %v893, %v899
      %v901 = vmul.f32 %v900, %v900
      %v902 = vsel %vm440, %v901, 0.0
      %903 = vadd.xlane.f32.xlu0 %v902
      %v904 = vpop.xlane.xlu0 %903
      %v905 = vmul.f32 %v904, %v450
      %v906 = vadd.f32 %v905, 1e-05
      %v907 = vrsqrt.pop %v906
      %v908 = vmul.f32 %v907, %v906
      %v909 = vmul.f32 %v908, %v907
      %v910 = vmul.f32 0.5, %v909
      %v911 = vsub.f32 1.5, %v910
      %v912 = vmul.f32 %v907, %v911
      %vm913 = vweird.f32 %v906
      %vm914 = vweird.f32 %v907
      %vm915 = vmor %vm913, %vm914
      %v916 = vsel %vm915, %v907, %v912
      %v917 = vmul.f32 %v900, %v916
      %v919 = vperm.slane %v894, 0
      %v921 = vmul.f32 %v917, %v919
      %v923 = vperm.slane %v895, 0
      %v925 = vadd.f32 %v921, %v923
      %v926 = vpack.c.bf16 %v925, %v925
      %v927 = vld [vmem:[%s9] sm:$0xf]
      %v928 = vld [vmem:[%s9 + $0x4] sm:$0xf]
      %v929 = vld [vmem:[%s9 + $0x8] sm:$0xf]
      %v930 = vld [vmem:[%s9 + $0xc] sm:$0xf]
      %v931 = vld [vmem:[%s10] sm:$0x1]
      %v933 = vperm.slane %v931, 0
      %v939 = vunpack.c.l.b16 %v927
      %v940 = vunpack.c.l.b16 %v928
      %v941 = vunpack.c.l.b16 %v929
      %v942 = vunpack.c.l.b16 %v930
      %v943 = vpack.c.b16 %v940, %v939
      %v944 = vpack.c.b16 %v942, %v941
      %v948 = vsel %vm499, %v926, 0
      %950 = vmatpush.bf16.msra.mxu0 0
      %951 = vmatpush.bf16.msra.mxu0 0
      %952 = vmatpush.bf16.msra.mxu0 0
      %953 = vmatpush.bf16.msra.mxu0 0
      %954 = vmatpush.bf16.msra.mxu0 0
      %955 = vmatpush.bf16.msra.mxu0 0
      %956 = vmatpush.bf16.msra.mxu0 %v944
      %957 = vmatpush.bf16.msra.mxu0 %v943
      %958 = vmatmul.bf16.gmra.mxu0 %v948
      %v959 = vpop.f32.mrf.mxu0
      %v960 = vadd.f32 %v933, %v959
      %v961 = vpop.f32.mrf.mxu0
      %962 = vdwg.mxu0
      %v963 = vmul.f32 %v960, 0.5
      %v964 = vmul.f32 %v960, 0.70710677
      %vm965 = vcmp.ge.f32.partialorder %v964, 0.0
      %v966 = vsel %vm965, 1.0, -1.0
      %v967 = vand.u32 2147483647, %v964
      %v968 = vmul.f32 %v967, 0.3275911
      %v969 = vadd.f32 %v968, 1.0
      %v970 = vrcp.pop %v969
      %v971 = vmul.f32 %v969, %v970
      %v972 = vsub.f32 1.0, %v971
      %v973 = vmul.f32 %v970, %v972
      %v974 = vadd.f32 %v970, %v973
      %vm975 = vweird.f32 %v969
      %vm976 = vweird.f32 %v970
      %vm977 = vmor %vm975, %vm976
      %v978 = vsel %vm977, %v970, %v974
      %v979 = vand.u32 2147483647, %v969
      %vm980 = vcmp.eq.f32.partialorder %v979, 8.507059e+37
      %v981 = vand.u32 %v969, 2147483648
      %v982 = vor.u32 1.1754944e-38, %v981
      %v983 = vsel %vm980, %v982, %v978
      %v984 = vmul.f32 1.0, %v983
      %v985 = vmul.f32 %v984, 1.0614054
      %v986 = vadd.f32 %v985, -1.4531521
      %v987 = vmul.f32 %v986, %v984
      %v988 = vadd.f32 %v987, 1.4214138
      %v989 = vmul.f32 %v988, %v984
      %v990 = vadd.f32 %v989, -0.28449672
      %v991 = vmul.f32 %v990, %v984
      %v992 = vadd.f32 %v991, 0.2548296
      %v993 = vmul.f32 %v992, %v984
      %v994 = vsub.f32 0.0, %v967
      %v995 = vmul.f32 %v994, %v967
      %v996 = vmul.f32 %v995, 1.442695
      %v997 = vpow.pop %v996
      %v998 = vmul.f32 %v993, %v997
      %v999 = vsub.f32 1.0, %v998
      %v1000 = vmul.f32 %v966, %v999
      %v1001 = vadd.f32 %v1000, 1.0
      %v1002 = vmul.f32 %v963, %v1001
      %v1003 = vpack.c.bf16 %v1002, %v1002
      %v1004 = vld [vmem:[%s11] sm:$0xf]
      %v1005 = vld [vmem:[%s11 + $0x4] sm:$0xf]
      %v1006 = vld [vmem:[%s11 + $0x8] sm:$0xf]
      %v1007 = vld [vmem:[%s11 + $0xc] sm:$0xf]
      %v1008 = vld [vmem:[%s11 + $0x10] sm:$0xf]
      %v1009 = vld [vmem:[%s11 + $0x14] sm:$0xf]
      %v1010 = vld [vmem:[%s11 + $0x18] sm:$0xf]
      %v1011 = vld [vmem:[%s11 + $0x1c] sm:$0xf]
      %v1012 = vld [vmem:[%s11 + $0x20] sm:$0xf]
      %v1013 = vld [vmem:[%s11 + $0x24] sm:$0xf]
      %v1014 = vld [vmem:[%s11 + $0x28] sm:$0xf]
      %v1015 = vld [vmem:[%s11 + $0x2c] sm:$0xf]
      %v1016 = vld [vmem:[%s11 + $0x30] sm:$0xf]
      %v1017 = vld [vmem:[%s11 + $0x34] sm:$0xf]
      %v1018 = vld [vmem:[%s11 + $0x38] sm:$0xf]
      %v1019 = vld [vmem:[%s11 + $0x3c] sm:$0xf]
      %v1020 = vld [vmem:[%s12] sm:$0x1]
      %v1022 = vperm.slane %v1020, 0
      %v1040 = vunpack.c.l.b16 %v1004
      %v1041 = vunpack.c.l.b16 %v1005
      %v1042 = vunpack.c.l.b16 %v1006
      %v1043 = vunpack.c.l.b16 %v1007
      %v1044 = vunpack.c.l.b16 %v1008
      %v1045 = vunpack.c.l.b16 %v1009
      %v1046 = vunpack.c.l.b16 %v1010
      %v1047 = vunpack.c.l.b16 %v1011
      %v1048 = vunpack.c.l.b16 %v1012
      %v1049 = vunpack.c.l.b16 %v1013
      %v1050 = vunpack.c.l.b16 %v1014
      %v1051 = vunpack.c.l.b16 %v1015
      %v1052 = vunpack.c.l.b16 %v1016
      %v1053 = vunpack.c.l.b16 %v1017
      %v1054 = vunpack.c.l.b16 %v1018
      %v1055 = vunpack.c.l.b16 %v1019
      %v1056 = vpack.c.b16 %v1041, %v1040
      %v1057 = vpack.c.b16 %v1043, %v1042
      %v1058 = vpack.c.b16 %v1045, %v1044
      %v1059 = vpack.c.b16 %v1047, %v1046
      %v1060 = vpack.c.b16 %v1049, %v1048
      %v1061 = vpack.c.b16 %v1051, %v1050
      %v1062 = vpack.c.b16 %v1053, %v1052
      %v1063 = vpack.c.b16 %v1055, %v1054
      %1072 = vmatpush.bf16.msra.mxu0 %v1063
      %1073 = vmatpush.bf16.msra.mxu0 %v1062
      %1074 = vmatpush.bf16.msra.mxu0 %v1061
      %1075 = vmatpush.bf16.msra.mxu0 %v1060
      %1076 = vmatpush.bf16.msra.mxu0 %v1059
      %1077 = vmatpush.bf16.msra.mxu0 %v1058
      %1078 = vmatpush.bf16.msra.mxu0 %v1057
      %1079 = vmatpush.bf16.msra.mxu0 %v1056
      %1080 = vmatmul.bf16.gmra.mxu0 %v1003
      %v1081 = vpop.f32.mrf.mxu0
      %v1082 = vadd.f32 %v1022, %v1081
      %v1083 = vpop.f32.mrf.mxu0
      %1084 = vdwg.mxu0
      %v1085 = vadd.f32 %v893, %v1082
      %1086 = vst.msk [vmem:[%s435] sm:$0x3] %vm440, %v1085
      %p1087 = scmp.lt.s32.totalorder %s24, 1
      %s1088 = scalar_select %p1087, %s24, 1
      %s1089 = smul.addr %s1088, 2
      %s1090 = scalar_lea.vmem %s13, %s1089
      // Predicated region
      $region73: #{mae_forward.8} parent=71 // pred_check
        %p1091 = pneg %p320
      $region74: #{mae_forward.8} parent=71 // pred_check_branch
        %1093 = sbr.rel (%p1091) target = $region76
      $region75: #{mae_forward.8} parent=71 // pred_region
        _
      $region76: #{mae_forward.8} parent=71 // pred_fallthru
        _
    $region72: #{mae_forward.8} parent=5 // pred_fallthru
      _
    %p1094 = scmp.le.s32.totalorder 2, %s19
    // Predicated region
    $region77: #{mae_forward.8} parent=5 // pred_check
      %p1095 = pneg %p1094
    $region78: #{mae_forward.8} parent=5 // pred_check_branch
      %1097 = sbr.rel (%p1095) target = $region80
    $region79: #{mae_forward.8} parent=5 // pred_region
      %s1098 = ssub.s32 %s19, 2
      // Predicated region
      $region81: #{mae_forward.8} parent=79 // pred_check
        %p1099 = pneg %p326
      $region82: #{mae_forward.8} parent=79 // pred_check_branch
        %1101 = sbr.rel (%p1099) target = $region84
      $region83: #{mae_forward.8} parent=79 // pred_region
        %p1102 = scmp.lt.s32.totalorder %s25, 1
        %s1103 = scalar_select %p1102, %s25, 1
        %s1104 = smul.addr %s1103, 2
        %s1105 = scalar_lea.vmem %s13, %s1104
      $region84: #{mae_forward.8} parent=79 // pred_fallthru
        _
    $region80: #{mae_forward.8} parent=5 // pred_fallthru
      _
  $region6: #{mae_forward.8} parent=0 // loop_footer
    %s23 = sadd.s32 1, %s19
  $region7: #{mae_forward.8} parent=0 // loop_footer_branch
    %18 = sbr.rel target = $region3
  $region8: #{mae_forward.8} parent=0 // loop_exit
    _

// kernel: mae_forward.11
$region0: #{mae_forward.11}
  #allocation0 [shape = 'u32[]', space=smem, size = 0x4, offset = 0x4, fixed_abs, tag = 'smem constant byte address 0x4 - core index']
  #allocation1 [shape = 'u32[72,128]{1,0:T(1,128)}', space=vmem, size = 0x9000, scoped, tag = 'internal scratch']
  %s0 = inlined_call_operand.vmem [shape: f32[2,8,16], index: 0, kind: input, shape index: {}]
  %s1 = inlined_call_operand.vmem [shape: f32[1,16], index: 1, kind: input, shape index: {}]
  %s2 = inlined_call_operand.vmem [shape: f32[1,16], index: 2, kind: input, shape index: {}]
  %s3 = inlined_call_operand.vmem [shape: bf16[16,48], index: 3, kind: input, shape index: {}]
  %s4 = inlined_call_operand.vmem [shape: f32[1,48], index: 4, kind: input, shape index: {}]
  %s5 = inlined_call_operand.vmem [shape: bf16[16,16], index: 5, kind: input, shape index: {}]
  %s6 = inlined_call_operand.vmem [shape: f32[1,16], index: 6, kind: input, shape index: {}]
  %s7 = inlined_call_operand.vmem [shape: f32[1,16], index: 7, kind: input, shape index: {}]
  %s8 = inlined_call_operand.vmem [shape: f32[1,16], index: 8, kind: input, shape index: {}]
  %s9 = inlined_call_operand.vmem [shape: bf16[16,64], index: 9, kind: input, shape index: {}]
  %s10 = inlined_call_operand.vmem [shape: f32[1,64], index: 10, kind: input, shape index: {}]
  %s11 = inlined_call_operand.vmem [shape: bf16[64,16], index: 11, kind: input, shape index: {}]
  %s12 = inlined_call_operand.vmem [shape: f32[1,16], index: 12, kind: input, shape index: {}]
  %s13 = inlined_call_operand.vmem [shape: f32[2,8,16], index: 13, kind: output, shape index: {}]
  %s14 = sld [smem:[#allocation0]]
  $region85: #{mae_forward.11} parent=0
    _
  %s16 = ssub.s32 1, %s14
  %s17 = scalar_select 0, %s16, %s14
  loop: start=0, step=1, limit=4
  $region2: #{mae_forward.11} parent=0 // loop_pre_header
    _
  $region3: #{mae_forward.11} parent=0 // loop_header
    %s19 = sphi 0, %s23
    %p20 = scmp.ge.s32.totalorder %s19, 4
    %s29 = sphi 0, %s31
    %s32 = sphi 0, %s29
    %s33 = sphi 0, %s32
    %s49 = sphi 0, %s33
    %s53 = sphi 0, %s53
    %s55 = sphi 0, %s53
    %s56 = sphi 0, %s55
    %s70 = sphi 0, %s56
    %s74 = sphi 0, %s74
    %s76 = sphi 0, %s74
    %s77 = sphi 0, %s76
    %s91 = sphi 0, %s77
    %s95 = sphi 0, %s95
    %s97 = sphi 0, %s95
    %s98 = sphi 0, %s97
    %s112 = sphi 0, %s98
    %s116 = sphi 0, %s116
    %s118 = sphi 0, %s116
    %s119 = sphi 0, %s118
    %s133 = sphi 0, %s119
    %s137 = sphi 0, %s137
    %s139 = sphi 0, %s137
    %s140 = sphi 0, %s139
    %s154 = sphi 0, %s140
    %s158 = sphi 0, %s158
    %s160 = sphi 0, %s158
    %s161 = sphi 0, %s160
    %s175 = sphi 0, %s161
    %s179 = sphi 0, %s179
    %s181 = sphi 0, %s179
    %s182 = sphi 0, %s181
    %s196 = sphi 0, %s182
    %s200 = sphi 0, %s200
    %s202 = sphi 0, %s200
    %s203 = sphi 0, %s202
    %s217 = sphi 0, %s203
    %s221 = sphi 0, %s221
    %s223 = sphi 0, %s221
    %s224 = sphi 0, %s223
    %s238 = sphi 0, %s224
    %s242 = sphi 0, %s242
    %s244 = sphi 0, %s242
    %s245 = sphi 0, %s244
    %s259 = sphi 0, %s245
    %s263 = sphi 0, %s263
    %s265 = sphi 0, %s263
    %s266 = sphi 0, %s265
    %s280 = sphi 0, %s266
    %s284 = sphi 0, %s284
    %s286 = sphi 0, %s284
    %s287 = sphi 0, %s286
    %s301 = sphi 0, %s287
    %s307 = sphi 0, %s309
    %s310 = sphi 0, %s307
    %s311 = sphi 0, %s310
    %s327 = sphi 0, %s311
  $region4: #{mae_forward.11} parent=0 // loop_header_branch
    %22 = sbr.rel (%p20) target = $region8
  $region5: #{mae_forward.11} parent=0 // loop_body
    %s24 = ssub.s32 %s19, 1
    %s25 = ssub.s32 %s19, 2
    %s26 = sadd.s32 %s19, 1
    %s27 = ssub.s32 %s19, %s26
    %p28 = scmp.eq.s32.totalorder %s27, 0
    %s30 = sadd.s32 %s29, 1
    %s31 = scalar_select %p28, %s29, %s30
    %p34 = pneg %p28
    %p35 = scmp.eq.s32.totalorder %s19, 1
    %p36 = por %p34, %p35
    %p37 = scmp.ne.s32.totalorder %s29, %s32
    %p38 = scmp.eq.s32.totalorder %s19, 0
    %p39 = por %p37, %p38
    %p40 = scmp.ne.s32.totalorder %s29, %s32
    %p41 = scmp.eq.s32.totalorder %s24, 1
    %p42 = por %p40, %p41
    %p43 = scmp.ne.s32.totalorder %s32, %s33
    %p44 = scmp.eq.s32.totalorder %s24, 0
    %p45 = por %p43, %p44
    %p46 = scmp.ne.s32.totalorder %s32, %s33
    %p47 = scmp.eq.s32.totalorder %s25, 1
    %p48 = por %p46, %p47
    %p50 = scmp.ne.s32.totalorder %s33, %s49
    %p51 = scmp.eq.s32.totalorder %s25, 0
    %p52 = por %p50, %p51
    %s54 = sadd.s32 %s53, 1
    %p57 = scmp.eq.s32.totalorder %s19, 1
    %p58 = scmp.ne.s32.totalorder %s53, %s55
    %p59 = scmp.eq.s32.totalorder %s19, 0
    %p60 = por %p58, %p59
    %p61 = scmp.ne.s32.totalorder %s53, %s55
    %p62 = scmp.eq.s32.totalorder %s24, 1
    %p63 = por %p61, %p62
    %p64 = scmp.ne.s32.totalorder %s55, %s56
    %p65 = scmp.eq.s32.totalorder %s24, 0
    %p66 = por %p64, %p65
    %p67 = scmp.ne.s32.totalorder %s55, %s56
    %p68 = scmp.eq.s32.totalorder %s25, 1
    %p69 = por %p67, %p68
    %p71 = scmp.ne.s32.totalorder %s56, %s70
    %p72 = scmp.eq.s32.totalorder %s25, 0
    %p73 = por %p71, %p72
    %s75 = sadd.s32 %s74, 1
    %p78 = scmp.eq.s32.totalorder %s19, 1
    %p79 = scmp.ne.s32.totalorder %s74, %s76
    %p80 = scmp.eq.s32.totalorder %s19, 0
    %p81 = por %p79, %p80
    %p82 = scmp.ne.s32.totalorder %s74, %s76
    %p83 = scmp.eq.s32.totalorder %s24, 1
    %p84 = por %p82, %p83
    %p85 = scmp.ne.s32.totalorder %s76, %s77
    %p86 = scmp.eq.s32.totalorder %s24, 0
    %p87 = por %p85, %p86
    %p88 = scmp.ne.s32.totalorder %s76, %s77
    %p89 = scmp.eq.s32.totalorder %s25, 1
    %p90 = por %p88, %p89
    %p92 = scmp.ne.s32.totalorder %s77, %s91
    %p93 = scmp.eq.s32.totalorder %s25, 0
    %p94 = por %p92, %p93
    %s96 = sadd.s32 %s95, 1
    %p99 = scmp.eq.s32.totalorder %s19, 1
    %p100 = scmp.ne.s32.totalorder %s95, %s97
    %p101 = scmp.eq.s32.totalorder %s19, 0
    %p102 = por %p100, %p101
    %p103 = scmp.ne.s32.totalorder %s95, %s97
    %p104 = scmp.eq.s32.totalorder %s24, 1
    %p105 = por %p103, %p104
    %p106 = scmp.ne.s32.totalorder %s97, %s98
    %p107 = scmp.eq.s32.totalorder %s24, 0
    %p108 = por %p106, %p107
    %p109 = scmp.ne.s32.totalorder %s97, %s98
    %p110 = scmp.eq.s32.totalorder %s25, 1
    %p111 = por %p109, %p110
    %p113 = scmp.ne.s32.totalorder %s98, %s112
    %p114 = scmp.eq.s32.totalorder %s25, 0
    %p115 = por %p113, %p114
    %s117 = sadd.s32 %s116, 1
    %p120 = scmp.eq.s32.totalorder %s19, 1
    %p121 = scmp.ne.s32.totalorder %s116, %s118
    %p122 = scmp.eq.s32.totalorder %s19, 0
    %p123 = por %p121, %p122
    %p124 = scmp.ne.s32.totalorder %s116, %s118
    %p125 = scmp.eq.s32.totalorder %s24, 1
    %p126 = por %p124, %p125
    %p127 = scmp.ne.s32.totalorder %s118, %s119
    %p128 = scmp.eq.s32.totalorder %s24, 0
    %p129 = por %p127, %p128
    %p130 = scmp.ne.s32.totalorder %s118, %s119
    %p131 = scmp.eq.s32.totalorder %s25, 1
    %p132 = por %p130, %p131
    %p134 = scmp.ne.s32.totalorder %s119, %s133
    %p135 = scmp.eq.s32.totalorder %s25, 0
    %p136 = por %p134, %p135
    %s138 = sadd.s32 %s137, 1
    %p141 = scmp.eq.s32.totalorder %s19, 1
    %p142 = scmp.ne.s32.totalorder %s137, %s139
    %p143 = scmp.eq.s32.totalorder %s19, 0
    %p144 = por %p142, %p143
    %p145 = scmp.ne.s32.totalorder %s137, %s139
    %p146 = scmp.eq.s32.totalorder %s24, 1
    %p147 = por %p145, %p146
    %p148 = scmp.ne.s32.totalorder %s139, %s140
    %p149 = scmp.eq.s32.totalorder %s24, 0
    %p150 = por %p148, %p149
    %p151 = scmp.ne.s32.totalorder %s139, %s140
    %p152 = scmp.eq.s32.totalorder %s25, 1
    %p153 = por %p151, %p152
    %p155 = scmp.ne.s32.totalorder %s140, %s154
    %p156 = scmp.eq.s32.totalorder %s25, 0
    %p157 = por %p155, %p156
    %s159 = sadd.s32 %s158, 1
    %p162 = scmp.eq.s32.totalorder %s19, 1
    %p163 = scmp.ne.s32.totalorder %s158, %s160
    %p164 = scmp.eq.s32.totalorder %s19, 0
    %p165 = por %p163, %p164
    %p166 = scmp.ne.s32.totalorder %s158, %s160
    %p167 = scmp.eq.s32.totalorder %s24, 1
    %p168 = por %p166, %p167
    %p169 = scmp.ne.s32.totalorder %s160, %s161
    %p170 = scmp.eq.s32.totalorder %s24, 0
    %p171 = por %p169, %p170
    %p172 = scmp.ne.s32.totalorder %s160, %s161
    %p173 = scmp.eq.s32.totalorder %s25, 1
    %p174 = por %p172, %p173
    %p176 = scmp.ne.s32.totalorder %s161, %s175
    %p177 = scmp.eq.s32.totalorder %s25, 0
    %p178 = por %p176, %p177
    %s180 = sadd.s32 %s179, 1
    %p183 = scmp.eq.s32.totalorder %s19, 1
    %p184 = scmp.ne.s32.totalorder %s179, %s181
    %p185 = scmp.eq.s32.totalorder %s19, 0
    %p186 = por %p184, %p185
    %p187 = scmp.ne.s32.totalorder %s179, %s181
    %p188 = scmp.eq.s32.totalorder %s24, 1
    %p189 = por %p187, %p188
    %p190 = scmp.ne.s32.totalorder %s181, %s182
    %p191 = scmp.eq.s32.totalorder %s24, 0
    %p192 = por %p190, %p191
    %p193 = scmp.ne.s32.totalorder %s181, %s182
    %p194 = scmp.eq.s32.totalorder %s25, 1
    %p195 = por %p193, %p194
    %p197 = scmp.ne.s32.totalorder %s182, %s196
    %p198 = scmp.eq.s32.totalorder %s25, 0
    %p199 = por %p197, %p198
    %s201 = sadd.s32 %s200, 1
    %p204 = scmp.eq.s32.totalorder %s19, 1
    %p205 = scmp.ne.s32.totalorder %s200, %s202
    %p206 = scmp.eq.s32.totalorder %s19, 0
    %p207 = por %p205, %p206
    %p208 = scmp.ne.s32.totalorder %s200, %s202
    %p209 = scmp.eq.s32.totalorder %s24, 1
    %p210 = por %p208, %p209
    %p211 = scmp.ne.s32.totalorder %s202, %s203
    %p212 = scmp.eq.s32.totalorder %s24, 0
    %p213 = por %p211, %p212
    %p214 = scmp.ne.s32.totalorder %s202, %s203
    %p215 = scmp.eq.s32.totalorder %s25, 1
    %p216 = por %p214, %p215
    %p218 = scmp.ne.s32.totalorder %s203, %s217
    %p219 = scmp.eq.s32.totalorder %s25, 0
    %p220 = por %p218, %p219
    %s222 = sadd.s32 %s221, 1
    %p225 = scmp.eq.s32.totalorder %s19, 1
    %p226 = scmp.ne.s32.totalorder %s221, %s223
    %p227 = scmp.eq.s32.totalorder %s19, 0
    %p228 = por %p226, %p227
    %p229 = scmp.ne.s32.totalorder %s221, %s223
    %p230 = scmp.eq.s32.totalorder %s24, 1
    %p231 = por %p229, %p230
    %p232 = scmp.ne.s32.totalorder %s223, %s224
    %p233 = scmp.eq.s32.totalorder %s24, 0
    %p234 = por %p232, %p233
    %p235 = scmp.ne.s32.totalorder %s223, %s224
    %p236 = scmp.eq.s32.totalorder %s25, 1
    %p237 = por %p235, %p236
    %p239 = scmp.ne.s32.totalorder %s224, %s238
    %p240 = scmp.eq.s32.totalorder %s25, 0
    %p241 = por %p239, %p240
    %s243 = sadd.s32 %s242, 1
    %p246 = scmp.eq.s32.totalorder %s19, 1
    %p247 = scmp.ne.s32.totalorder %s242, %s244
    %p248 = scmp.eq.s32.totalorder %s19, 0
    %p249 = por %p247, %p248
    %p250 = scmp.ne.s32.totalorder %s242, %s244
    %p251 = scmp.eq.s32.totalorder %s24, 1
    %p252 = por %p250, %p251
    %p253 = scmp.ne.s32.totalorder %s244, %s245
    %p254 = scmp.eq.s32.totalorder %s24, 0
    %p255 = por %p253, %p254
    %p256 = scmp.ne.s32.totalorder %s244, %s245
    %p257 = scmp.eq.s32.totalorder %s25, 1
    %p258 = por %p256, %p257
    %p260 = scmp.ne.s32.totalorder %s245, %s259
    %p261 = scmp.eq.s32.totalorder %s25, 0
    %p262 = por %p260, %p261
    %s264 = sadd.s32 %s263, 1
    %p267 = scmp.eq.s32.totalorder %s19, 1
    %p268 = scmp.ne.s32.totalorder %s263, %s265
    %p269 = scmp.eq.s32.totalorder %s19, 0
    %p270 = por %p268, %p269
    %p271 = scmp.ne.s32.totalorder %s263, %s265
    %p272 = scmp.eq.s32.totalorder %s24, 1
    %p273 = por %p271, %p272
    %p274 = scmp.ne.s32.totalorder %s265, %s266
    %p275 = scmp.eq.s32.totalorder %s24, 0
    %p276 = por %p274, %p275
    %p277 = scmp.ne.s32.totalorder %s265, %s266
    %p278 = scmp.eq.s32.totalorder %s25, 1
    %p279 = por %p277, %p278
    %p281 = scmp.ne.s32.totalorder %s266, %s280
    %p282 = scmp.eq.s32.totalorder %s25, 0
    %p283 = por %p281, %p282
    %s285 = sadd.s32 %s284, 1
    %p288 = scmp.eq.s32.totalorder %s19, 1
    %p289 = scmp.ne.s32.totalorder %s284, %s286
    %p290 = scmp.eq.s32.totalorder %s19, 0
    %p291 = por %p289, %p290
    %p292 = scmp.ne.s32.totalorder %s284, %s286
    %p293 = scmp.eq.s32.totalorder %s24, 1
    %p294 = por %p292, %p293
    %p295 = scmp.ne.s32.totalorder %s286, %s287
    %p296 = scmp.eq.s32.totalorder %s24, 0
    %p297 = por %p295, %p296
    %p298 = scmp.ne.s32.totalorder %s286, %s287
    %p299 = scmp.eq.s32.totalorder %s25, 1
    %p300 = por %p298, %p299
    %p302 = scmp.ne.s32.totalorder %s287, %s301
    %p303 = scmp.eq.s32.totalorder %s25, 0
    %p304 = por %p302, %p303
    %s305 = ssub.s32 %s19, %s26
    %p306 = scmp.eq.s32.totalorder %s305, 0
    %s308 = sadd.s32 %s307, 1
    %s309 = scalar_select %p306, %s307, %s308
    %p312 = pneg %p306
    %p313 = scmp.eq.s32.totalorder %s19, 1
    %p314 = por %p312, %p313
    %p315 = scmp.ne.s32.totalorder %s307, %s310
    %p316 = scmp.eq.s32.totalorder %s19, 0
    %p317 = por %p315, %p316
    %p318 = scmp.ne.s32.totalorder %s307, %s310
    %p319 = scmp.eq.s32.totalorder %s24, 1
    %p320 = por %p318, %p319
    %p321 = scmp.ne.s32.totalorder %s310, %s311
    %p322 = scmp.eq.s32.totalorder %s24, 0
    %p323 = por %p321, %p322
    %p324 = scmp.ne.s32.totalorder %s310, %s311
    %p325 = scmp.eq.s32.totalorder %s25, 1
    %p326 = por %p324, %p325
    %p328 = scmp.ne.s32.totalorder %s311, %s327
    %p329 = scmp.eq.s32.totalorder %s25, 0
    %p330 = por %p328, %p329
    %p331 = scmp.le.s32.totalorder 1, %s19
    %p332 = scmp.lt.s32.totalorder %s19, 3
    %p333 = pnand %p331, %p332
    %p334 = pneg %p333
    // Predicated region
    $region9: #{mae_forward.11} parent=5 // pred_check
      _
    $region10: #{mae_forward.11} parent=5 // pred_check_branch
      %336 = sbr.rel (%p333) target = $region12
    $region11: #{mae_forward.11} parent=5 // pred_region
      %s337 = ssub.s32 %s19, 1
      // Predicated region
      $region13: #{mae_forward.11} parent=11 // pred_check
        %p338 = pneg %p66
      $region14: #{mae_forward.11} parent=11 // pred_check_branch
        %340 = sbr.rel (%p338) target = $region16
      $region15: #{mae_forward.11} parent=11 // pred_region
        _
      $region16: #{mae_forward.11} parent=11 // pred_fallthru
        _
      // Predicated region
      $region17: #{mae_forward.11} parent=11 // pred_check
        %p341 = pneg %p87
      $region18: #{mae_forward.11} parent=11 // pred_check_branch
        %343 = sbr.rel (%p341) target = $region20
      $region19: #{mae_forward.11} parent=11 // pred_region
        _
      $region20: #{mae_forward.11} parent=11 // pred_fallthru
        _
      // Predicated region
      $region21: #{mae_forward.11} parent=11 // pred_check
        %p344 = pneg %p108
      $region22: #{mae_forward.11} parent=11 // pred_check_branch
        %346 = sbr.rel (%p344) target = $region24
      $region23: #{mae_forward.11} parent=11 // pred_region
        _
      $region24: #{mae_forward.11} parent=11 // pred_fallthru
        _
      // Predicated region
      $region25: #{mae_forward.11} parent=11 // pred_check
        %p347 = pneg %p129
      $region26: #{mae_forward.11} parent=11 // pred_check_branch
        %349 = sbr.rel (%p347) target = $region28
      $region27: #{mae_forward.11} parent=11 // pred_region
        _
      $region28: #{mae_forward.11} parent=11 // pred_fallthru
        _
      // Predicated region
      $region29: #{mae_forward.11} parent=11 // pred_check
        %p350 = pneg %p150
      $region30: #{mae_forward.11} parent=11 // pred_check_branch
        %352 = sbr.rel (%p350) target = $region32
      $region31: #{mae_forward.11} parent=11 // pred_region
        _
      $region32: #{mae_forward.11} parent=11 // pred_fallthru
        _
      // Predicated region
      $region33: #{mae_forward.11} parent=11 // pred_check
        %p353 = pneg %p171
      $region34: #{mae_forward.11} parent=11 // pred_check_branch
        %355 = sbr.rel (%p353) target = $region36
      $region35: #{mae_forward.11} parent=11 // pred_region
        _
      $region36: #{mae_forward.11} parent=11 // pred_fallthru
        _
      // Predicated region
      $region37: #{mae_forward.11} parent=11 // pred_check
        %p356 = pneg %p192
      $region38: #{mae_forward.11} parent=11 // pred_check_branch
        %358 = sbr.rel (%p356) target = $region40
      $region39: #{mae_forward.11} parent=11 // pred_region
        _
      $region40: #{mae_forward.11} parent=11 // pred_fallthru
        _
      // Predicated region
      $region41: #{mae_forward.11} parent=11 // pred_check
        %p359 = pneg %p213
      $region42: #{mae_forward.11} parent=11 // pred_check_branch
        %361 = sbr.rel (%p359) target = $region44
      $region43: #{mae_forward.11} parent=11 // pred_region
        _
      $region44: #{mae_forward.11} parent=11 // pred_fallthru
        _
      // Predicated region
      $region45: #{mae_forward.11} parent=11 // pred_check
        %p362 = pneg %p234
      $region46: #{mae_forward.11} parent=11 // pred_check_branch
        %364 = sbr.rel (%p362) target = $region48
      $region47: #{mae_forward.11} parent=11 // pred_region
        _
      $region48: #{mae_forward.11} parent=11 // pred_fallthru
        _
      // Predicated region
      $region49: #{mae_forward.11} parent=11 // pred_check
        %p365 = pneg %p255
      $region50: #{mae_forward.11} parent=11 // pred_check_branch
        %367 = sbr.rel (%p365) target = $region52
      $region51: #{mae_forward.11} parent=11 // pred_region
        _
      $region52: #{mae_forward.11} parent=11 // pred_fallthru
        _
      // Predicated region
      $region53: #{mae_forward.11} parent=11 // pred_check
        %p368 = pneg %p276
      $region54: #{mae_forward.11} parent=11 // pred_check_branch
        %370 = sbr.rel (%p368) target = $region56
      $region55: #{mae_forward.11} parent=11 // pred_region
        _
      $region56: #{mae_forward.11} parent=11 // pred_fallthru
        _
      // Predicated region
      $region57: #{mae_forward.11} parent=11 // pred_check
        %p371 = pneg %p297
      $region58: #{mae_forward.11} parent=11 // pred_check_branch
        %373 = sbr.rel (%p371) target = $region60
      $region59: #{mae_forward.11} parent=11 // pred_region
        _
      $region60: #{mae_forward.11} parent=11 // pred_fallthru
        _
    $region12: #{mae_forward.11} parent=5 // pred_fallthru
      _
    %p374 = scmp.lt.s32.totalorder %s19, 2
    // Predicated region
    $region61: #{mae_forward.11} parent=5 // pred_check
      %p375 = pneg %p374
    $region62: #{mae_forward.11} parent=5 // pred_check_branch
      %377 = sbr.rel (%p375) target = $region64
    $region63: #{mae_forward.11} parent=5 // pred_region
      // Predicated region
      $region65: #{mae_forward.11} parent=63 // pred_check
        %p378 = pneg %p39
      $region66: #{mae_forward.11} parent=63 // pred_check_branch
        %380 = sbr.rel (%p378) target = $region68
      $region67: #{mae_forward.11} parent=63 // pred_region
        %p381 = scmp.lt.s32.totalorder %s19, 1
        %s382 = scalar_select %p381, %s19, 1
        %s383 = smul.addr %s382, 8
        %s384 = scalar_lea.vmem %s0, %s383
      $region68: #{mae_forward.11} parent=63 // pred_fallthru
        _
    $region64: #{mae_forward.11} parent=5 // pred_fallthru
      _
    %p385 = scmp.le.s32.totalorder 1, %s19
    %p386 = scmp.lt.s32.totalorder %s19, 3
    %p387 = pnand %p385, %p386
    %p388 = pneg %p387
    // Predicated region
    $region69: #{mae_forward.11} parent=5 // pred_check
      _
    $region70: #{mae_forward.11} parent=5 // pred_check_branch
      %390 = sbr.rel (%p387) target = $region72
    $region71: #{mae_forward.11} parent=5 // pred_region
      %s391 = ssub.s32 %s19, 1
      %p392 = scmp.lt.s32.totalorder %s24, 1
      %s393 = scalar_select %p392, %s24, 1
      %s394 = smul.addr %s393, 8
      %s395 = scalar_lea.vmem %s0, %s394
      %p396 = pneg %p45
      %p397 = pneg %p42
      %p398 = pneg %p66
      %p399 = pneg %p63
      %p400 = pneg %p87
      %p401 = pneg %p84
      %p402 = pneg %p108
      %p403 = pneg %p105
      %p404 = pneg %p129
      %p405 = pneg %p126
      %p406 = pneg %p150
      %p407 = pneg %p147
      %p408 = pneg %p171
      %p409 = pneg %p168
      %p410 = pneg %p192
      %p411 = pneg %p189
      %p412 = pneg %p213
      %p413 = pneg %p210
      %p414 = pneg %p234
      %p415 = pneg %p231
      %p416 = pneg %p255
      %p417 = pneg %p252
      %p418 = pneg %p276
      %p419 = pneg %p273
      %p420 = pneg %p297
      %p421 = pneg %p294
      %p422 = pneg %p323
      %p423 = pneg %p320
      %p424 = scmp.lt.s32.totalorder %s24, 1
      %s425 = scalar_select %p424, %s24, 1
      %s426 = smul.addr %s425, 8
      %s427 = scalar_lea.vmem %s13, %s426
      %p428 = scmp.lt.s32.totalorder %s24, 1
      %s429 = scalar_select %p428, %s24, 1
      %s430 = smul.addr %s429, 8
      %s431 = scalar_lea.vmem %s0, %s430
      %p432 = scmp.lt.s32.totalorder %s24, 1
      %s433 = scalar_select %p432, %s24, 1
      %s434 = smul.addr %s433, 8
      %s435 = scalar_lea.vmem %s13, %s434
      %v437 = vld [vmem:[%s431] sm:$0xff]
      %v438 = vld [vmem:[%s1] sm:$0x1]
      %v439 = vld [vmem:[%s2] sm:$0x1]
      %vm440 = vcmask 130048
      %v441 = vsel %vm440, %v437, 0.0
      %442 = vadd.xlane.f32.xlu0 %v441
      %v443 = vpop.xlane.xlu0 %442
      %v444 = vrcp.pop 16.0
      %v445 = vmul.f32 16.0, %v444
      %v446 = vsub.f32 1.0, %v445
      %v447 = vmul.f32 %v444, %v446
      %v448 = vadd.f32 %v444, %v447
      %vm449 = vweird.f32 %v444
      %v450 = vsel %vm449, %v444, %v448
      %v451 = vmul.f32 %v443, %v450
      %v452 = vsub.f32 %v437, %v451
      %v453 = vmul.f32 %v452, %v452
      %v454 = vsel %vm440, %v453, 0.0
      %455 = vadd.xlane.f32.xlu0 %v454
      %v456 = vpop.xlane.xlu0 %455
      %v457 = vmul.f32 %v456, %v450
      %v458 = vadd.f32 %v457, 1e-05
      %v459 = vrsqrt.pop %v458
      %v460 = vmul.f32 %v459, %v458
      %v461 = vmul.f32 %v460, %v459
      %v462 = vmul.f32 0.5, %v461
      %v463 = vsub.f32 1.5, %v462
      %v464 = vmul.f32 %v459, %v463
      %vm465 = vweird.f32 %v458
      %vm466 = vweird.f32 %v459
      %vm467 = vmor %vm465, %vm466
      %v468 = vsel %vm467, %v459, %v464
      %v469 = vmul.f32 %v452, %v468
      %v471 = vperm.slane %v438, 0
      %v473 = vmul.f32 %v469, %v471
      %v475 = vperm.slane %v439, 0
      %v477 = vadd.f32 %v473, %v475
      %v478 = vpack.c.bf16 %v477, %v477
      %v479 = vld [vmem:[%s3] sm:$0xf]
      %v480 = vld [vmem:[%s3 + $0x4] sm:$0xf]
      %v481 = vld [vmem:[%s4] sm:$0x1]
      %v483 = vperm.slane %v481, 0
      %v487 = vunpack.c.l.b16 %v479
      %v488 = vunpack.c.l.b16 %v480
      %v489 = vpack.c.b16 %v488, %v487
      %v492 = vsel %vm440, %v478, 0
      %494 = vmatpush.bf16.msra.mxu0 0
      %495 = vmatpush.bf16.msra.mxu0 0
      %496 = vmatpush.bf16.msra.mxu0 0
      %497 = vmatpush.bf16.msra.mxu0 0
      %498 = vmatpush.bf16.msra.mxu0 0
      %499 = vmatpush.bf16.msra.mxu0 0
      %500 = vmatpush.bf16.msra.mxu0 0
      %501 = vmatpush.bf16.msra.mxu0 %v489
      %502 = vmatmul.bf16.gmra.mxu0 %v492
      %v503 = vpop.f32.mrf.mxu0
      %v504 = vadd.f32 %v483, %v503
      %v505 = vpop.f32.mrf.mxu0
      %506 = vdwg.mxu0
      %508 = vrot.lane.b32.xlu0 %v504, 112
      %v509 = vpop.permute.xlu0 %508
      %vm510 = vcmask 31744
      %v511 = vsel %vm510, %v504, 0
      %v513 = vsel %vm510, %v509, 0
      %515 = vmatpush.xpose.msra.mxu0 0.0
      %516 = vmatpush.xpose.msra.mxu0 0.0
      %517 = vmatpush.xpose.msra.mxu0 0.0
      %518 = vmatpush.xpose.msra.mxu0 0.0
      %519 = vmatpush.xpose.msra.mxu0 0.0
      %520 = vmatpush.xpose.msra.mxu0 0.0
      %521 = vmatpush.xpose.msra.mxu0 0.0
      %522 = vmatpush.xpose.msra.mxu0 0.0
      %523 = vmatpush.xpose.msra.mxu0 0.0
      %524 = vmatpush.xpose.msra.mxu0 0.0
      %525 = vmatpush.xpose.msra.mxu0 0.0
      %526 = vmatpush.xpose.msra.mxu0 0.0
      %527 = vmatpush.xpose.msra.mxu0 0.0
      %528 = vmatpush.xpose.msra.mxu0 0.0
      %529 = vmatpush.xpose.msra.mxu0 0.0
      %530 = vmatpush.xpose.msra.mxu0 %v513
      %531 = vmatmul.f32.gmra.mxu0 %v511
      %v532 = vpop.f32.mrf.mxu0
      %v533 = vadd.f32 0.0, %v532
      %534 = vdwg.mxu0
      %v535 = vmul.f32 %v533, 0.5
      %vm536 = vcmask 64512
      %v537 = vsel %vm536, %v535, -inf
      %538 = vmax.xlane.f32.xlu0 %v537
      %v539 = vpop.xlane.xlu0 %538
      %v540 = vsub.f32 %v535, %v539
      %v541 = vmul.f32 %v540, 1.442695
      %v542 = vpow.pop %v541
      %v543 = vsel %vm536, %v542, 0.0
      %544 = vadd.xlane.f32.xlu0 %v543
      %v545 = vpop.xlane.xlu0 %544
      %v546 = vrcp.pop %v545
      %v547 = vmul.f32 %v545, %v546
      %v548 = vsub.f32 1.0, %v547
      %v549 = vmul.f32 %v546, %v548
      %v550 = vadd.f32 %v546, %v549
      %vm551 = vweird.f32 %v545
      %vm552 = vweird.f32 %v546
      %vm553 = vmor %vm551, %vm552
      %v554 = vsel %vm553, %v546, %v550
      %v555 = vand.u32 2147483647, %v545
      %vm556 = vcmp.eq.f32.partialorder %v555, 8.507059e+37
      %v557 = vand.u32 %v545, 2147483648
      %v558 = vor.u32 1.1754944e-38, %v557
      %v559 = vsel %vm556, %v558, %v554
      %v560 = vmul.f32 %v542, %v559
      %561 = vrot.lane.b32.xlu0 %v504, 96
      %v562 = vpop.permute.xlu0 %561
      %v565 = vsel %vm536, %v560, 0
      %567 = vmatpush.msra.mxu0 0.0
      %568 = vmatpush.msra.mxu0 0.0
      %569 = vmatpush.msra.mxu0 0.0
      %570 = vmatpush.msra.mxu0 0.0
      %571 = vmatpush.msra.mxu0 0.0
      %572 = vmatpush.msra.mxu0 0.0
      %573 = vmatpush.msra.mxu0 0.0
      %574 = vmatpush.msra.mxu0 0.0
      %575 = vmatpush.msra.mxu0 0.0
      %576 = vmatpush.msra.mxu0 0.0
      %577 = vmatpush.msra.mxu0 0.0
      %578 = vmatpush.msra.mxu0 0.0
      %579 = vmatpush.msra.mxu0 0.0
      %580 = vmatpush.msra.mxu0 0.0
      %581 = vmatpush.msra.mxu0 0.0
      %582 = vmatpush.msra.mxu0 %v562
      %583 = vmatmul.f32.gmra.mxu0 %v565
      %v584 = vpop.f32.mrf.mxu0
      %v585 = vadd.f32 0.0, %v584
      %586 = vdwg.mxu0
      %587 = vrot.lane.b32.xlu0 %v504, 124
      %v588 = vpop.permute.xlu0 %587
      %589 = vrot.lane.b32.xlu0 %v504, 108
      %v590 = vpop.permute.xlu0 %589
      %v591 = vsel %vm510, %v588, 0
      %v593 = vsel %vm510, %v590, 0
      %595 = vmatpush.xpose.msra.mxu0 0.0
      %596 = vmatpush.xpose.msra.mxu0 0.0
      %597 = vmatpush.xpose.msra.mxu0 0.0
      %598 = vmatpush.xpose.msra.mxu0 0.0
      %599 = vmatpush.xpose.msra.mxu0 0.0
      %600 = vmatpush.xpose.msra.mxu0 0.0
      %601 = vmatpush.xpose.msra.mxu0 0.0
      %602 = vmatpush.xpose.msra.mxu0 0.0
      %603 = vmatpush.xpose.msra.mxu0 0.0
      %604 = vmatpush.xpose.msra.mxu0 0.0
      %605 = vmatpush.xpose.msra.mxu0 0.0
      %606 = vmatpush.xpose.msra.mxu0 0.0
      %607 = vmatpush.xpose.msra.mxu0 0.0
      %608 = vmatpush.xpose.msra.mxu0 0.0
      %609 = vmatpush.xpose.msra.mxu0 0.0
      %610 = vmatpush.xpose.msra.mxu0 %v593
      %611 = vmatmul.f32.gmra.mxu0 %v591
      %v612 = vpop.f32.mrf.mxu0
      %v613 = vadd.f32 0.0, %v612
      %614 = vdwg.mxu0
      %v615 = vmul.f32 %v613, 0.5
      %v616 = vsel %vm536, %v615, -inf
      %617 = vmax.xlane.f32.xlu0 %v616
      %v618 = vpop.xlane.xlu0 %617
      %v619 = vsub.f32 %v615, %v618
      %v620 = vmul.f32 %v619, 1.442695
      %v621 = vpow.pop %v620
      %v622 = vsel %vm536, %v621, 0.0
      %623 = vadd.xlane.f32.xlu0 %v622
      %v624 = vpop.xlane.xlu0 %623
      %v625 = vrcp.pop %v624
      %v626 = vmul.f32 %v624, %v625
      %v627 = vsub.f32 1.0, %v626
      %v628 = vmul.f32 %v625, %v627
      %v629 = vadd.f32 %v625, %v628
      %vm630 = vweird.f32 %v624
      %vm631 = vweird.f32 %v625
      %vm632 = vmor %vm630, %vm631
      %v633 = vsel %vm632, %v625, %v629
      %v634 = vand.u32 2147483647, %v624
      %vm635 = vcmp.eq.f32.partialorder %v634, 8.507059e+37
      %v636 = vand.u32 %v624, 2147483648
      %v637 = vor.u32 1.1754944e-38, %v636
      %v638 = vsel %vm635, %v637, %v633
      %v639 = vmul.f32 %v621, %v638
      %640 = vrot.lane.b32.xlu0 %v504, 92
      %v641 = vpop.permute.xlu0 %640
      %v644 = vsel %vm536, %v639, 0
      %646 = vmatpush.msra.mxu0 0.0
      %647 = vmatpush.msra.mxu0 0.0
      %648 = vmatpush.msra.mxu0 0.0
      %649 = vmatpush.msra.mxu0 0.0
      %650 = vmatpush.msra.mxu0 0.0
      %651 = vmatpush.msra.mxu0 0.0
      %652 = vmatpush.msra.mxu0 0.0
      %653 = vmatpush.msra.mxu0 0.0
      %654 = vmatpush.msra.mxu0 0.0
      %655 = vmatpush.msra.mxu0 0.0
      %656 = vmatpush.msra.mxu0 0.0
      %657 = vmatpush.msra.mxu0 0.0
      %658 = vmatpush.msra.mxu0 0.0
      %659 = vmatpush.msra.mxu0 0.0
      %660 = vmatpush.msra.mxu0 0.0
      %661 = vmatpush.msra.mxu0 %v641
      %662 = vmatmul.f32.gmra.mxu0 %v644
      %v663 = vpop.f32.mrf.mxu0
      %v664 = vadd.f32 0.0, %v663
      %665 = vdwg.mxu0
      %666 = vrot.lane.b32.xlu0 %v504, 120
      %v667 = vpop.permute.xlu0 %666
      %668 = vrot.lane.b32.xlu0 %v504, 104
      %v669 = vpop.permute.xlu0 %668
      %v670 = vsel %vm510, %v667, 0
      %v672 = vsel %vm510, %v669, 0
      %674 = vmatpush.xpose.msra.mxu0 0.0
      %675 = vmatpush.xpose.msra.mxu0 0.0
      %676 = vmatpush.xpose.msra.mxu0 0.0
      %677 = vmatpush.xpose.msra.mxu0 0.0
      %678 = vmatpush.xpose.msra.mxu0 0.0
      %679 = vmatpush.xpose.msra.mxu0 0.0
      %680 = vmatpush.xpose.msra.mxu0 0.0
      %681 = vmatpush.xpose.msra.mxu0 0.0
      %682 = vmatpush.xpose.msra.mxu0 0.0
      %683 = vmatpush.xpose.msra.mxu0 0.0
      %684 = vmatpush.xpose.msra.mxu0 0.0
      %685 = vmatpush.xpose.msra.mxu0 0.0
      %686 = vmatpush.xpose.msra.mxu0 0.0
      %687 = vmatpush.xpose.msra.mxu0 0.0
      %688 = vmatpush.xpose.msra.mxu0 0.0
      %689 = vmatpush.xpose.msra.mxu0 %v672
      %690 = vmatmul.f32.gmra.mxu0 %v670
      %v691 = vpop.f32.mrf.mxu0
      %v692 = vadd.f32 0.0, %v691
      %693 = vdwg.mxu0
      %v694 = vmul.f32 %v692, 0.5
      %v695 = vsel %vm536, %v694, -inf
      %696 = vmax.xlane.f32.xlu0 %v695
      %v697 = vpop.xlane.xlu0 %696
      %v698 = vsub.f32 %v694, %v697
      %v699 = vmul.f32 %v698, 1.442695
      %v700 = vpow.pop %v699
      %v701 = vsel %vm536, %v700, 0.0
      %702 = vadd.xlane.f32.xlu0 %v701
      %v703 = vpop.xlane.xlu0 %702
      %v704 = vrcp.pop %v703
      %v705 = vmul.f32 %v703, %v704
      %v706 = vsub.f32 1.0, %v705
      %v707 = vmul.f32 %v704, %v706
      %v708 = vadd.f32 %v704, %v707
      %vm709 = vweird.f32 %v703
      %vm710 = vweird.f32 %v704
      %vm711 = vmor %vm709, %vm710
      %v712 = vsel %vm711, %v704, %v708
      %v713 = vand.u32 2147483647, %v703
      %vm714 = vcmp.eq.f32.partialorder %v713, 8.507059e+37
      %v715 = vand.u32 %v703, 2147483648
      %v716 = vor.u32 1.1754944e-38, %v715
      %v717 = vsel %vm714, %v716, %v712
      %v718 = vmul.f32 %v700, %v717
      %719 = vrot.lane.b32.xlu0 %v504, 88
      %v720 = vpop.permute.xlu0 %719
      %v723 = vsel %vm536, %v718, 0
      %725 = vmatpush.msra.mxu0 0.0
      %726 = vmatpush.msra.mxu0 0.0
      %727 = vmatpush.msra.mxu0 0.0
      %728 = vmatpush.msra.mxu0 0.0
      %729 = vmatpush.msra.mxu0 0.0
      %730 = vmatpush.msra.mxu0 0.0
      %731 = vmatpush.msra.mxu0 0.0
      %732 = vmatpush.msra.mxu0 0.0
      %733 = vmatpush.msra.mxu0 0.0
      %734 = vmatpush.msra.mxu0 0.0
      %735 = vmatpush.msra.mxu0 0.0
      %736 = vmatpush.msra.mxu0 0.0
      %737 = vmatpush.msra.mxu0 0.0
      %738 = vmatpush.msra.mxu0 0.0
      %739 = vmatpush.msra.mxu0 0.0
      %740 = vmatpush.msra.mxu0 %v720
      %741 = vmatmul.f32.gmra.mxu0 %v723
      %v742 = vpop.f32.mrf.mxu0
      %v743 = vadd.f32 0.0, %v742
      %744 = vdwg.mxu0
      %745 = vrot.lane.b32.xlu0 %v504, 116
      %v746 = vpop.permute.xlu0 %745
      %747 = vrot.lane.b32.xlu0 %v504, 100
      %v748 = vpop.permute.xlu0 %747
      %v749 = vsel %vm510, %v746, 0
      %v751 = vsel %vm510, %v748, 0
      %753 = vmatpush.xpose.msra.mxu0 0.0
      %754 = vmatpush.xpose.msra.mxu0 0.0
      %755 = vmatpush.xpose.msra.mxu0 0.0
      %756 = vmatpush.xpose.msra.mxu0 0.0
      %757 = vmatpush.xpose.msra.mxu0 0.0
      %758 = vmatpush.xpose.msra.mxu0 0.0
      %759 = vmatpush.xpose.msra.mxu0 0.0
      %760 = vmatpush.xpose.msra.mxu0 0.0
      %761 = vmatpush.xpose.msra.mxu0 0.0
      %762 = vmatpush.xpose.msra.mxu0 0.0
      %763 = vmatpush.xpose.msra.mxu0 0.0
      %764 = vmatpush.xpose.msra.mxu0 0.0
      %765 = vmatpush.xpose.msra.mxu0 0.0
      %766 = vmatpush.xpose.msra.mxu0 0.0
      %767 = vmatpush.xpose.msra.mxu0 0.0
      %768 = vmatpush.xpose.msra.mxu0 %v751
      %769 = vmatmul.f32.gmra.mxu0 %v749
      %v770 = vpop.f32.mrf.mxu0
      %v771 = vadd.f32 0.0, %v770
      %772 = vdwg.mxu0
      %v773 = vmul.f32 %v771, 0.5
      %v774 = vsel %vm536, %v773, -inf
      %775 = vmax.xlane.f32.xlu0 %v774
      %v776 = vpop.xlane.xlu0 %775
      %v777 = vsub.f32 %v773, %v776
      %v778 = vmul.f32 %v777, 1.442695
      %v779 = vpow.pop %v778
      %v780 = vsel %vm536, %v779, 0.0
      %781 = vadd.xlane.f32.xlu0 %v780
      %v782 = vpop.xlane.xlu0 %781
      %v783 = vrcp.pop %v782
      %v784 = vmul.f32 %v782, %v783
      %v785 = vsub.f32 1.0, %v784
      %v786 = vmul.f32 %v783, %v785
      %v787 = vadd.f32 %v783, %v786
      %vm788 = vweird.f32 %v782
      %vm789 = vweird.f32 %v783
      %vm790 = vmor %vm788, %vm789
      %v791 = vsel %vm790, %v783, %v787
      %v792 = vand.u32 2147483647, %v782
      %vm793 = vcmp.eq.f32.partialorder %v792, 8.507059e+37
      %v794 = vand.u32 %v782, 2147483648
      %v795 = vor.u32 1.1754944e-38, %v794
      %v796 = vsel %vm793, %v795, %v791
      %v797 = vmul.f32 %v779, %v796
      %798 = vrot.lane.b32.xlu0 %v504, 84
      %v799 = vpop.permute.xlu0 %798
      %v802 = vsel %vm536, %v797, 0
      %804 = vmatpush.msra.mxu0 0.0
      %805 = vmatpush.msra.mxu0 0.0
      %806 = vmatpush.msra.mxu0 0.0
      %807 = vmatpush.msra.mxu0 0.0
      %808 = vmatpush.msra.mxu0 0.0
      %809 = vmatpush.msra.mxu0 0.0
      %810 = vmatpush.msra.mxu0 0.0
      %811 = vmatpush.msra.mxu0 0.0
      %812 = vmatpush.msra.mxu0 0.0
      %813 = vmatpush.msra.mxu0 0.0
      %814 = vmatpush.msra.mxu0 0.0
      %815 = vmatpush.msra.mxu0 0.0
      %816 = vmatpush.msra.mxu0 0.0
      %817 = vmatpush.msra.mxu0 0.0
      %818 = vmatpush.msra.mxu0 0.0
      %819 = vmatpush.msra.mxu0 %v799
      %820 = vmatmul.f32.gmra.mxu0 %v802
      %v821 = vpop.f32.mrf.mxu0
      %v822 = vadd.f32 0.0, %v821
      %823 = vdwg.mxu0
      %825 = vrot.lane.b32.xlu0 %v664, 4
      %v826 = vpop.permute.xlu0 %825
      %829 = vrot.lane.b32.xlu0 %v743, 8
      %v830 = vpop.permute.xlu0 %829
      %833 = vrot.lane.b32.xlu0 %v822, 12
      %v834 = vpop.permute.xlu0 %833
      %v836 = vsel %vm510, %v585, %v826
      %v837 = vsel %vm536, %v836, %v830
      %vm838 = vcmask 97280
      %v839 = vsel %vm838, %v837, %v834
      %v840 = vpack.c.bf16 %v839, %v839
      %v841 = vld [vmem:[%s5] sm:$0xf]
      %v842 = vld [vmem:[%s5 + $0x4] sm:$0xf]
      %v843 = vld [vmem:[%s6] sm:$0x1]
      %v845 = vperm.slane %v843, 0
      %v849 = vunpack.c.l.b16 %v841
      %v850 = vunpack.c.l.b16 %v842
      %v851 = vpack.c.b16 %v850, %v849
      %v854 = vsel %vm440, %v840, 0
      %856 = vmatpush.bf16.msra.mxu0 0
      %857 = vmatpush.bf16.msra.mxu0 0
      %858 = vmatpush.bf16.msra.mxu0 0
      %859 = vmatpush.bf16.msra.mxu0 0
      %860 = vmatpush.bf16.msra.mxu0 0
      %861 = vmatpush.bf16.msra.mxu0 0
      %862 = vmatpush.bf16.msra.mxu0 0
      %863 = vmatpush.bf16.msra.mxu0 %v851
      %864 = vmatmul.bf16.gmra.mxu0 %v854
      %v865 = vpop.f32.mrf.mxu0
      %v866 = vadd.f32 %v845, %v865
      %v867 = vpop.f32.mrf.mxu0
      %868 = vdwg.mxu0
      %v869 = vadd.f32 %v437, %v866
      %v870 = vld [vmem:[%s7] sm:$0x1]
      %v871 = vld [vmem:[%s8] sm:$0x1]
      %v872 = vsel %vm440, %v869, 0.0
      %873 = vadd.xlane.f32.xlu0 %v872
      %v874 = vpop.xlane.xlu0 %873
      %v875 = vmul.f32 %v874, %v450
      %v876 = vsub.f32 %v869, %v875
      %v877 = vmul.f32 %v876, %v876
      %v878 = vsel %vm440, %v877, 0.0
      %879 = vadd.xlane.f32.xlu0 %v878
      %v880 = vpop.xlane.xlu0 %879
      %v881 = vmul.f32 %v880, %v450
      %v882 = vadd.f32 %v881, 1e-05
      %v883 = vrsqrt.pop %v882
      %v884 = vmul.f32 %v883, %v882
      %v885 = vmul.f32 %v884, %v883
      %v886 = vmul.f32 0.5, %v885
      %v887 = vsub.f32 1.5, %v886
      %v888 = vmul.f32 %v883, %v887
      %vm889 = vweird.f32 %v882
      %vm890 = vweird.f32 %v883
      %vm891 = vmor %vm889, %vm890
      %v892 = vsel %vm891, %v883, %v888
      %v893 = vmul.f32 %v876, %v892
      %v895 = vperm.slane %v870, 0
      %v897 = vmul.f32 %v893, %v895
      %v899 = vperm.slane %v871, 0
      %v901 = vadd.f32 %v897, %v899
      %v902 = vpack.c.bf16 %v901, %v901
      %v903 = vld [vmem:[%s9] sm:$0xf]
      %v904 = vld [vmem:[%s9 + $0x4] sm:$0xf]
      %v905 = vld [vmem:[%s10] sm:$0x1]
      %v907 = vperm.slane %v905, 0
      %v911 = vunpack.c.l.b16 %v903
      %v912 = vunpack.c.l.b16 %v904
      %v913 = vpack.c.b16 %v912, %v911
      %v916 = vsel %vm440, %v902, 0
      %918 = vmatpush.bf16.msra.mxu0 0
      %919 = vmatpush.bf16.msra.mxu0 0
      %920 = vmatpush.bf16.msra.mxu0 0
      %921 = vmatpush.bf16.msra.mxu0 0
      %922 = vmatpush.bf16.msra.mxu0 0
      %923 = vmatpush.bf16.msra.mxu0 0
      %924 = vmatpush.bf16.msra.mxu0 0
      %925 = vmatpush.bf16.msra.mxu0 %v913
      %926 = vmatmul.bf16.gmra.mxu0 %v916
      %v927 = vpop.f32.mrf.mxu0
      %v928 = vadd.f32 %v907, %v927
      %v929 = vpop.f32.mrf.mxu0
      %930 = vdwg.mxu0
      %v931 = vmul.f32 %v928, 0.5
      %v932 = vmul.f32 %v928, 0.70710677
      %vm933 = vcmp.ge.f32.partialorder %v932, 0.0
      %v934 = vsel %vm933, 1.0, -1.0
      %v935 = vand.u32 2147483647, %v932
      %v936 = vmul.f32 %v935, 0.3275911
      %v937 = vadd.f32 %v936, 1.0
      %v938 = vrcp.pop %v937
      %v939 = vmul.f32 %v937, %v938
      %v940 = vsub.f32 1.0, %v939
      %v941 = vmul.f32 %v938, %v940
      %v942 = vadd.f32 %v938, %v941
      %vm943 = vweird.f32 %v937
      %vm944 = vweird.f32 %v938
      %vm945 = vmor %vm943, %vm944
      %v946 = vsel %vm945, %v938, %v942
      %v947 = vand.u32 2147483647, %v937
      %vm948 = vcmp.eq.f32.partialorder %v947, 8.507059e+37
      %v949 = vand.u32 %v937, 2147483648
      %v950 = vor.u32 1.1754944e-38, %v949
      %v951 = vsel %vm948, %v950, %v946
      %v952 = vmul.f32 1.0, %v951
      %v953 = vmul.f32 %v952, 1.0614054
      %v954 = vadd.f32 %v953, -1.4531521
      %v955 = vmul.f32 %v954, %v952
      %v956 = vadd.f32 %v955, 1.4214138
      %v957 = vmul.f32 %v956, %v952
      %v958 = vadd.f32 %v957, -0.28449672
      %v959 = vmul.f32 %v958, %v952
      %v960 = vadd.f32 %v959, 0.2548296
      %v961 = vmul.f32 %v960, %v952
      %v962 = vsub.f32 0.0, %v935
      %v963 = vmul.f32 %v962, %v935
      %v964 = vmul.f32 %v963, 1.442695
      %v965 = vpow.pop %v964
      %v966 = vmul.f32 %v961, %v965
      %v967 = vsub.f32 1.0, %v966
      %v968 = vmul.f32 %v934, %v967
      %v969 = vadd.f32 %v968, 1.0
      %v970 = vmul.f32 %v931, %v969
      %v971 = vpack.c.bf16 %v970, %v970
      %v972 = vld [vmem:[%s11] sm:$0xf]
      %v973 = vld [vmem:[%s11 + $0x4] sm:$0xf]
      %v974 = vld [vmem:[%s11 + $0x8] sm:$0xf]
      %v975 = vld [vmem:[%s11 + $0xc] sm:$0xf]
      %v976 = vld [vmem:[%s11 + $0x10] sm:$0xf]
      %v977 = vld [vmem:[%s11 + $0x14] sm:$0xf]
      %v978 = vld [vmem:[%s11 + $0x18] sm:$0xf]
      %v979 = vld [vmem:[%s11 + $0x1c] sm:$0xf]
      %v980 = vld [vmem:[%s12] sm:$0x1]
      %v982 = vperm.slane %v980, 0
      %v992 = vunpack.c.l.b16 %v972
      %v993 = vunpack.c.l.b16 %v973
      %v994 = vunpack.c.l.b16 %v974
      %v995 = vunpack.c.l.b16 %v975
      %v996 = vunpack.c.l.b16 %v976
      %v997 = vunpack.c.l.b16 %v977
      %v998 = vunpack.c.l.b16 %v978
      %v999 = vunpack.c.l.b16 %v979
      %v1000 = vpack.c.b16 %v993, %v992
      %v1001 = vpack.c.b16 %v995, %v994
      %v1002 = vpack.c.b16 %v997, %v996
      %v1003 = vpack.c.b16 %v999, %v998
      %vm1008 = vcmask 523264
      %v1010 = vsel %vm1008, %v971, 0
      %1012 = vmatpush.bf16.msra.mxu0 0
      %1013 = vmatpush.bf16.msra.mxu0 0
      %1014 = vmatpush.bf16.msra.mxu0 0
      %1015 = vmatpush.bf16.msra.mxu0 0
      %1016 = vmatpush.bf16.msra.mxu0 %v1003
      %1017 = vmatpush.bf16.msra.mxu0 %v1002
      %1018 = vmatpush.bf16.msra.mxu0 %v1001
      %1019 = vmatpush.bf16.msra.mxu0 %v1000
      %1020 = vmatmul.bf16.gmra.mxu0 %v1010
      %v1021 = vpop.f32.mrf.mxu0
      %v1022 = vadd.f32 %v982, %v1021
      %v1023 = vpop.f32.mrf.mxu0
      %1024 = vdwg.mxu0
      %v1025 = vadd.f32 %v869, %v1022
      %1026 = vst.msk [vmem:[%s435] sm:$0xff] %vm440, %v1025
      %p1027 = scmp.lt.s32.totalorder %s24, 1
      %s1028 = scalar_select %p1027, %s24, 1
      %s1029 = smul.addr %s1028, 8
      %s1030 = scalar_lea.vmem %s13, %s1029
      // Predicated region
      $region73: #{mae_forward.11} parent=71 // pred_check
        %p1031 = pneg %p320
      $region74: #{mae_forward.11} parent=71 // pred_check_branch
        %1033 = sbr.rel (%p1031) target = $region76
      $region75: #{mae_forward.11} parent=71 // pred_region
        _
      $region76: #{mae_forward.11} parent=71 // pred_fallthru
        _
    $region72: #{mae_forward.11} parent=5 // pred_fallthru
      _
    %p1034 = scmp.le.s32.totalorder 2, %s19
    // Predicated region
    $region77: #{mae_forward.11} parent=5 // pred_check
      %p1035 = pneg %p1034
    $region78: #{mae_forward.11} parent=5 // pred_check_branch
      %1037 = sbr.rel (%p1035) target = $region80
    $region79: #{mae_forward.11} parent=5 // pred_region
      %s1038 = ssub.s32 %s19, 2
      // Predicated region
      $region81: #{mae_forward.11} parent=79 // pred_check
        %p1039 = pneg %p326
      $region82: #{mae_forward.11} parent=79 // pred_check_branch
        %1041 = sbr.rel (%p1039) target = $region84
      $region83: #{mae_forward.11} parent=79 // pred_region
        %p1042 = scmp.lt.s32.totalorder %s25, 1
        %s1043 = scalar_select %p1042, %s25, 1
        %s1044 = smul.addr %s1043, 8
        %s1045 = scalar_lea.vmem %s13, %s1044
      $region84: #{mae_forward.11} parent=79 // pred_fallthru
        _
    $region80: #{mae_forward.11} parent=5 // pred_fallthru
      _
  $region6: #{mae_forward.11} parent=0 // loop_footer
    %s23 = sadd.s32 1, %s19
  $region7: #{mae_forward.11} parent=0 // loop_footer_branch
    %18 = sbr.rel target = $region3
  $region8: #{mae_forward.11} parent=0 // loop_exit
    _

// kernel: mae_forward.13
$region0: #{mae_forward.13}
  #allocation0 [shape = 'u32[]', space=smem, size = 0x4, offset = 0x4, fixed_abs, tag = 'smem constant byte address 0x4 - core index']
  #allocation1 [shape = 'u32[72,128]{1,0:T(1,128)}', space=vmem, size = 0x9000, scoped, tag = 'internal scratch']
  %s0 = inlined_call_operand.vmem [shape: f32[16,16], index: 0, kind: input, shape index: {}]
  %s1 = inlined_call_operand.vmem [shape: f32[1,16], index: 1, kind: input, shape index: {}]
  %s2 = inlined_call_operand.vmem [shape: f32[1,16], index: 2, kind: input, shape index: {}]
  %s3 = inlined_call_operand.vmem [shape: bf16[16,384], index: 3, kind: input, shape index: {}]
  %s4 = inlined_call_operand.vmem [shape: f32[1,384], index: 4, kind: input, shape index: {}]
  %s5 = inlined_call_operand.vmem [shape: f32[16,384], index: 5, kind: input, shape index: {}]
  %s6 = inlined_call_operand.vmem [shape: f32[16,1], index: 6, kind: input, shape index: {}]
  %s7 = inlined_call_operand.hbm [shape: f32[16,384], index: 7, kind: output, shape index: {0}]
  %s8 = inlined_call_operand.hbm [shape: f32[1,1], index: 8, kind: output, shape index: {1}]
  %9 = xla_tuple %s7, %s8
  %s10 = sld [smem:[#allocation0]]
  $region46: #{mae_forward.13} parent=0
    _
  %s12 = ssub.s32 1, %s10
  %s13 = scalar_select 0, %s12, %s10
  $region1: #{mae_forward.13} parent=0
    #allocation2 [shape = 'u8[24576]{0}', space=vmem, size = 0x6000, scoped, tag = 'output window, operand 0, single buffered']
    #allocation3 [shape = 's32[1]{0}', space=sflag, size = 0x4, scoped, tag = 'scoped memory for mae_forward.13']
    #allocation4 [shape = 'u8[512]{0}', space=vmem, size = 0x400, scoped, tag = 'output window, operand 1, single buffered']
    #allocation5 [shape = 's32[1]{0}', space=sflag, size = 0x4, scoped, tag = 'scoped memory for mae_forward.13']
    %14 = vsyncpa [#allocation3], 0
    %15 = vsyncpa [#allocation5], 0
    // Predicated region
    $region2: #{mae_forward.13} parent=1 // pred_check
      _
    $region3: #{mae_forward.13} parent=1 // pred_check_branch
      %17 = sbr.rel (0) target = $region5
    $region4: #{mae_forward.13} parent=1 // pred_region
      _
    $region5: #{mae_forward.13} parent=1 // pred_fallthru
      _
    // Predicated region
    $region6: #{mae_forward.13} parent=1 // pred_check
      _
    $region7: #{mae_forward.13} parent=1 // pred_check_branch
      %19 = sbr.rel (0) target = $region9
    $region8: #{mae_forward.13} parent=1 // pred_region
      _
    $region9: #{mae_forward.13} parent=1 // pred_fallthru
      _
    // Predicated region
    $region10: #{mae_forward.13} parent=1 // pred_check
      _
    $region11: #{mae_forward.13} parent=1 // pred_check_branch
      %21 = sbr.rel (0) target = $region13
    $region12: #{mae_forward.13} parent=1 // pred_region
      _
    $region13: #{mae_forward.13} parent=1 // pred_fallthru
      _
    // Predicated region
    $region14: #{mae_forward.13} parent=1 // pred_check
      _
    $region15: #{mae_forward.13} parent=1 // pred_check_branch
      %23 = sbr.rel (0) target = $region17
    $region16: #{mae_forward.13} parent=1 // pred_region
      _
    $region17: #{mae_forward.13} parent=1 // pred_fallthru
      _
    // Predicated region
    $region18: #{mae_forward.13} parent=1 // pred_check
      _
    $region19: #{mae_forward.13} parent=1 // pred_check_branch
      %25 = sbr.rel (0) target = $region21
    $region20: #{mae_forward.13} parent=1 // pred_region
      _
    $region21: #{mae_forward.13} parent=1 // pred_fallthru
      _
    // Predicated region
    $region22: #{mae_forward.13} parent=1 // pred_check
      _
    $region23: #{mae_forward.13} parent=1 // pred_check_branch
      %27 = sbr.rel (0) target = $region25
    $region24: #{mae_forward.13} parent=1 // pred_region
      _
    $region25: #{mae_forward.13} parent=1 // pred_fallthru
      _
    // Predicated region
    $region26: #{mae_forward.13} parent=1 // pred_check
      _
    $region27: #{mae_forward.13} parent=1 // pred_check_branch
      %29 = sbr.rel (0) target = $region29
    $region28: #{mae_forward.13} parent=1 // pred_region
      _
    $region29: #{mae_forward.13} parent=1 // pred_fallthru
      _
    %v31 = vld [vmem:[%s0] sm:$0xff]
    %v32 = vld [vmem:[%s0 + $0x8] sm:$0xff]
    %v33 = vld [vmem:[%s1] sm:$0x1]
    %v34 = vld [vmem:[%s2] sm:$0x1]
    %vm35 = vcmask 130048
    %v36 = vsel %vm35, %v31, 0.0
    %37 = vadd.xlane.f32.xlu0 %v36
    %v38 = vpop.xlane.xlu0 %37
    %v39 = vsel %vm35, %v32, 0.0
    %40 = vadd.xlane.f32.xlu0 %v39
    %v41 = vpop.xlane.xlu0 %40
    %v42 = vrcp.pop 16.0
    %v43 = vmul.f32 16.0, %v42
    %v44 = vsub.f32 1.0, %v43
    %v45 = vmul.f32 %v42, %v44
    %v46 = vadd.f32 %v42, %v45
    %vm47 = vweird.f32 %v42
    %v48 = vsel %vm47, %v42, %v46
    %v49 = vmul.f32 %v38, %v48
    %v50 = vmul.f32 %v41, %v48
    %v51 = vsub.f32 %v31, %v49
    %v52 = vsub.f32 %v32, %v50
    %v53 = vmul.f32 %v51, %v51
    %v54 = vmul.f32 %v52, %v52
    %v55 = vsel %vm35, %v53, 0.0
    %56 = vadd.xlane.f32.xlu0 %v55
    %v57 = vpop.xlane.xlu0 %56
    %v58 = vsel %vm35, %v54, 0.0
    %59 = vadd.xlane.f32.xlu0 %v58
    %v60 = vpop.xlane.xlu0 %59
    %v61 = vmul.f32 %v57, %v48
    %v62 = vmul.f32 %v60, %v48
    %v63 = vadd.f32 %v61, 1e-05
    %v64 = vadd.f32 %v62, 1e-05
    %v65 = vrsqrt.pop %v63
    %v66 = vmul.f32 %v65, %v63
    %v67 = vmul.f32 %v66, %v65
    %v68 = vmul.f32 0.5, %v67
    %v69 = vsub.f32 1.5, %v68
    %v70 = vmul.f32 %v65, %v69
    %vm71 = vweird.f32 %v63
    %vm72 = vweird.f32 %v65
    %vm73 = vmor %vm71, %vm72
    %v74 = vsel %vm73, %v65, %v70
    %v75 = vrsqrt.pop %v64
    %v76 = vmul.f32 %v75, %v64
    %v77 = vmul.f32 %v76, %v75
    %v78 = vmul.f32 0.5, %v77
    %v79 = vsub.f32 1.5, %v78
    %v80 = vmul.f32 %v75, %v79
    %vm81 = vweird.f32 %v64
    %vm82 = vweird.f32 %v75
    %vm83 = vmor %vm81, %vm82
    %v84 = vsel %vm83, %v75, %v80
    %v85 = vmul.f32 %v51, %v74
    %v86 = vmul.f32 %v52, %v84
    %v88 = vperm.slane %v33, 0
    %v90 = vmul.f32 %v85, %v88
    %v91 = vmul.f32 %v86, %v88
    %v93 = vperm.slane %v34, 0
    %v95 = vadd.f32 %v90, %v93
    %v96 = vadd.f32 %v91, %v93
    %v97 = vpack.c.bf16 %v96, %v95
    %v98 = vld [vmem:[%s3] sm:$0xff]
    %v99 = vld [vmem:[%s3 + $0x8] sm:$0xf]
    %v100 = vld [vmem:[%s3 + $0xc] sm:$0xff]
    %v101 = vld [vmem:[%s3 + $0x14] sm:$0xf]
    %v102 = vld [vmem:[%s4] sm:$0x7]
    %v104 = vperm.slane %v102, 0
    %v105 = vperm.slane %v102, 1
    %v106 = vperm.slane %v102, 2
    %v114 = vunpack.c.l.b16 %v98
    %v115 = vunpack.c.h.b16 %v98
    %v116 = vunpack.c.l.b16 %v99
    %v117 = vunpack.c.l.b16 %v100
    %v118 = vunpack.c.h.b16 %v100
    %v119 = vunpack.c.l.b16 %v101
    %v120 = vpack.c.b16 %v117, %v114
    %v121 = vpack.c.b16 %v118, %v115
    %v122 = vpack.c.b16 %v119, %v116
    %v127 = vsel %vm35, %v97, 0
    %129 = vmatpush.bf16.msra.mxu0 0
    %130 = vmatpush.bf16.msra.mxu0 0
    %131 = vmatpush.bf16.msra.mxu0 0
    %132 = vmatpush.bf16.msra.mxu0 0
    %133 = vmatpush.bf16.msra.mxu0 0
    %134 = vmatpush.bf16.msra.mxu0 0
    %135 = vmatpush.bf16.msra.mxu0 0
    %136 = vmatpush.bf16.msra.mxu0 %v120
    %137 = vmatmul.bf16.gmra.mxu0 %v127
    %v138 = vpop.f32.mrf.mxu0
    %v139 = vadd.f32 %v104, %v138
    %v140 = vpop.f32.mrf.mxu0
    %v141 = vadd.f32 %v104, %v140
    %142 = vdwg.mxu0
    %143 = vmatpush.bf16.msra.mxu0 0
    %144 = vmatpush.bf16.msra.mxu0 0
    %145 = vmatpush.bf16.msra.mxu0 0
    %146 = vmatpush.bf16.msra.mxu0 0
    %147 = vmatpush.bf16.msra.mxu0 0
    %148 = vmatpush.bf16.msra.mxu0 0
    %149 = vmatpush.bf16.msra.mxu0 0
    %150 = vmatpush.bf16.msra.mxu0 %v121
    %151 = vmatmul.bf16.gmra.mxu0 %v127
    %v152 = vpop.f32.mrf.mxu0
    %v153 = vadd.f32 %v105, %v152
    %v154 = vpop.f32.mrf.mxu0
    %v155 = vadd.f32 %v105, %v154
    %156 = vdwg.mxu0
    %157 = vmatpush.bf16.msra.mxu0 0
    %158 = vmatpush.bf16.msra.mxu0 0
    %159 = vmatpush.bf16.msra.mxu0 0
    %160 = vmatpush.bf16.msra.mxu0 0
    %161 = vmatpush.bf16.msra.mxu0 0
    %162 = vmatpush.bf16.msra.mxu0 0
    %163 = vmatpush.bf16.msra.mxu0 0
    %164 = vmatpush.bf16.msra.mxu0 %v122
    %165 = vmatmul.bf16.gmra.mxu0 %v127
    %v166 = vpop.f32.mrf.mxu0
    %v167 = vadd.f32 %v106, %v166
    %v168 = vpop.f32.mrf.mxu0
    %v169 = vadd.f32 %v106, %v168
    %170 = vdwg.mxu0
    %171 = vst [vmem:[#allocation2] sm:$0xff] %v139
    %172 = vst [vmem:[#allocation2 + $0x8] sm:$0xff] %v153
    %173 = vst [vmem:[#allocation2 + $0x10] sm:$0xff] %v167
    %174 = vst [vmem:[#allocation2 + $0x18] sm:$0xff] %v141
    %175 = vst [vmem:[#allocation2 + $0x20] sm:$0xff] %v155
    %176 = vst [vmem:[#allocation2 + $0x28] sm:$0xff] %v169
    %v177 = vld [vmem:[%s5] sm:$0xff]
    %v178 = vld [vmem:[%s5 + $0x8] sm:$0xff]
    %v179 = vld [vmem:[%s5 + $0x10] sm:$0xff]
    %v180 = vld [vmem:[%s5 + $0x18] sm:$0xff]
    %v181 = vld [vmem:[%s5 + $0x20] sm:$0xff]
    %v182 = vld [vmem:[%s5 + $0x28] sm:$0xff]
    %v183 = vsub.f32 %v139, %v177
    %v184 = vsub.f32 %v153, %v178
    %v185 = vsub.f32 %v167, %v179
    %v186 = vsub.f32 %v141, %v180
    %v187 = vsub.f32 %v155, %v181
    %v188 = vsub.f32 %v169, %v182
    %v189 = vmul.f32 %v183, %v183
    %v190 = vmul.f32 %v184, %v184
    %v191 = vmul.f32 %v185, %v185
    %v192 = vmul.f32 %v186, %v186
    %v193 = vmul.f32 %v187, %v187
    %v194 = vmul.f32 %v188, %v188
    %v195 = vadd.f32 %v189, %v190
    %v196 = vadd.f32 %v195, %v191
    %197 = vadd.xlane.f32.xlu0 %v196
    %v198 = vpop.xlane.xlu0 %197
    %v199 = vadd.f32 %v192, %v193
    %v200 = vadd.f32 %v199, %v194
    %201 = vadd.xlane.f32.xlu0 %v200
    %v202 = vpop.xlane.xlu0 %201
    %v203 = vrcp.pop 384.0
    %v204 = vmul.f32 384.0, %v203
    %v205 = vsub.f32 1.0, %v204
    %v206 = vmul.f32 %v203, %v205
    %v207 = vadd.f32 %v203, %v206
    %vm208 = vweird.f32 %v203
    %v209 = vsel %vm208, %v203, %v207
    %v210 = vmul.f32 %v198, %v209
    %v211 = vmul.f32 %v202, %v209
    %v212 = vld [vmem:[%s6] sm:$0xff]
    %v213 = vld [vmem:[%s6 + $0x8] sm:$0xff]
    %v214 = vmul.f32 %v210, %v212
    %v215 = vmul.f32 %v211, %v213
    %vm216 = vcmask 7168
    %v217 = vsel %vm216, %v214, 0.0
    %v218 = vsel %vm216, %v215, 0.0
    %v219 = vadd.f32 %v217, %v218
    %v220 = vrot.slane %v219, 4
    %v221 = vadd.f32 %v219, %v220
    %v222 = vrot.slane %v221, 2
    %v223 = vadd.f32 %v221, %v222
    %v224 = vrot.slane %v223, 1
    %v225 = vadd.f32 %v223, %v224
    %v226 = vsel %vm216, %v212, 0.0
    %v227 = vsel %vm216, %v213, 0.0
    %v228 = vadd.f32 %v226, %v227
    %v229 = vrot.slane %v228, 4
    %v230 = vadd.f32 %v228, %v229
    %v231 = vrot.slane %v230, 2
    %v232 = vadd.f32 %v230, %v231
    %v233 = vrot.slane %v232, 1
    %v234 = vadd.f32 %v232, %v233
    %vm235 = vcmp.eq.f32.partialorder %v234, 0.0
    %v236 = vsel %vm235, 1.0, %v234
    %v237 = vrcp.pop %v236
    %v238 = vmul.f32 %v236, %v237
    %v239 = vsub.f32 1.0, %v238
    %v240 = vmul.f32 %v237, %v239
    %v241 = vadd.f32 %v237, %v240
    %vm242 = vweird.f32 %v236
    %vm243 = vweird.f32 %v237
    %vm244 = vmor %vm242, %vm243
    %v245 = vsel %vm244, %v237, %v241
    %v246 = vand.u32 2147483647, %v236
    %vm247 = vcmp.eq.f32.partialorder %v246, 8.507059e+37
    %v248 = vand.u32 %v236, 2147483648
    %v249 = vor.u32 1.1754944e-38, %v248
    %v250 = vsel %vm247, %v249, %v245
    %v251 = vmul.f32 %v225, %v250
    %vm252 = vcmask 0
    %253 = vst.msk [vmem:[#allocation4] sm:$0x1] %vm252, %v251
    // Predicated region
    $region30: #{mae_forward.13} parent=1 // pred_check
      _
    $region31: #{mae_forward.13} parent=1 // pred_check_branch
      %255 = sbr.rel (0) target = $region33
    $region32: #{mae_forward.13} parent=1 // pred_region
      %257 = vsyncadd [#allocation3], 0
      %s258 = sshll.u32 [#allocation2], 4
      %s259 = int_to_ptr.vmem [resolvable:$true] %s258
      %s260 = sshll.u32 %s7, 4
      %s261 = int_to_ptr.hbm [resolvable:$true] %s260
      %266 = dma.vmem_to_hbm [thread:$0]  %s259, 768, %s261, [#allocation3], 384, 384, 24
    $region33: #{mae_forward.13} parent=1 // pred_fallthru
      _
    // Predicated region
    $region34: #{mae_forward.13} parent=1 // pred_check
      _
    $region35: #{mae_forward.13} parent=1 // pred_check_branch
      %268 = sbr.rel (0) target = $region37
    $region36: #{mae_forward.13} parent=1 // pred_region
      %270 = vsyncadd [#allocation5], 0
      %s272 = sshll.u32 [#allocation4], 4
      %s273 = int_to_ptr.vmem [resolvable:$true] %s272
      %s274 = sshll.u32 %s8, 4
      %s275 = int_to_ptr.hbm [resolvable:$true] %s274
      %277 = dma.vmem_to_hbm [thread:$0]  %s273, 16, %s275, [#allocation5]
    $region37: #{mae_forward.13} parent=1 // pred_fallthru
      _
    // Predicated region
    $region38: #{mae_forward.13} parent=1 // pred_check
      _
    $region39: #{mae_forward.13} parent=1 // pred_check_branch
      %279 = sbr.rel (0) target = $region41
    $region40: #{mae_forward.13} parent=1 // pred_region
      %281 = dma.done [#allocation3], 768
    $region41: #{mae_forward.13} parent=1 // pred_fallthru
      _
    // Predicated region
    $region42: #{mae_forward.13} parent=1 // pred_check
      _
    $region43: #{mae_forward.13} parent=1 // pred_check_branch
      %283 = sbr.rel (0) target = $region45
    $region44: #{mae_forward.13} parent=1 // pred_region
      %285 = dma.done [#allocation5], 16
    $region45: #{mae_forward.13} parent=1 // pred_fallthru
      _
    %286 = vsyncpa [#allocation3], 1
    %287 = vsyncpa [#allocation5], 1

</llo_original>
